<compile_context>
chip_gen: v6e
topology: v6e:2x2x1
jax: 0.10.0
libtpu: 0.0.40
codegen_flags: <defaults>
</compile_context>

<pallas_src>
import functools

import jax
import jax.numpy as jnp
from jax.experimental import pallas as pl
from jax.experimental.pallas import tpu as pltpu


def _attention_kernel(*refs, heads, dim_head, eps, bt, seq, dim,
                      has_bias, mm_dtype):
    if has_bias:
        (x_ref, bias_ref, gamma_ref, beta_ref,
         wq_ref, wk_ref, wv_ref, wo_ref, bo_ref, o_ref) = refs
    else:
        (x_ref, gamma_ref, beta_ref,
         wq_ref, wk_ref, wv_ref, wo_ref, bo_ref, o_ref) = refs
        bias_ref = None

    m = bt * seq  # fused row count for the MXU M dimension

    # ---- LayerNorm over channels on the fused (bt*seq, dim) slab (f32) ----
    x = x_ref[...].reshape(m, dim).astype(jnp.float32)
    gamma = gamma_ref[...]                                   # (1, D)
    beta = beta_ref[...]                                     # (1, D)
    mean = jnp.mean(x, axis=-1, keepdims=True)
    xc = x - mean
    var = jnp.mean(xc * xc, axis=-1, keepdims=True)
    x_norm = xc * jax.lax.rsqrt(var + eps) * gamma + beta    # (M, D) f32

    x_mm = x_norm.astype(mm_dtype)

    # ---- per-head attention, accumulated straight into the out projection --
    y_acc = jnp.zeros((m, dim), jnp.float32)
    for h in range(heads):                                   # static unroll
        # Leading-dim (static) indexing of per-head weights; scale is already
        # folded into wq host-side.
        q = jnp.dot(x_mm, wq_ref[h],
                    preferred_element_type=jnp.float32).astype(mm_dtype)
        k = jnp.dot(x_mm, wk_ref[h],
                    preferred_element_type=jnp.float32).astype(mm_dtype)
        v = jnp.dot(x_mm, wv_ref[h],
                    preferred_element_type=jnp.float32).astype(mm_dtype)

        q3 = q.reshape(bt, seq, dim_head)
        k3 = k.reshape(bt, seq, dim_head)
        v3 = v.reshape(bt, seq, dim_head)

        # Batched dot_general contracting the last dim of both operands
        # (no explicit transpose of k).
        sim = jnp.einsum('bid,bjd->bij', q3, k3,
                         preferred_element_type=jnp.float32)  # (bt, N, N) f32
        if has_bias:
            sim = sim + bias_ref[h]                           # (N, N) bcast

        s_max = jnp.max(sim, axis=-1, keepdims=True)
        p = jnp.exp(sim - s_max)
        denom = jnp.sum(p, axis=-1, keepdims=True)
        p = p * pl.reciprocal(denom, approx=True)             # softmax(-1)

        out_h = jnp.einsum('bij,bjd->bid', p.astype(mm_dtype), v3,
                           preferred_element_type=jnp.float32)  # (bt, N, dh)

        # Per-head accumulation of the output projection (no concat of
        # 32-lane chunks into 128 lanes).
        y_acc = y_acc + jnp.dot(out_h.reshape(m, dim_head).astype(mm_dtype),
                                wo_ref[h],
                                preferred_element_type=jnp.float32)

    y = y_acc + bo_ref[...]                                   # (M, D) + (1, D)
    o_ref[...] = y.reshape(bt, seq, dim).astype(o_ref.dtype)


def _pick_batch_block(B, N):
    """Target ~128 fused rows; keep >=2 grid steps (v7x 2 TCs); divide B."""
    bt = max(1, min(B, 128 // max(N, 1)))
    while bt > 1 and pl.cdiv(B, bt) < 2:
        bt -= 1
    while B % bt != 0:
        bt -= 1
    return bt


def attention_forward(x, params, rel_pos_bias=None, *, heads=4, dim_head=32,
                      batch_block=None, matmul_dtype=jnp.float32):
    """x: (B, N, D) float32.  params: dict of weights.  Returns (B, N, D).

    matmul_dtype=jnp.bfloat16 halves MXU-operand / weight-DMA width on
    v6e/v7x (keep jnp.float32 on v5e or when tight tolerances are needed).
    """
    B, N, D = x.shape
    inner = heads * dim_head
    scale = dim_head ** (-0.5)

    # ---- one-time host-side weight re-layout (per-head, scale folded) ----
    w_qkv = params["w_qkv"]                                   # (D, 3*inner)
    wq = (w_qkv[:, 0 * inner:1 * inner]
          .reshape(D, heads, dim_head).transpose(1, 0, 2) * scale)
    wk = w_qkv[:, 1 * inner:2 * inner].reshape(D, heads, dim_head).transpose(1, 0, 2)
    wv = w_qkv[:, 2 * inner:3 * inner].reshape(D, heads, dim_head).transpose(1, 0, 2)
    wo = params["w_out"].reshape(heads, dim_head, D)          # (H, dh, D)
    wq = wq.astype(matmul_dtype)
    wk = wk.astype(matmul_dtype)
    wv = wv.astype(matmul_dtype)
    wo = wo.astype(matmul_dtype)

    gamma = params["gamma"].reshape(1, D).astype(jnp.float32)
    beta = params["beta"].reshape(1, D).astype(jnp.float32)
    b_out = params["b_out"].reshape(1, D).astype(jnp.float32)

    bt = batch_block if batch_block is not None else _pick_batch_block(B, N)
    assert B % bt == 0, "batch_block must divide batch"
    grid = (B // bt,)

    has_bias = rel_pos_bias is not None

    kernel = functools.partial(
        _attention_kernel,
        heads=heads, dim_head=dim_head, eps=1e-5,
        bt=bt, seq=N, dim=D, has_bias=has_bias, mm_dtype=matmul_dtype)

    in_specs = [pl.BlockSpec((bt, N, D), lambda b: (b, 0, 0))]          # x
    args = [x]
    if has_bias:
        in_specs.append(pl.BlockSpec((heads, N, N), lambda b: (0, 0, 0)))
        args.append(rel_pos_bias.astype(jnp.float32))
    in_specs += [
        pl.BlockSpec((1, D), lambda b: (0, 0)),                         # gamma
        pl.BlockSpec((1, D), lambda b: (0, 0)),                         # beta
        pl.BlockSpec((heads, D, dim_head), lambda b: (0, 0, 0)),        # wq
        pl.BlockSpec((heads, D, dim_head), lambda b: (0, 0, 0)),        # wk
        pl.BlockSpec((heads, D, dim_head), lambda b: (0, 0, 0)),        # wv
        pl.BlockSpec((heads, dim_head, D), lambda b: (0, 0, 0)),        # wo
        pl.BlockSpec((1, D), lambda b: (0, 0)),                         # b_out
    ]
    args += [gamma, beta, wq, wk, wv, wo, b_out]

    return pl.pallas_call(
        kernel,
        out_shape=jax.ShapeDtypeStruct((B, N, D), x.dtype),
        grid_spec=pltpu.PrefetchScalarGridSpec(
            num_scalar_prefetch=0,
            grid=grid,
            in_specs=in_specs,
            out_specs=pl.BlockSpec((bt, N, D), lambda b: (b, 0, 0)),
        ),
        compiler_params=pltpu.CompilerParams(
            dimension_semantics=("parallel",)),
    )(*args)


def attention_reference(x, params, rel_pos_bias, *, heads=4, dim_head=32):
    """Pure-JAX reference mirroring the PyTorch forward."""
    scale = dim_head ** (-0.5)
    mean = jnp.mean(x, axis=-1, keepdims=True)
    var = jnp.mean((x - mean) ** 2, axis=-1, keepdims=True)
    xn = (x - mean) / jnp.sqrt(var + 1e-5) * params["gamma"] + params["beta"]
    qkv = xn @ params["w_qkv"]
    q, k, v = jnp.split(qkv, 3, axis=-1)
    B, N, _ = x.shape

    def to_heads(t):
        return t.reshape(B, N, heads, dim_head).transpose(0, 2, 1, 3)

    q, k, v = map(to_heads, (q, k, v))
    q = q * scale
    sim = jnp.einsum('bhid,bhjd->bhij', q, k)
    if rel_pos_bias is not None:
        sim = sim + rel_pos_bias
    attn = jax.nn.softmax(sim, axis=-1)
    out = jnp.einsum('bhij,bhjd->bhid', attn, v)
    out = out.transpose(0, 2, 1, 3).reshape(B, N, heads * dim_head)
    return out @ params["w_out"] + params["b_out"]


if __name__ == "__main__":
    B, N, D = 8, 8, 32
    heads, dim_head = 4, 32
    inner = heads * dim_head

    key = jax.random.PRNGKey(0)
    kx, kb, k1, k2, k3, k4, k5 = jax.random.split(key, 7)

    x = jax.random.normal(kx, (B, N, D), jnp.float32)
    rel_pos_bias = 0.1 * jax.random.normal(kb, (heads, N, N), jnp.float32)

    params = {
        "gamma": 1.0 + 0.05 * jax.random.normal(k1, (D,), jnp.float32),
        "beta": 0.05 * jax.random.normal(k2, (D,), jnp.float32),
        "w_qkv": 0.05 * jax.random.normal(k3, (D, 3 * inner), jnp.float32),
        "w_out": 0.05 * jax.random.normal(k4, (inner, D), jnp.float32),
        "b_out": 0.05 * jax.random.normal(k5, (D,), jnp.float32),
    }

    # With rel_pos_bias (f32 matmul operands; approx-reciprocal softmax).
    out = attention_forward(x, params, rel_pos_bias,
                            heads=heads, dim_head=dim_head)
    out = jax.block_until_ready(out)
    ref = attention_reference(x, params, rel_pos_bias,
                              heads=heads, dim_head=dim_head)
    assert out.shape == (B, N, D)
    assert jnp.allclose(out, ref, atol=2e-3, rtol=2e-3), "mismatch (with bias)"

    # Without rel_pos_bias (input and bias-add omitted from the kernel).
    out_nb = attention_forward(x, params, None,
                               heads=heads, dim_head=dim_head)
    out_nb = jax.block_until_ready(out_nb)
    ref_nb = attention_reference(x, params, None,
                                 heads=heads, dim_head=dim_head)
    assert jnp.allclose(out_nb, ref_nb, atol=2e-3, rtol=2e-3), "mismatch (no bias)"

    print("KERNEL_OK")
</pallas_src>

<mosaic_0001>
module attributes {stable_mosaic.version = 11 : i64} {
  func.func @_attention_kernel(%arg0: i32, %arg1: memref<4x8x32xf32, #tpu.memory_space<vmem>>, %arg2: memref<4x8x8xf32, #tpu.memory_space<vmem>>, %arg3: memref<1x32xf32, #tpu.memory_space<vmem>>, %arg4: memref<1x32xf32, #tpu.memory_space<vmem>>, %arg5: memref<4x32x32xf32, #tpu.memory_space<vmem>>, %arg6: memref<4x32x32xf32, #tpu.memory_space<vmem>>, %arg7: memref<4x32x32xf32, #tpu.memory_space<vmem>>, %arg8: memref<4x32x32xf32, #tpu.memory_space<vmem>>, %arg9: memref<1x32xf32, #tpu.memory_space<vmem>>, %arg10: memref<4x8x32xf32, #tpu.memory_space<vmem>>) attributes {dimension_semantics = [#tpu.dimension_semantics<parallel>], iteration_bounds = array<i64: 2>, scalar_prefetch = 0 : i64, scratch_operands = 0 : i64, tpu.core_type = #tpu.core_type<tc>, window_params = [{transform_indices = @transform_0, window_bounds = array<i64: 4, 8, 32>}, {pipeline_mode = #tpu.pipeline_mode<synchronous>, transform_indices = @transform_1, window_bounds = array<i64: 4, 8, 8>}, {pipeline_mode = #tpu.pipeline_mode<synchronous>, transform_indices = @transform_2, window_bounds = array<i64: 1, 32>}, {pipeline_mode = #tpu.pipeline_mode<synchronous>, transform_indices = @transform_3, window_bounds = array<i64: 1, 32>}, {pipeline_mode = #tpu.pipeline_mode<synchronous>, transform_indices = @transform_4, window_bounds = array<i64: 4, 32, 32>}, {pipeline_mode = #tpu.pipeline_mode<synchronous>, transform_indices = @transform_5, window_bounds = array<i64: 4, 32, 32>}, {pipeline_mode = #tpu.pipeline_mode<synchronous>, transform_indices = @transform_6, window_bounds = array<i64: 4, 32, 32>}, {pipeline_mode = #tpu.pipeline_mode<synchronous>, transform_indices = @transform_7, window_bounds = array<i64: 4, 32, 32>}, {pipeline_mode = #tpu.pipeline_mode<synchronous>, transform_indices = @transform_8, window_bounds = array<i64: 1, 32>}, {transform_indices = @transform_9, window_bounds = array<i64: 4, 8, 32>}]} {
    %c0 = arith.constant 0 : index
    %c0_0 = arith.constant 0 : index
    %c0_1 = arith.constant 0 : index
    %0 = vector.load %arg1[%c0, %c0_0, %c0_1] : memref<4x8x32xf32, #tpu.memory_space<vmem>>, vector<4x8x32xf32>
    %1 = vector.shape_cast %0 : vector<4x8x32xf32> to vector<32x32xf32>
    %c0_2 = arith.constant 0 : index
    %c0_3 = arith.constant 0 : index
    %2 = vector.load %arg3[%c0_2, %c0_3] : memref<1x32xf32, #tpu.memory_space<vmem>>, vector<1x32xf32>
    %c0_4 = arith.constant 0 : index
    %c0_5 = arith.constant 0 : index
    %3 = vector.load %arg4[%c0_4, %c0_5] : memref<1x32xf32, #tpu.memory_space<vmem>>, vector<1x32xf32>
    %cst = arith.constant dense<0.000000e+00> : vector<32xf32>
    %4 = vector.multi_reduction <add>, %1, %cst [1] : vector<32x32xf32> to vector<32xf32>
    %5 = vector.shape_cast %4 : vector<32xf32> to vector<32x1xf32>
    %cst_6 = arith.constant 3.200000e+01 : f32
    %6 = vector.broadcast %cst_6 : f32 to vector<32x1xf32>
    %7 = arith.divf %5, %6 : vector<32x1xf32>
    %8 = vector.broadcast %7 : vector<32x1xf32> to vector<32x32xf32>
    %9 = arith.subf %1, %8 : vector<32x32xf32>
    %10 = arith.mulf %9, %9 : vector<32x32xf32>
    %cst_7 = arith.constant dense<0.000000e+00> : vector<32xf32>
    %11 = vector.multi_reduction <add>, %10, %cst_7 [1] : vector<32x32xf32> to vector<32xf32>
    %12 = vector.shape_cast %11 : vector<32xf32> to vector<32x1xf32>
    %cst_8 = arith.constant 3.200000e+01 : f32
    %13 = vector.broadcast %cst_8 : f32 to vector<32x1xf32>
    %14 = arith.divf %12, %13 : vector<32x1xf32>
    %cst_9 = arith.constant 9.99999974E-6 : f32
    %15 = vector.broadcast %cst_9 : f32 to vector<32x1xf32>
    %16 = arith.addf %14, %15 : vector<32x1xf32>
    %17 = math.rsqrt %16 : vector<32x1xf32>
    %18 = vector.broadcast %17 : vector<32x1xf32> to vector<32x32xf32>
    %19 = arith.mulf %9, %18 : vector<32x32xf32>
    %20 = vector.broadcast %2 : vector<1x32xf32> to vector<32x32xf32>
    %21 = arith.mulf %19, %20 : vector<32x32xf32>
    %22 = vector.broadcast %3 : vector<1x32xf32> to vector<32x32xf32>
    %23 = arith.addf %21, %22 : vector<32x32xf32>
    %cst_10 = arith.constant 0.000000e+00 : f32
    %24 = vector.broadcast %cst_10 : f32 to vector<32x32xf32>
    %c0_11 = arith.constant 0 : index
    %c0_12 = arith.constant 0 : index
    %c0_13 = arith.constant 0 : index
    %25 = vector.load %arg5[%c0_11, %c0_12, %c0_13] : memref<4x32x32xf32, #tpu.memory_space<vmem>>, vector<1x32x32xf32>
    %26 = vector.shape_cast %25 : vector<1x32x32xf32> to vector<32x32xf32>
    %cst_14 = arith.constant dense<0.000000e+00> : vector<32x32xf32>
    %27 = tpu.matmul %23, %26, %cst_14 {dimension_numbers = #tpu.dot_dimension_numbers<[1], [0], [0], [1], [0, 0, 1, 1], [], []>} : vector<32x32xf32>, vector<32x32xf32>, vector<32x32xf32> -> vector<32x32xf32>
    %c0_15 = arith.constant 0 : index
    %c0_16 = arith.constant 0 : index
    %c0_17 = arith.constant 0 : index
    %28 = vector.load %arg6[%c0_15, %c0_16, %c0_17] : memref<4x32x32xf32, #tpu.memory_space<vmem>>, vector<1x32x32xf32>
    %29 = vector.shape_cast %28 : vector<1x32x32xf32> to vector<32x32xf32>
    %cst_18 = arith.constant dense<0.000000e+00> : vector<32x32xf32>
    %30 = tpu.matmul %23, %29, %cst_18 {dimension_numbers = #tpu.dot_dimension_numbers<[1], [0], [0], [1], [0, 0, 1, 1], [], []>} : vector<32x32xf32>, vector<32x32xf32>, vector<32x32xf32> -> vector<32x32xf32>
    %c0_19 = arith.constant 0 : index
    %c0_20 = arith.constant 0 : index
    %c0_21 = arith.constant 0 : index
    %31 = vector.load %arg7[%c0_19, %c0_20, %c0_21] : memref<4x32x32xf32, #tpu.memory_space<vmem>>, vector<1x32x32xf32>
    %32 = vector.shape_cast %31 : vector<1x32x32xf32> to vector<32x32xf32>
    %cst_22 = arith.constant dense<0.000000e+00> : vector<32x32xf32>
    %33 = tpu.matmul %23, %32, %cst_22 {dimension_numbers = #tpu.dot_dimension_numbers<[1], [0], [0], [1], [0, 0, 1, 1], [], []>} : vector<32x32xf32>, vector<32x32xf32>, vector<32x32xf32> -> vector<32x32xf32>
    %34 = vector.shape_cast %27 : vector<32x32xf32> to vector<4x8x32xf32>
    %35 = vector.shape_cast %30 : vector<32x32xf32> to vector<4x8x32xf32>
    %36 = vector.shape_cast %33 : vector<32x32xf32> to vector<4x8x32xf32>
    "tpu.trace_start"() <{level = 10 : i32, message = "bid,bjd->bij"}> : () -> ()
    %cst_23 = arith.constant dense<0.000000e+00> : vector<4x8x8xf32>
    %37 = tpu.matmul %34, %35, %cst_23 {dimension_numbers = #tpu.dot_dimension_numbers<[2], [2], [1], [1], [0, 0, 0, 1, 1, 1], [0], [0]>} : vector<4x8x32xf32>, vector<4x8x32xf32>, vector<4x8x8xf32> -> vector<4x8x8xf32>
    "tpu.trace_stop"() : () -> ()
    %c0_24 = arith.constant 0 : index
    %c0_25 = arith.constant 0 : index
    %c0_26 = arith.constant 0 : index
    %38 = vector.load %arg2[%c0_24, %c0_25, %c0_26] : memref<4x8x8xf32, #tpu.memory_space<vmem>>, vector<1x8x8xf32>
    %39 = vector.shape_cast %38 : vector<1x8x8xf32> to vector<8x8xf32>
    %40 = vector.shape_cast %39 : vector<8x8xf32> to vector<1x8x8xf32>
    %41 = vector.broadcast %40 : vector<1x8x8xf32> to vector<4x8x8xf32>
    %42 = arith.addf %37, %41 : vector<4x8x8xf32>
    %cst_27 = arith.constant dense<0xFF800000> : vector<4x8xf32>
    %43 = vector.multi_reduction <maximumf>, %42, %cst_27 [2] : vector<4x8x8xf32> to vector<4x8xf32>
    %44 = vector.shape_cast %43 : vector<4x8xf32> to vector<4x8x1xf32>
    %45 = vector.broadcast %44 : vector<4x8x1xf32> to vector<4x8x8xf32>
    %46 = arith.subf %42, %45 : vector<4x8x8xf32>
    %47 = math.exp %46 : vector<4x8x8xf32>
    %cst_28 = arith.constant dense<0.000000e+00> : vector<4x8xf32>
    %48 = vector.multi_reduction <add>, %47, %cst_28 [2] : vector<4x8x8xf32> to vector<4x8xf32>
    %49 = vector.shape_cast %48 : vector<4x8xf32> to vector<4x8x1xf32>
    %50 = tpu.reciprocal %49 {approx = true} : vector<4x8x1xf32> -> vector<4x8x1xf32>
    %51 = vector.broadcast %50 : vector<4x8x1xf32> to vector<4x8x8xf32>
    %52 = arith.mulf %47, %51 : vector<4x8x8xf32>
    "tpu.trace_start"() <{level = 10 : i32, message = "bij,bjd->bid"}> : () -> ()
    %cst_29 = arith.constant dense<0.000000e+00> : vector<4x8x32xf32>
    %53 = tpu.matmul %52, %36, %cst_29 {dimension_numbers = #tpu.dot_dimension_numbers<[2], [1], [1], [2], [0, 0, 0, 1, 1, 2], [0], [0]>} : vector<4x8x8xf32>, vector<4x8x32xf32>, vector<4x8x32xf32> -> vector<4x8x32xf32>
    "tpu.trace_stop"() : () -> ()
    %54 = vector.shape_cast %53 : vector<4x8x32xf32> to vector<32x32xf32>
    %c0_30 = arith.constant 0 : index
    %c0_31 = arith.constant 0 : index
    %c0_32 = arith.constant 0 : index
    %55 = vector.load %arg8[%c0_30, %c0_31, %c0_32] : memref<4x32x32xf32, #tpu.memory_space<vmem>>, vector<1x32x32xf32>
    %56 = vector.shape_cast %55 : vector<1x32x32xf32> to vector<32x32xf32>
    %cst_33 = arith.constant dense<0.000000e+00> : vector<32x32xf32>
    %57 = tpu.matmul %54, %56, %cst_33 {dimension_numbers = #tpu.dot_dimension_numbers<[1], [0], [0], [1], [0, 0, 1, 1], [], []>} : vector<32x32xf32>, vector<32x32xf32>, vector<32x32xf32> -> vector<32x32xf32>
    %58 = arith.addf %24, %57 : vector<32x32xf32>
    %c1 = arith.constant 1 : index
    %c0_34 = arith.constant 0 : index
    %c0_35 = arith.constant 0 : index
    %59 = vector.load %arg5[%c1, %c0_34, %c0_35] : memref<4x32x32xf32, #tpu.memory_space<vmem>>, vector<1x32x32xf32>
    %60 = vector.shape_cast %59 : vector<1x32x32xf32> to vector<32x32xf32>
    %cst_36 = arith.constant dense<0.000000e+00> : vector<32x32xf32>
    %61 = tpu.matmul %23, %60, %cst_36 {dimension_numbers = #tpu.dot_dimension_numbers<[1], [0], [0], [1], [0, 0, 1, 1], [], []>} : vector<32x32xf32>, vector<32x32xf32>, vector<32x32xf32> -> vector<32x32xf32>
    %c1_37 = arith.constant 1 : index
    %c0_38 = arith.constant 0 : index
    %c0_39 = arith.constant 0 : index
    %62 = vector.load %arg6[%c1_37, %c0_38, %c0_39] : memref<4x32x32xf32, #tpu.memory_space<vmem>>, vector<1x32x32xf32>
    %63 = vector.shape_cast %62 : vector<1x32x32xf32> to vector<32x32xf32>
    %cst_40 = arith.constant dense<0.000000e+00> : vector<32x32xf32>
    %64 = tpu.matmul %23, %63, %cst_40 {dimension_numbers = #tpu.dot_dimension_numbers<[1], [0], [0], [1], [0, 0, 1, 1], [], []>} : vector<32x32xf32>, vector<32x32xf32>, vector<32x32xf32> -> vector<32x32xf32>
    %c1_41 = arith.constant 1 : index
    %c0_42 = arith.constant 0 : index
    %c0_43 = arith.constant 0 : index
    %65 = vector.load %arg7[%c1_41, %c0_42, %c0_43] : memref<4x32x32xf32, #tpu.memory_space<vmem>>, vector<1x32x32xf32>
    %66 = vector.shape_cast %65 : vector<1x32x32xf32> to vector<32x32xf32>
    %cst_44 = arith.constant dense<0.000000e+00> : vector<32x32xf32>
    %67 = tpu.matmul %23, %66, %cst_44 {dimension_numbers = #tpu.dot_dimension_numbers<[1], [0], [0], [1], [0, 0, 1, 1], [], []>} : vector<32x32xf32>, vector<32x32xf32>, vector<32x32xf32> -> vector<32x32xf32>
    %68 = vector.shape_cast %61 : vector<32x32xf32> to vector<4x8x32xf32>
    %69 = vector.shape_cast %64 : vector<32x32xf32> to vector<4x8x32xf32>
    %70 = vector.shape_cast %67 : vector<32x32xf32> to vector<4x8x32xf32>
    "tpu.trace_start"() <{level = 10 : i32, message = "bid,bjd->bij"}> : () -> ()
    %cst_45 = arith.constant dense<0.000000e+00> : vector<4x8x8xf32>
    %71 = tpu.matmul %68, %69, %cst_45 {dimension_numbers = #tpu.dot_dimension_numbers<[2], [2], [1], [1], [0, 0, 0, 1, 1, 1], [0], [0]>} : vector<4x8x32xf32>, vector<4x8x32xf32>, vector<4x8x8xf32> -> vector<4x8x8xf32>
    "tpu.trace_stop"() : () -> ()
    %c1_46 = arith.constant 1 : index
    %c0_47 = arith.constant 0 : index
    %c0_48 = arith.constant 0 : index
    %72 = vector.load %arg2[%c1_46, %c0_47, %c0_48] : memref<4x8x8xf32, #tpu.memory_space<vmem>>, vector<1x8x8xf32>
    %73 = vector.shape_cast %72 : vector<1x8x8xf32> to vector<8x8xf32>
    %74 = vector.shape_cast %73 : vector<8x8xf32> to vector<1x8x8xf32>
    %75 = vector.broadcast %74 : vector<1x8x8xf32> to vector<4x8x8xf32>
    %76 = arith.addf %71, %75 : vector<4x8x8xf32>
    %cst_49 = arith.constant dense<0xFF800000> : vector<4x8xf32>
    %77 = vector.multi_reduction <maximumf>, %76, %cst_49 [2] : vector<4x8x8xf32> to vector<4x8xf32>
    %78 = vector.shape_cast %77 : vector<4x8xf32> to vector<4x8x1xf32>
    %79 = vector.broadcast %78 : vector<4x8x1xf32> to vector<4x8x8xf32>
    %80 = arith.subf %76, %79 : vector<4x8x8xf32>
    %81 = math.exp %80 : vector<4x8x8xf32>
    %cst_50 = arith.constant dense<0.000000e+00> : vector<4x8xf32>
    %82 = vector.multi_reduction <add>, %81, %cst_50 [2] : vector<4x8x8xf32> to vector<4x8xf32>
    %83 = vector.shape_cast %82 : vector<4x8xf32> to vector<4x8x1xf32>
    %84 = tpu.reciprocal %83 {approx = true} : vector<4x8x1xf32> -> vector<4x8x1xf32>
    %85 = vector.broadcast %84 : vector<4x8x1xf32> to vector<4x8x8xf32>
    %86 = arith.mulf %81, %85 : vector<4x8x8xf32>
    "tpu.trace_start"() <{level = 10 : i32, message = "bij,bjd->bid"}> : () -> ()
    %cst_51 = arith.constant dense<0.000000e+00> : vector<4x8x32xf32>
    %87 = tpu.matmul %86, %70, %cst_51 {dimension_numbers = #tpu.dot_dimension_numbers<[2], [1], [1], [2], [0, 0, 0, 1, 1, 2], [0], [0]>} : vector<4x8x8xf32>, vector<4x8x32xf32>, vector<4x8x32xf32> -> vector<4x8x32xf32>
    "tpu.trace_stop"() : () -> ()
    %88 = vector.shape_cast %87 : vector<4x8x32xf32> to vector<32x32xf32>
    %c1_52 = arith.constant 1 : index
    %c0_53 = arith.constant 0 : index
    %c0_54 = arith.constant 0 : index
    %89 = vector.load %arg8[%c1_52, %c0_53, %c0_54] : memref<4x32x32xf32, #tpu.memory_space<vmem>>, vector<1x32x32xf32>
    %90 = vector.shape_cast %89 : vector<1x32x32xf32> to vector<32x32xf32>
    %cst_55 = arith.constant dense<0.000000e+00> : vector<32x32xf32>
    %91 = tpu.matmul %88, %90, %cst_55 {dimension_numbers = #tpu.dot_dimension_numbers<[1], [0], [0], [1], [0, 0, 1, 1], [], []>} : vector<32x32xf32>, vector<32x32xf32>, vector<32x32xf32> -> vector<32x32xf32>
    %92 = arith.addf %58, %91 : vector<32x32xf32>
    %c2 = arith.constant 2 : index
    %c0_56 = arith.constant 0 : index
    %c0_57 = arith.constant 0 : index
    %93 = vector.load %arg5[%c2, %c0_56, %c0_57] : memref<4x32x32xf32, #tpu.memory_space<vmem>>, vector<1x32x32xf32>
    %94 = vector.shape_cast %93 : vector<1x32x32xf32> to vector<32x32xf32>
    %cst_58 = arith.constant dense<0.000000e+00> : vector<32x32xf32>
    %95 = tpu.matmul %23, %94, %cst_58 {dimension_numbers = #tpu.dot_dimension_numbers<[1], [0], [0], [1], [0, 0, 1, 1], [], []>} : vector<32x32xf32>, vector<32x32xf32>, vector<32x32xf32> -> vector<32x32xf32>
    %c2_59 = arith.constant 2 : index
    %c0_60 = arith.constant 0 : index
    %c0_61 = arith.constant 0 : index
    %96 = vector.load %arg6[%c2_59, %c0_60, %c0_61] : memref<4x32x32xf32, #tpu.memory_space<vmem>>, vector<1x32x32xf32>
    %97 = vector.shape_cast %96 : vector<1x32x32xf32> to vector<32x32xf32>
    %cst_62 = arith.constant dense<0.000000e+00> : vector<32x32xf32>
    %98 = tpu.matmul %23, %97, %cst_62 {dimension_numbers = #tpu.dot_dimension_numbers<[1], [0], [0], [1], [0, 0, 1, 1], [], []>} : vector<32x32xf32>, vector<32x32xf32>, vector<32x32xf32> -> vector<32x32xf32>
    %c2_63 = arith.constant 2 : index
    %c0_64 = arith.constant 0 : index
    %c0_65 = arith.constant 0 : index
    %99 = vector.load %arg7[%c2_63, %c0_64, %c0_65] : memref<4x32x32xf32, #tpu.memory_space<vmem>>, vector<1x32x32xf32>
    %100 = vector.shape_cast %99 : vector<1x32x32xf32> to vector<32x32xf32>
    %cst_66 = arith.constant dense<0.000000e+00> : vector<32x32xf32>
    %101 = tpu.matmul %23, %100, %cst_66 {dimension_numbers = #tpu.dot_dimension_numbers<[1], [0], [0], [1], [0, 0, 1, 1], [], []>} : vector<32x32xf32>, vector<32x32xf32>, vector<32x32xf32> -> vector<32x32xf32>
    %102 = vector.shape_cast %95 : vector<32x32xf32> to vector<4x8x32xf32>
    %103 = vector.shape_cast %98 : vector<32x32xf32> to vector<4x8x32xf32>
    %104 = vector.shape_cast %101 : vector<32x32xf32> to vector<4x8x32xf32>
    "tpu.trace_start"() <{level = 10 : i32, message = "bid,bjd->bij"}> : () -> ()
    %cst_67 = arith.constant dense<0.000000e+00> : vector<4x8x8xf32>
    %105 = tpu.matmul %102, %103, %cst_67 {dimension_numbers = #tpu.dot_dimension_numbers<[2], [2], [1], [1], [0, 0, 0, 1, 1, 1], [0], [0]>} : vector<4x8x32xf32>, vector<4x8x32xf32>, vector<4x8x8xf32> -> vector<4x8x8xf32>
    "tpu.trace_stop"() : () -> ()
    %c2_68 = arith.constant 2 : index
    %c0_69 = arith.constant 0 : index
    %c0_70 = arith.constant 0 : index
    %106 = vector.load %arg2[%c2_68, %c0_69, %c0_70] : memref<4x8x8xf32, #tpu.memory_space<vmem>>, vector<1x8x8xf32>
    %107 = vector.shape_cast %106 : vector<1x8x8xf32> to vector<8x8xf32>
    %108 = vector.shape_cast %107 : vector<8x8xf32> to vector<1x8x8xf32>
    %109 = vector.broadcast %108 : vector<1x8x8xf32> to vector<4x8x8xf32>
    %110 = arith.addf %105, %109 : vector<4x8x8xf32>
    %cst_71 = arith.constant dense<0xFF800000> : vector<4x8xf32>
    %111 = vector.multi_reduction <maximumf>, %110, %cst_71 [2] : vector<4x8x8xf32> to vector<4x8xf32>
    %112 = vector.shape_cast %111 : vector<4x8xf32> to vector<4x8x1xf32>
    %113 = vector.broadcast %112 : vector<4x8x1xf32> to vector<4x8x8xf32>
    %114 = arith.subf %110, %113 : vector<4x8x8xf32>
    %115 = math.exp %114 : vector<4x8x8xf32>
    %cst_72 = arith.constant dense<0.000000e+00> : vector<4x8xf32>
    %116 = vector.multi_reduction <add>, %115, %cst_72 [2] : vector<4x8x8xf32> to vector<4x8xf32>
    %117 = vector.shape_cast %116 : vector<4x8xf32> to vector<4x8x1xf32>
    %118 = tpu.reciprocal %117 {approx = true} : vector<4x8x1xf32> -> vector<4x8x1xf32>
    %119 = vector.broadcast %118 : vector<4x8x1xf32> to vector<4x8x8xf32>
    %120 = arith.mulf %115, %119 : vector<4x8x8xf32>
    "tpu.trace_start"() <{level = 10 : i32, message = "bij,bjd->bid"}> : () -> ()
    %cst_73 = arith.constant dense<0.000000e+00> : vector<4x8x32xf32>
    %121 = tpu.matmul %120, %104, %cst_73 {dimension_numbers = #tpu.dot_dimension_numbers<[2], [1], [1], [2], [0, 0, 0, 1, 1, 2], [0], [0]>} : vector<4x8x8xf32>, vector<4x8x32xf32>, vector<4x8x32xf32> -> vector<4x8x32xf32>
    "tpu.trace_stop"() : () -> ()
    %122 = vector.shape_cast %121 : vector<4x8x32xf32> to vector<32x32xf32>
    %c2_74 = arith.constant 2 : index
    %c0_75 = arith.constant 0 : index
    %c0_76 = arith.constant 0 : index
    %123 = vector.load %arg8[%c2_74, %c0_75, %c0_76] : memref<4x32x32xf32, #tpu.memory_space<vmem>>, vector<1x32x32xf32>
    %124 = vector.shape_cast %123 : vector<1x32x32xf32> to vector<32x32xf32>
    %cst_77 = arith.constant dense<0.000000e+00> : vector<32x32xf32>
    %125 = tpu.matmul %122, %124, %cst_77 {dimension_numbers = #tpu.dot_dimension_numbers<[1], [0], [0], [1], [0, 0, 1, 1], [], []>} : vector<32x32xf32>, vector<32x32xf32>, vector<32x32xf32> -> vector<32x32xf32>
    %126 = arith.addf %92, %125 : vector<32x32xf32>
    %c3 = arith.constant 3 : index
    %c0_78 = arith.constant 0 : index
    %c0_79 = arith.constant 0 : index
    %127 = vector.load %arg5[%c3, %c0_78, %c0_79] : memref<4x32x32xf32, #tpu.memory_space<vmem>>, vector<1x32x32xf32>
    %128 = vector.shape_cast %127 : vector<1x32x32xf32> to vector<32x32xf32>
    %cst_80 = arith.constant dense<0.000000e+00> : vector<32x32xf32>
    %129 = tpu.matmul %23, %128, %cst_80 {dimension_numbers = #tpu.dot_dimension_numbers<[1], [0], [0], [1], [0, 0, 1, 1], [], []>} : vector<32x32xf32>, vector<32x32xf32>, vector<32x32xf32> -> vector<32x32xf32>
    %c3_81 = arith.constant 3 : index
    %c0_82 = arith.constant 0 : index
    %c0_83 = arith.constant 0 : index
    %130 = vector.load %arg6[%c3_81, %c0_82, %c0_83] : memref<4x32x32xf32, #tpu.memory_space<vmem>>, vector<1x32x32xf32>
    %131 = vector.shape_cast %130 : vector<1x32x32xf32> to vector<32x32xf32>
    %cst_84 = arith.constant dense<0.000000e+00> : vector<32x32xf32>
    %132 = tpu.matmul %23, %131, %cst_84 {dimension_numbers = #tpu.dot_dimension_numbers<[1], [0], [0], [1], [0, 0, 1, 1], [], []>} : vector<32x32xf32>, vector<32x32xf32>, vector<32x32xf32> -> vector<32x32xf32>
    %c3_85 = arith.constant 3 : index
    %c0_86 = arith.constant 0 : index
    %c0_87 = arith.constant 0 : index
    %133 = vector.load %arg7[%c3_85, %c0_86, %c0_87] : memref<4x32x32xf32, #tpu.memory_space<vmem>>, vector<1x32x32xf32>
    %134 = vector.shape_cast %133 : vector<1x32x32xf32> to vector<32x32xf32>
    %cst_88 = arith.constant dense<0.000000e+00> : vector<32x32xf32>
    %135 = tpu.matmul %23, %134, %cst_88 {dimension_numbers = #tpu.dot_dimension_numbers<[1], [0], [0], [1], [0, 0, 1, 1], [], []>} : vector<32x32xf32>, vector<32x32xf32>, vector<32x32xf32> -> vector<32x32xf32>
    %136 = vector.shape_cast %129 : vector<32x32xf32> to vector<4x8x32xf32>
    %137 = vector.shape_cast %132 : vector<32x32xf32> to vector<4x8x32xf32>
    %138 = vector.shape_cast %135 : vector<32x32xf32> to vector<4x8x32xf32>
    "tpu.trace_start"() <{level = 10 : i32, message = "bid,bjd->bij"}> : () -> ()
    %cst_89 = arith.constant dense<0.000000e+00> : vector<4x8x8xf32>
    %139 = tpu.matmul %136, %137, %cst_89 {dimension_numbers = #tpu.dot_dimension_numbers<[2], [2], [1], [1], [0, 0, 0, 1, 1, 1], [0], [0]>} : vector<4x8x32xf32>, vector<4x8x32xf32>, vector<4x8x8xf32> -> vector<4x8x8xf32>
    "tpu.trace_stop"() : () -> ()
    %c3_90 = arith.constant 3 : index
    %c0_91 = arith.constant 0 : index
    %c0_92 = arith.constant 0 : index
    %140 = vector.load %arg2[%c3_90, %c0_91, %c0_92] : memref<4x8x8xf32, #tpu.memory_space<vmem>>, vector<1x8x8xf32>
    %141 = vector.shape_cast %140 : vector<1x8x8xf32> to vector<8x8xf32>
    %142 = vector.shape_cast %141 : vector<8x8xf32> to vector<1x8x8xf32>
    %143 = vector.broadcast %142 : vector<1x8x8xf32> to vector<4x8x8xf32>
    %144 = arith.addf %139, %143 : vector<4x8x8xf32>
    %cst_93 = arith.constant dense<0xFF800000> : vector<4x8xf32>
    %145 = vector.multi_reduction <maximumf>, %144, %cst_93 [2] : vector<4x8x8xf32> to vector<4x8xf32>
    %146 = vector.shape_cast %145 : vector<4x8xf32> to vector<4x8x1xf32>
    %147 = vector.broadcast %146 : vector<4x8x1xf32> to vector<4x8x8xf32>
    %148 = arith.subf %144, %147 : vector<4x8x8xf32>
    %149 = math.exp %148 : vector<4x8x8xf32>
    %cst_94 = arith.constant dense<0.000000e+00> : vector<4x8xf32>
    %150 = vector.multi_reduction <add>, %149, %cst_94 [2] : vector<4x8x8xf32> to vector<4x8xf32>
    %151 = vector.shape_cast %150 : vector<4x8xf32> to vector<4x8x1xf32>
    %152 = tpu.reciprocal %151 {approx = true} : vector<4x8x1xf32> -> vector<4x8x1xf32>
    %153 = vector.broadcast %152 : vector<4x8x1xf32> to vector<4x8x8xf32>
    %154 = arith.mulf %149, %153 : vector<4x8x8xf32>
    "tpu.trace_start"() <{level = 10 : i32, message = "bij,bjd->bid"}> : () -> ()
    %cst_95 = arith.constant dense<0.000000e+00> : vector<4x8x32xf32>
    %155 = tpu.matmul %154, %138, %cst_95 {dimension_numbers = #tpu.dot_dimension_numbers<[2], [1], [1], [2], [0, 0, 0, 1, 1, 2], [0], [0]>} : vector<4x8x8xf32>, vector<4x8x32xf32>, vector<4x8x32xf32> -> vector<4x8x32xf32>
    "tpu.trace_stop"() : () -> ()
    %156 = vector.shape_cast %155 : vector<4x8x32xf32> to vector<32x32xf32>
    %c3_96 = arith.constant 3 : index
    %c0_97 = arith.constant 0 : index
    %c0_98 = arith.constant 0 : index
    %157 = vector.load %arg8[%c3_96, %c0_97, %c0_98] : memref<4x32x32xf32, #tpu.memory_space<vmem>>, vector<1x32x32xf32>
    %158 = vector.shape_cast %157 : vector<1x32x32xf32> to vector<32x32xf32>
    %cst_99 = arith.constant dense<0.000000e+00> : vector<32x32xf32>
    %159 = tpu.matmul %156, %158, %cst_99 {dimension_numbers = #tpu.dot_dimension_numbers<[1], [0], [0], [1], [0, 0, 1, 1], [], []>} : vector<32x32xf32>, vector<32x32xf32>, vector<32x32xf32> -> vector<32x32xf32>
    %160 = arith.addf %126, %159 : vector<32x32xf32>
    %c0_100 = arith.constant 0 : index
    %c0_101 = arith.constant 0 : index
    %161 = vector.load %arg9[%c0_100, %c0_101] : memref<1x32xf32, #tpu.memory_space<vmem>>, vector<1x32xf32>
    %162 = vector.broadcast %161 : vector<1x32xf32> to vector<32x32xf32>
    %163 = arith.addf %160, %162 : vector<32x32xf32>
    %164 = vector.shape_cast %163 : vector<32x32xf32> to vector<4x8x32xf32>
    %c0_102 = arith.constant 0 : index
    %c0_103 = arith.constant 0 : index
    %c0_104 = arith.constant 0 : index
    %165 = vector.load %arg10[%c0_102, %c0_103, %c0_104] : memref<4x8x32xf32, #tpu.memory_space<vmem>>, vector<4x8x32xf32>
    tpu.vector_store %arg10[%c0_102, %c0_103, %c0_104], %164 {strides = array<i32>} : memref<4x8x32xf32, #tpu.memory_space<vmem>>, vector<4x8x32xf32>,
    return
  }
  func.func @transform_0(%arg0: i32) -> (i32, i32, i32) {
    %c0_i32 = arith.constant 0 : i32
    %c0_i32_0 = arith.constant 0 : i32
    %c0_i32_1 = arith.constant 0 : i32
    return %arg0, %c0_i32, %c0_i32_0 : i32, i32, i32
  }
  func.func @transform_1(%arg0: i32) -> (i32, i32, i32) {
    %c0_i32 = arith.constant 0 : i32
    %c0_i32_0 = arith.constant 0 : i32
    %c0_i32_1 = arith.constant 0 : i32
    %c0_i32_2 = arith.constant 0 : i32
    return %c0_i32, %c0_i32_0, %c0_i32_1 : i32, i32, i32
  }
  func.func @transform_2(%arg0: i32) -> (i32, i32) {
    %c0_i32 = arith.constant 0 : i32
    %c0_i32_0 = arith.constant 0 : i32
    %c0_i32_1 = arith.constant 0 : i32
    return %c0_i32, %c0_i32_0 : i32, i32
  }
  func.func @transform_3(%arg0: i32) -> (i32, i32) {
    %c0_i32 = arith.constant 0 : i32
    %c0_i32_0 = arith.constant 0 : i32
    %c0_i32_1 = arith.constant 0 : i32
    return %c0_i32, %c0_i32_0 : i32, i32
  }
  func.func @transform_4(%arg0: i32) -> (i32, i32, i32) {
    %c0_i32 = arith.constant 0 : i32
    %c0_i32_0 = arith.constant 0 : i32
    %c0_i32_1 = arith.constant 0 : i32
    %c0_i32_2 = arith.constant 0 : i32
    return %c0_i32, %c0_i32_0, %c0_i32_1 : i32, i32, i32
  }
  func.func @transform_5(%arg0: i32) -> (i32, i32, i32) {
    %c0_i32 = arith.constant 0 : i32
    %c0_i32_0 = arith.constant 0 : i32
    %c0_i32_1 = arith.constant 0 : i32
    %c0_i32_2 = arith.constant 0 : i32
    return %c0_i32, %c0_i32_0, %c0_i32_1 : i32, i32, i32
  }
  func.func @transform_6(%arg0: i32) -> (i32, i32, i32) {
    %c0_i32 = arith.constant 0 : i32
    %c0_i32_0 = arith.constant 0 : i32
    %c0_i32_1 = arith.constant 0 : i32
    %c0_i32_2 = arith.constant 0 : i32
    return %c0_i32, %c0_i32_0, %c0_i32_1 : i32, i32, i32
  }
  func.func @transform_7(%arg0: i32) -> (i32, i32, i32) {
    %c0_i32 = arith.constant 0 : i32
    %c0_i32_0 = arith.constant 0 : i32
    %c0_i32_1 = arith.constant 0 : i32
    %c0_i32_2 = arith.constant 0 : i32
    return %c0_i32, %c0_i32_0, %c0_i32_1 : i32, i32, i32
  }
  func.func @transform_8(%arg0: i32) -> (i32, i32) {
    %c0_i32 = arith.constant 0 : i32
    %c0_i32_0 = arith.constant 0 : i32
    %c0_i32_1 = arith.constant 0 : i32
    return %c0_i32, %c0_i32_0 : i32, i32
  }
  func.func @transform_9(%arg0: i32) -> (i32, i32, i32) {
    %c0_i32 = arith.constant 0 : i32
    %c0_i32_0 = arith.constant 0 : i32
    %c0_i32_1 = arith.constant 0 : i32
    return %arg0, %c0_i32, %c0_i32_0 : i32, i32, i32
  }
}

</mosaic_0001>

<llo_original>
// kernel: tpu_custom_call.1
$region0: #{tpu_custom_call.1}
  #allocation0 [shape = 'u32[]', space=smem, size = 0x4, offset = 0x4, fixed_abs, tag = 'smem constant byte address 0x4 - core index']
  #allocation1 [shape = 'u32[144,128]{1,0:T(1,128)}', space=vmem, size = 0x12000, scoped, tag = 'internal scratch']
  %s0 = inlined_call_operand.hbm [shape: f32[8,8,32], index: 0, kind: input, shape index: {}]
  %s1 = inlined_call_operand.hbm [shape: f32[4,8,8], index: 1, kind: input, shape index: {}]
  %s2 = inlined_call_operand.vmem [shape: f32[1,32], index: 2, kind: input, shape index: {}]
  %s3 = inlined_call_operand.vmem [shape: f32[1,32], index: 3, kind: input, shape index: {}]
  %s4 = inlined_call_operand.hbm [shape: f32[4,32,32], index: 4, kind: input, shape index: {}]
  %s5 = inlined_call_operand.hbm [shape: f32[4,32,32], index: 5, kind: input, shape index: {}]
  %s6 = inlined_call_operand.hbm [shape: f32[4,32,32], index: 6, kind: input, shape index: {}]
  %s7 = inlined_call_operand.hbm [shape: f32[4,32,32], index: 7, kind: input, shape index: {}]
  %s8 = inlined_call_operand.vmem [shape: f32[1,32], index: 8, kind: input, shape index: {}]
  %s9 = inlined_call_operand.hbm [shape: f32[8,8,32], index: 9, kind: output, shape index: {}]
  %s10 = sld [smem:[#allocation0]]
  $region93: #{tpu_custom_call.1} parent=0
    _
  %s12 = ssub.s32 1, %s10
  %s13 = scalar_select 0, %s12, %s10
  $region1: #{tpu_custom_call.1} parent=0
    #allocation2 [shape = 'u8[32768]{0}', space=vmem, size = 0x8000, scoped, tag = 'input window, operand 0']
    #allocation3 [shape = 's32[2]{0}', space=sflag, size = 0x8, scoped, tag = 'scoped memory for tpu_custom_call.1']
    #allocation4 [shape = 's32[2]{0}', space=sflag, size = 0x8, scoped, tag = 'scoped memory for tpu_custom_call.1']
    #allocation5 [shape = 'u8[16384]{0}', space=vmem, size = 0x4000, scoped, tag = 'input window, operand 1, single buffered']
    #allocation6 [shape = 's32[1]{0}', space=sflag, size = 0x4, scoped, tag = 'scoped memory for tpu_custom_call.1']
    #allocation7 [shape = 'u8[65536]{0}', space=vmem, size = 0x10000, scoped, tag = 'input window, operand 4, single buffered']
    #allocation8 [shape = 'u8[65536]{0}', space=vmem, size = 0x10000, scoped, tag = 'input window, operand 5, single buffered']
    #allocation9 [shape = 's32[1]{0}', space=sflag, size = 0x4, scoped, tag = 'scoped memory for tpu_custom_call.1']
    #allocation10 [shape = 'u8[65536]{0}', space=vmem, size = 0x10000, scoped, tag = 'input window, operand 6, single buffered']
    #allocation11 [shape = 'u8[65536]{0}', space=vmem, size = 0x10000, scoped, tag = 'input window, operand 7, single buffered']
    #allocation12 [shape = 's32[1]{0}', space=sflag, size = 0x4, scoped, tag = 'scoped memory for tpu_custom_call.1']
    #allocation13 [shape = 'u8[32768]{0}', space=vmem, size = 0x8000, scoped, tag = 'output window, operand 0']
    %14 = vsyncpa [#allocation3], 0
    %s15 = scalar_lea.sflag [#allocation3], 1
    %16 = vsyncpa %s15, 0
    %17 = vsyncpa [#allocation6], 0
    %18 = vsyncpa [#allocation9], 0
    %19 = vsyncpa [#allocation12], 0
    %20 = vsyncpa [#allocation4], 0
    %s21 = scalar_lea.sflag [#allocation4], 1
    %22 = vsyncpa %s21, 0
    loop: start=0, step=1, limit=4
    $region2: #{tpu_custom_call.1} parent=1 // loop_pre_header
      _
    $region3: #{tpu_custom_call.1} parent=1 // loop_header
      %s24 = sphi 0, %s28
      %p25 = scmp.ge.s32.totalorder %s24, 4
      %s34 = sphi 0, %s36
      %s37 = sphi 0, %s34
      %s38 = sphi 0, %s37
      %s54 = sphi 0, %s38
      %s58 = sphi 0, %s58
      %s60 = sphi 0, %s58
      %s61 = sphi 0, %s60
      %s75 = sphi 0, %s61
      %s79 = sphi 0, %s79
      %s81 = sphi 0, %s79
      %s82 = sphi 0, %s81
      %s96 = sphi 0, %s82
      %s100 = sphi 0, %s100
      %s102 = sphi 0, %s100
      %s103 = sphi 0, %s102
      %s117 = sphi 0, %s103
      %s121 = sphi 0, %s121
      %s123 = sphi 0, %s121
      %s124 = sphi 0, %s123
      %s138 = sphi 0, %s124
      %s142 = sphi 0, %s142
      %s144 = sphi 0, %s142
      %s145 = sphi 0, %s144
      %s159 = sphi 0, %s145
      %s163 = sphi 0, %s163
      %s165 = sphi 0, %s163
      %s166 = sphi 0, %s165
      %s180 = sphi 0, %s166
      %s184 = sphi 0, %s184
      %s186 = sphi 0, %s184
      %s187 = sphi 0, %s186
      %s201 = sphi 0, %s187
      %s205 = sphi 0, %s205
      %s207 = sphi 0, %s205
      %s208 = sphi 0, %s207
      %s222 = sphi 0, %s208
      %s228 = sphi 0, %s230
      %s231 = sphi 0, %s228
      %s232 = sphi 0, %s231
      %s248 = sphi 0, %s232
    $region4: #{tpu_custom_call.1} parent=1 // loop_header_branch
      %27 = sbr.rel (%p25) target = $region8
    $region5: #{tpu_custom_call.1} parent=1 // loop_body
      %s29 = ssub.s32 %s24, 1
      %s30 = ssub.s32 %s24, 2
      %s31 = sadd.s32 %s24, 1
      %s32 = ssub.s32 %s24, %s31
      %p33 = scmp.eq.s32.totalorder %s32, 0
      %s35 = sadd.s32 %s34, 1
      %s36 = scalar_select %p33, %s34, %s35
      %p39 = pneg %p33
      %p40 = scmp.eq.s32.totalorder %s24, 1
      %p41 = por %p39, %p40
      %p42 = scmp.ne.s32.totalorder %s34, %s37
      %p43 = scmp.eq.s32.totalorder %s24, 0
      %p44 = por %p42, %p43
      %p45 = scmp.ne.s32.totalorder %s34, %s37
      %p46 = scmp.eq.s32.totalorder %s29, 1
      %p47 = por %p45, %p46
      %p48 = scmp.ne.s32.totalorder %s37, %s38
      %p49 = scmp.eq.s32.totalorder %s29, 0
      %p50 = por %p48, %p49
      %p51 = scmp.ne.s32.totalorder %s37, %s38
      %p52 = scmp.eq.s32.totalorder %s30, 1
      %p53 = por %p51, %p52
      %p55 = scmp.ne.s32.totalorder %s38, %s54
      %p56 = scmp.eq.s32.totalorder %s30, 0
      %p57 = por %p55, %p56
      %s59 = sadd.s32 %s58, 1
      %p62 = scmp.eq.s32.totalorder %s24, 1
      %p63 = scmp.ne.s32.totalorder %s58, %s60
      %p64 = scmp.eq.s32.totalorder %s24, 0
      %p65 = por %p63, %p64
      %p66 = scmp.ne.s32.totalorder %s58, %s60
      %p67 = scmp.eq.s32.totalorder %s29, 1
      %p68 = por %p66, %p67
      %p69 = scmp.ne.s32.totalorder %s60, %s61
      %p70 = scmp.eq.s32.totalorder %s29, 0
      %p71 = por %p69, %p70
      %p72 = scmp.ne.s32.totalorder %s60, %s61
      %p73 = scmp.eq.s32.totalorder %s30, 1
      %p74 = por %p72, %p73
      %p76 = scmp.ne.s32.totalorder %s61, %s75
      %p77 = scmp.eq.s32.totalorder %s30, 0
      %p78 = por %p76, %p77
      %s80 = sadd.s32 %s79, 1
      %p83 = scmp.eq.s32.totalorder %s24, 1
      %p84 = scmp.ne.s32.totalorder %s79, %s81
      %p85 = scmp.eq.s32.totalorder %s24, 0
      %p86 = por %p84, %p85
      %p87 = scmp.ne.s32.totalorder %s79, %s81
      %p88 = scmp.eq.s32.totalorder %s29, 1
      %p89 = por %p87, %p88
      %p90 = scmp.ne.s32.totalorder %s81, %s82
      %p91 = scmp.eq.s32.totalorder %s29, 0
      %p92 = por %p90, %p91
      %p93 = scmp.ne.s32.totalorder %s81, %s82
      %p94 = scmp.eq.s32.totalorder %s30, 1
      %p95 = por %p93, %p94
      %p97 = scmp.ne.s32.totalorder %s82, %s96
      %p98 = scmp.eq.s32.totalorder %s30, 0
      %p99 = por %p97, %p98
      %s101 = sadd.s32 %s100, 1
      %p104 = scmp.eq.s32.totalorder %s24, 1
      %p105 = scmp.ne.s32.totalorder %s100, %s102
      %p106 = scmp.eq.s32.totalorder %s24, 0
      %p107 = por %p105, %p106
      %p108 = scmp.ne.s32.totalorder %s100, %s102
      %p109 = scmp.eq.s32.totalorder %s29, 1
      %p110 = por %p108, %p109
      %p111 = scmp.ne.s32.totalorder %s102, %s103
      %p112 = scmp.eq.s32.totalorder %s29, 0
      %p113 = por %p111, %p112
      %p114 = scmp.ne.s32.totalorder %s102, %s103
      %p115 = scmp.eq.s32.totalorder %s30, 1
      %p116 = por %p114, %p115
      %p118 = scmp.ne.s32.totalorder %s103, %s117
      %p119 = scmp.eq.s32.totalorder %s30, 0
      %p120 = por %p118, %p119
      %s122 = sadd.s32 %s121, 1
      %p125 = scmp.eq.s32.totalorder %s24, 1
      %p126 = scmp.ne.s32.totalorder %s121, %s123
      %p127 = scmp.eq.s32.totalorder %s24, 0
      %p128 = por %p126, %p127
      %p129 = scmp.ne.s32.totalorder %s121, %s123
      %p130 = scmp.eq.s32.totalorder %s29, 1
      %p131 = por %p129, %p130
      %p132 = scmp.ne.s32.totalorder %s123, %s124
      %p133 = scmp.eq.s32.totalorder %s29, 0
      %p134 = por %p132, %p133
      %p135 = scmp.ne.s32.totalorder %s123, %s124
      %p136 = scmp.eq.s32.totalorder %s30, 1
      %p137 = por %p135, %p136
      %p139 = scmp.ne.s32.totalorder %s124, %s138
      %p140 = scmp.eq.s32.totalorder %s30, 0
      %p141 = por %p139, %p140
      %s143 = sadd.s32 %s142, 1
      %p146 = scmp.eq.s32.totalorder %s24, 1
      %p147 = scmp.ne.s32.totalorder %s142, %s144
      %p148 = scmp.eq.s32.totalorder %s24, 0
      %p149 = por %p147, %p148
      %p150 = scmp.ne.s32.totalorder %s142, %s144
      %p151 = scmp.eq.s32.totalorder %s29, 1
      %p152 = por %p150, %p151
      %p153 = scmp.ne.s32.totalorder %s144, %s145
      %p154 = scmp.eq.s32.totalorder %s29, 0
      %p155 = por %p153, %p154
      %p156 = scmp.ne.s32.totalorder %s144, %s145
      %p157 = scmp.eq.s32.totalorder %s30, 1
      %p158 = por %p156, %p157
      %p160 = scmp.ne.s32.totalorder %s145, %s159
      %p161 = scmp.eq.s32.totalorder %s30, 0
      %p162 = por %p160, %p161
      %s164 = sadd.s32 %s163, 1
      %p167 = scmp.eq.s32.totalorder %s24, 1
      %p168 = scmp.ne.s32.totalorder %s163, %s165
      %p169 = scmp.eq.s32.totalorder %s24, 0
      %p170 = por %p168, %p169
      %p171 = scmp.ne.s32.totalorder %s163, %s165
      %p172 = scmp.eq.s32.totalorder %s29, 1
      %p173 = por %p171, %p172
      %p174 = scmp.ne.s32.totalorder %s165, %s166
      %p175 = scmp.eq.s32.totalorder %s29, 0
      %p176 = por %p174, %p175
      %p177 = scmp.ne.s32.totalorder %s165, %s166
      %p178 = scmp.eq.s32.totalorder %s30, 1
      %p179 = por %p177, %p178
      %p181 = scmp.ne.s32.totalorder %s166, %s180
      %p182 = scmp.eq.s32.totalorder %s30, 0
      %p183 = por %p181, %p182
      %s185 = sadd.s32 %s184, 1
      %p188 = scmp.eq.s32.totalorder %s24, 1
      %p189 = scmp.ne.s32.totalorder %s184, %s186
      %p190 = scmp.eq.s32.totalorder %s24, 0
      %p191 = por %p189, %p190
      %p192 = scmp.ne.s32.totalorder %s184, %s186
      %p193 = scmp.eq.s32.totalorder %s29, 1
      %p194 = por %p192, %p193
      %p195 = scmp.ne.s32.totalorder %s186, %s187
      %p196 = scmp.eq.s32.totalorder %s29, 0
      %p197 = por %p195, %p196
      %p198 = scmp.ne.s32.totalorder %s186, %s187
      %p199 = scmp.eq.s32.totalorder %s30, 1
      %p200 = por %p198, %p199
      %p202 = scmp.ne.s32.totalorder %s187, %s201
      %p203 = scmp.eq.s32.totalorder %s30, 0
      %p204 = por %p202, %p203
      %s206 = sadd.s32 %s205, 1
      %p209 = scmp.eq.s32.totalorder %s24, 1
      %p210 = scmp.ne.s32.totalorder %s205, %s207
      %p211 = scmp.eq.s32.totalorder %s24, 0
      %p212 = por %p210, %p211
      %p213 = scmp.ne.s32.totalorder %s205, %s207
      %p214 = scmp.eq.s32.totalorder %s29, 1
      %p215 = por %p213, %p214
      %p216 = scmp.ne.s32.totalorder %s207, %s208
      %p217 = scmp.eq.s32.totalorder %s29, 0
      %p218 = por %p216, %p217
      %p219 = scmp.ne.s32.totalorder %s207, %s208
      %p220 = scmp.eq.s32.totalorder %s30, 1
      %p221 = por %p219, %p220
      %p223 = scmp.ne.s32.totalorder %s208, %s222
      %p224 = scmp.eq.s32.totalorder %s30, 0
      %p225 = por %p223, %p224
      %s226 = ssub.s32 %s24, %s31
      %p227 = scmp.eq.s32.totalorder %s226, 0
      %s229 = sadd.s32 %s228, 1
      %s230 = scalar_select %p227, %s228, %s229
      %p233 = pneg %p227
      %p234 = scmp.eq.s32.totalorder %s24, 1
      %p235 = por %p233, %p234
      %p236 = scmp.ne.s32.totalorder %s228, %s231
      %p237 = scmp.eq.s32.totalorder %s24, 0
      %p238 = por %p236, %p237
      %p239 = scmp.ne.s32.totalorder %s228, %s231
      %p240 = scmp.eq.s32.totalorder %s29, 1
      %p241 = por %p239, %p240
      %p242 = scmp.ne.s32.totalorder %s231, %s232
      %p243 = scmp.eq.s32.totalorder %s29, 0
      %p244 = por %p242, %p243
      %p245 = scmp.ne.s32.totalorder %s231, %s232
      %p246 = scmp.eq.s32.totalorder %s30, 1
      %p247 = por %p245, %p246
      %p249 = scmp.ne.s32.totalorder %s232, %s248
      %p250 = scmp.eq.s32.totalorder %s30, 0
      %p251 = por %p249, %p250
      %p252 = scmp.le.s32.totalorder 1, %s24
      %p253 = scmp.lt.s32.totalorder %s24, 3
      %p254 = pnand %p252, %p253
      %p255 = pneg %p254
      // Predicated region
      $region9: #{tpu_custom_call.1} parent=5 // pred_check
        _
      $region10: #{tpu_custom_call.1} parent=5 // pred_check_branch
        %257 = sbr.rel (%p254) target = $region12
      $region11: #{tpu_custom_call.1} parent=5 // pred_region
        %s258 = ssub.s32 %s24, 1
        // Predicated region
        $region13: #{tpu_custom_call.1} parent=11 // pred_check
          %p259 = pneg %p71
        $region14: #{tpu_custom_call.1} parent=11 // pred_check_branch
          %261 = sbr.rel (%p259) target = $region16
        $region15: #{tpu_custom_call.1} parent=11 // pred_region
          %s263 = ssub.s32 512, 512
          %264 = vsyncadd [#allocation6], %s263
          %s265 = sshll.u32 [#allocation5], 4
          %s266 = int_to_ptr.vmem [resolvable:$true] %s265
          %271 = dma.hbm_to_vmem [thread:$0]  %s1, 512, %s266, [#allocation6], 128, 128, 8
        $region16: #{tpu_custom_call.1} parent=11 // pred_fallthru
          _
        // Predicated region
        $region17: #{tpu_custom_call.1} parent=11 // pred_check
          %p272 = pneg %p92
        $region18: #{tpu_custom_call.1} parent=11 // pred_check_branch
          %274 = sbr.rel (%p272) target = $region20
        $region19: #{tpu_custom_call.1} parent=11 // pred_region
          _
        $region20: #{tpu_custom_call.1} parent=11 // pred_fallthru
          _
        // Predicated region
        $region21: #{tpu_custom_call.1} parent=11 // pred_check
          %p275 = pneg %p113
        $region22: #{tpu_custom_call.1} parent=11 // pred_check_branch
          %277 = sbr.rel (%p275) target = $region24
        $region23: #{tpu_custom_call.1} parent=11 // pred_region
          _
        $region24: #{tpu_custom_call.1} parent=11 // pred_fallthru
          _
        // Predicated region
        $region25: #{tpu_custom_call.1} parent=11 // pred_check
          %p278 = pneg %p134
        $region26: #{tpu_custom_call.1} parent=11 // pred_check_branch
          %280 = sbr.rel (%p278) target = $region28
        $region27: #{tpu_custom_call.1} parent=11 // pred_region
          %s282 = ssub.s32 2048, 2048
          %283 = vsyncadd [#allocation6], %s282
          %s284 = sshll.u32 [#allocation7], 4
          %s285 = int_to_ptr.vmem [resolvable:$true] %s284
          %290 = dma.hbm_to_vmem [thread:$0]  %s4, 2048, %s285, [#allocation6], 128, 128, 8
        $region28: #{tpu_custom_call.1} parent=11 // pred_fallthru
          _
        // Predicated region
        $region29: #{tpu_custom_call.1} parent=11 // pred_check
          %p291 = pneg %p155
        $region30: #{tpu_custom_call.1} parent=11 // pred_check_branch
          %293 = sbr.rel (%p291) target = $region32
        $region31: #{tpu_custom_call.1} parent=11 // pred_region
          %s295 = ssub.s32 2048, 2048
          %296 = vsyncadd [#allocation9], %s295
          %s297 = sshll.u32 [#allocation8], 4
          %s298 = int_to_ptr.vmem [resolvable:$true] %s297
          %303 = dma.hbm_to_vmem [thread:$0]  %s5, 2048, %s298, [#allocation9], 128, 128, 8
        $region32: #{tpu_custom_call.1} parent=11 // pred_fallthru
          _
        // Predicated region
        $region33: #{tpu_custom_call.1} parent=11 // pred_check
          %p304 = pneg %p176
        $region34: #{tpu_custom_call.1} parent=11 // pred_check_branch
          %306 = sbr.rel (%p304) target = $region36
        $region35: #{tpu_custom_call.1} parent=11 // pred_region
          %s308 = ssub.s32 2048, 2048
          %309 = vsyncadd [#allocation9], %s308
          %s310 = sshll.u32 [#allocation10], 4
          %s311 = int_to_ptr.vmem [resolvable:$true] %s310
          %316 = dma.hbm_to_vmem [thread:$0]  %s6, 2048, %s311, [#allocation9], 128, 128, 8
        $region36: #{tpu_custom_call.1} parent=11 // pred_fallthru
          _
        // Predicated region
        $region37: #{tpu_custom_call.1} parent=11 // pred_check
          %p317 = pneg %p197
        $region38: #{tpu_custom_call.1} parent=11 // pred_check_branch
          %319 = sbr.rel (%p317) target = $region40
        $region39: #{tpu_custom_call.1} parent=11 // pred_region
          %s321 = ssub.s32 2048, 2048
          %322 = vsyncadd [#allocation12], %s321
          %s323 = sshll.u32 [#allocation11], 4
          %s324 = int_to_ptr.vmem [resolvable:$true] %s323
          %329 = dma.hbm_to_vmem [thread:$0]  %s7, 2048, %s324, [#allocation12], 128, 128, 8
        $region40: #{tpu_custom_call.1} parent=11 // pred_fallthru
          _
        // Predicated region
        $region41: #{tpu_custom_call.1} parent=11 // pred_check
          %p330 = pneg %p218
        $region42: #{tpu_custom_call.1} parent=11 // pred_check_branch
          %332 = sbr.rel (%p330) target = $region44
        $region43: #{tpu_custom_call.1} parent=11 // pred_region
          _
        $region44: #{tpu_custom_call.1} parent=11 // pred_fallthru
          _
      $region12: #{tpu_custom_call.1} parent=5 // pred_fallthru
        _
      %p333 = scmp.lt.s32.totalorder %s24, 2
      // Predicated region
      $region45: #{tpu_custom_call.1} parent=5 // pred_check
        %p334 = pneg %p333
      $region46: #{tpu_custom_call.1} parent=5 // pred_check_branch
        %336 = sbr.rel (%p334) target = $region48
      $region47: #{tpu_custom_call.1} parent=5 // pred_region
        // Predicated region
        $region49: #{tpu_custom_call.1} parent=47 // pred_check
          %p337 = pneg %p44
        $region50: #{tpu_custom_call.1} parent=47 // pred_check_branch
          %339 = sbr.rel (%p337) target = $region52
        $region51: #{tpu_custom_call.1} parent=47 // pred_region
          %s340 = sand.u32 %s34, 1
          %s341 = scalar_lea.sflag [#allocation3], %s340
          %s342 = sand.u32 %s34, 1
          %s343 = smul.addr %s342, 32
          %s344 = scalar_lea.vmem [#allocation2], %s343
          %s345 = smul.u32 4, %s24
          %s347 = ssub.s32 512, 512
          %348 = vsyncadd %s341, %s347
          %s349 = smul.addr %s345, 128
          %s350 = scalar_lea.hbm %s0, %s349
          %s351 = sshll.u32 %s344, 4
          %s352 = int_to_ptr.vmem [resolvable:$true] %s351
          %357 = dma.hbm_to_vmem [thread:$0]  %s350, 512, %s352, %s341, 128, 128, 8
        $region52: #{tpu_custom_call.1} parent=47 // pred_fallthru
          _
      $region48: #{tpu_custom_call.1} parent=5 // pred_fallthru
        _
      %p358 = scmp.le.s32.totalorder 1, %s24
      %p359 = scmp.lt.s32.totalorder %s24, 3
      %p360 = pnand %p358, %p359
      %p361 = pneg %p360
      // Predicated region
      $region53: #{tpu_custom_call.1} parent=5 // pred_check
        _
      $region54: #{tpu_custom_call.1} parent=5 // pred_check_branch
        %363 = sbr.rel (%p360) target = $region56
      $region55: #{tpu_custom_call.1} parent=5 // pred_region
        %s364 = ssub.s32 %s24, 1
        %s365 = sand.u32 %s37, 1
        %s366 = scalar_lea.sflag [#allocation3], %s365
        %s367 = sand.u32 %s37, 1
        %s368 = smul.addr %s367, 32
        %s369 = scalar_lea.vmem [#allocation2], %s368
        // Predicated region
        $region57: #{tpu_custom_call.1} parent=55 // pred_check
          %p370 = pneg %p50
        $region58: #{tpu_custom_call.1} parent=55 // pred_check_branch
          %372 = sbr.rel (%p370) target = $region60
        $region59: #{tpu_custom_call.1} parent=55 // pred_region
          %373 = dma.done %s366, 512
        $region60: #{tpu_custom_call.1} parent=55 // pred_fallthru
          _
        // Predicated region
        $region61: #{tpu_custom_call.1} parent=55 // pred_check
          %p374 = pneg %p71
        $region62: #{tpu_custom_call.1} parent=55 // pred_check_branch
          %376 = sbr.rel (%p374) target = $region64
        $region63: #{tpu_custom_call.1} parent=55 // pred_region
          %377 = dma.done [#allocation6], 512
        $region64: #{tpu_custom_call.1} parent=55 // pred_fallthru
          _
        // Predicated region
        $region65: #{tpu_custom_call.1} parent=55 // pred_check
          %p378 = pneg %p134
        $region66: #{tpu_custom_call.1} parent=55 // pred_check_branch
          %380 = sbr.rel (%p378) target = $region68
        $region67: #{tpu_custom_call.1} parent=55 // pred_region
          %381 = dma.done [#allocation6], 2048
        $region68: #{tpu_custom_call.1} parent=55 // pred_fallthru
          _
        // Predicated region
        $region69: #{tpu_custom_call.1} parent=55 // pred_check
          %p382 = pneg %p155
        $region70: #{tpu_custom_call.1} parent=55 // pred_check_branch
          %384 = sbr.rel (%p382) target = $region72
        $region71: #{tpu_custom_call.1} parent=55 // pred_region
          %385 = dma.done [#allocation9], 2048
        $region72: #{tpu_custom_call.1} parent=55 // pred_fallthru
          _
        // Predicated region
        $region73: #{tpu_custom_call.1} parent=55 // pred_check
          %p386 = pneg %p176
        $region74: #{tpu_custom_call.1} parent=55 // pred_check_branch
          %388 = sbr.rel (%p386) target = $region76
        $region75: #{tpu_custom_call.1} parent=55 // pred_region
          %389 = dma.done [#allocation9], 2048
        $region76: #{tpu_custom_call.1} parent=55 // pred_fallthru
          _
        // Predicated region
        $region77: #{tpu_custom_call.1} parent=55 // pred_check
          %p390 = pneg %p197
        $region78: #{tpu_custom_call.1} parent=55 // pred_check_branch
          %392 = sbr.rel (%p390) target = $region80
        $region79: #{tpu_custom_call.1} parent=55 // pred_region
          %393 = dma.done [#allocation12], 2048
        $region80: #{tpu_custom_call.1} parent=55 // pred_fallthru
          _
        %s394 = sand.u32 %s37, 1
        %s395 = scalar_lea.sflag [#allocation3], %s394
        %s396 = sand.u32 %s37, 1
        %s397 = smul.addr %s396, 32
        %s398 = scalar_lea.vmem [#allocation2], %s397
        %p399 = pneg %p50
        %p400 = pneg %p47
        %p401 = pneg %p71
        %p402 = pneg %p68
        %p403 = pneg %p92
        %p404 = pneg %p89
        %p405 = pneg %p113
        %p406 = pneg %p110
        %p407 = pneg %p134
        %p408 = pneg %p131
        %p409 = pneg %p155
        %p410 = pneg %p152
        %p411 = pneg %p176
        %p412 = pneg %p173
        %p413 = pneg %p197
        %p414 = pneg %p194
        %p415 = pneg %p218
        %p416 = pneg %p215
        %p417 = pneg %p244
        %p418 = pneg %p241
        %s419 = sand.u32 %s231, 1
        %s420 = scalar_lea.sflag [#allocation4], %s419
        %s421 = sand.u32 %s231, 1
        %s422 = smul.addr %s421, 32
        %s423 = scalar_lea.vmem [#allocation13], %s422
        %s424 = smul.u32 4, %s29
        %s425 = smul.u32 4, %s29
        %v426 = vld [vmem:[%s369] sm:$0xff]
        %v427 = vld [vmem:[%s369 + $0x8] sm:$0xff]
        %v428 = vld [vmem:[%s369 + $0x10] sm:$0xff]
        %v429 = vld [vmem:[%s369 + $0x18] sm:$0xff]
        %v430 = vld [vmem:[%s2] sm:$0x1]
        %v431 = vld [vmem:[%s3] sm:$0x1]
        %vm432 = vcmask 261120
        %v433 = vsel %vm432, %v426, 0.0
        %434 = vadd.xlane.f32.xlu0 %v433
        %v435 = vpop.xlane.xlu0 %434
        %v436 = vsel %vm432, %v427, 0.0
        %437 = vadd.xlane.f32.xlu0 %v436
        %v438 = vpop.xlane.xlu0 %437
        %v439 = vsel %vm432, %v428, 0.0
        %440 = vadd.xlane.f32.xlu0 %v439
        %v441 = vpop.xlane.xlu0 %440
        %v442 = vsel %vm432, %v429, 0.0
        %443 = vadd.xlane.f32.xlu0 %v442
        %v444 = vpop.xlane.xlu0 %443
        %v445 = vrcp.pop 32.0
        %v446 = vmul.f32 %v435, %v445
        %v447 = vmul.f32 %v438, %v445
        %v448 = vmul.f32 %v441, %v445
        %v449 = vmul.f32 %v444, %v445
        %v450 = vsub.f32 %v426, %v446
        %v451 = vsub.f32 %v427, %v447
        %v452 = vsub.f32 %v428, %v448
        %v453 = vsub.f32 %v429, %v449
        %v454 = vmul.f32 %v450, %v450
        %v455 = vmul.f32 %v451, %v451
        %v456 = vmul.f32 %v452, %v452
        %v457 = vmul.f32 %v453, %v453
        %v458 = vsel %vm432, %v454, 0.0
        %459 = vadd.xlane.f32.xlu0 %v458
        %v460 = vpop.xlane.xlu0 %459
        %v461 = vsel %vm432, %v455, 0.0
        %462 = vadd.xlane.f32.xlu0 %v461
        %v463 = vpop.xlane.xlu0 %462
        %v464 = vsel %vm432, %v456, 0.0
        %465 = vadd.xlane.f32.xlu0 %v464
        %v466 = vpop.xlane.xlu0 %465
        %v467 = vsel %vm432, %v457, 0.0
        %468 = vadd.xlane.f32.xlu0 %v467
        %v469 = vpop.xlane.xlu0 %468
        %v470 = vmul.f32 %v460, %v445
        %v471 = vmul.f32 %v463, %v445
        %v472 = vmul.f32 %v466, %v445
        %v473 = vmul.f32 %v469, %v445
        %v474 = vadd.f32 %v470, 1e-05
        %v475 = vadd.f32 %v471, 1e-05
        %v476 = vadd.f32 %v472, 1e-05
        %v477 = vadd.f32 %v473, 1e-05
        %v478 = vrsqrt.pop %v474
        %v479 = vrsqrt.pop %v475
        %v480 = vrsqrt.pop %v476
        %v481 = vrsqrt.pop %v477
        %v482 = vmul.f32 %v450, %v478
        %v483 = vmul.f32 %v451, %v479
        %v484 = vmul.f32 %v452, %v480
        %v485 = vmul.f32 %v453, %v481
        %v487 = vlaneseq
        %v488 = vshrl.u32 %v487, 7
        %v489 = vsub.s32 0, %v488
        %v490 = vrot.slane %v430, %v489
        %v492 = vmul.f32 %v482, %v490
        %v493 = vmul.f32 %v483, %v490
        %v494 = vmul.f32 %v484, %v490
        %v495 = vmul.f32 %v485, %v490
        %v497 = vlaneseq
        %v498 = vshrl.u32 %v497, 7
        %v499 = vsub.s32 0, %v498
        %v500 = vrot.slane %v431, %v499
        %v502 = vadd.f32 %v492, %v500
        %v503 = vadd.f32 %v493, %v500
        %v504 = vadd.f32 %v494, %v500
        %v505 = vadd.f32 %v495, %v500
        %v506 = vld [vmem:[#allocation7] sm:$0xff]
        %v507 = vld [vmem:[#allocation7 + $0x8] sm:$0xff]
        %v508 = vld [vmem:[#allocation7 + $0x10] sm:$0xff]
        %v509 = vld [vmem:[#allocation7 + $0x18] sm:$0xff]
        %v511 = vsel %vm432, %v502, 0
        %v514 = vsel %vm432, %v503, 0
        %v517 = vsel %vm432, %v504, 0
        %v520 = vsel %vm432, %v505, 0
        %522 = vmatprep.subr.mxu0 0.0
        %523 = vmatpush1.msra.mxu0 0.0
        %524 = vmatprep.subr.mxu0 0.0
        %525 = vmatpush1.msra.mxu0 0.0
        %526 = vmatprep.subr.mxu0 0.0
        %527 = vmatpush1.msra.mxu0 0.0
        %528 = vmatprep.subr.mxu0 0.0
        %529 = vmatpush1.msra.mxu0 0.0
        %530 = vmatprep.subr.mxu0 0.0
        %531 = vmatpush1.msra.mxu0 0.0
        %532 = vmatprep.subr.mxu0 0.0
        %533 = vmatpush1.msra.mxu0 0.0
        %534 = vmatprep.subr.mxu0 0.0
        %535 = vmatpush1.msra.mxu0 0.0
        %536 = vmatprep.subr.mxu0 0.0
        %537 = vmatpush1.msra.mxu0 0.0
        %538 = vmatprep.subr.mxu0 0.0
        %539 = vmatpush1.msra.mxu0 0.0
        %540 = vmatprep.subr.mxu0 0.0
        %541 = vmatpush1.msra.mxu0 0.0
        %542 = vmatprep.subr.mxu0 0.0
        %543 = vmatpush1.msra.mxu0 0.0
        %544 = vmatprep.subr.mxu0 0.0
        %545 = vmatpush1.msra.mxu0 0.0
        %546 = vmatprep.subr.mxu0 0.0
        %547 = vmatpush1.msra.mxu0 %v509
        %548 = vmatprep.subr.mxu0 0.0
        %549 = vmatpush1.msra.mxu0 %v508
        %550 = vmatprep.subr.mxu0 0.0
        %551 = vmatpush1.msra.mxu0 %v507
        %552 = vmatprep.subr.mxu0 0.0
        %553 = vmatpush1.msra.mxu0 %v506
        %554 = vmatprep.subr.mxu0 0.0
        %555 = vmatpush2.msra.mxu0 0.0
        %556 = vmatprep.subr.mxu0 0.0
        %557 = vmatpush2.msra.mxu0 0.0
        %558 = vmatprep.subr.mxu0 0.0
        %559 = vmatpush2.msra.mxu0 0.0
        %560 = vmatprep.subr.mxu0 0.0
        %561 = vmatpush2.msra.mxu0 0.0
        %562 = vmatprep.subr.mxu0 0.0
        %563 = vmatpush2.msra.mxu0 0.0
        %564 = vmatprep.subr.mxu0 0.0
        %565 = vmatpush2.msra.mxu0 0.0
        %566 = vmatprep.subr.mxu0 0.0
        %567 = vmatpush2.msra.mxu0 0.0
        %568 = vmatprep.subr.mxu0 0.0
        %569 = vmatpush2.msra.mxu0 0.0
        %570 = vmatprep.subr.mxu0 0.0
        %571 = vmatpush2.msra.mxu0 0.0
        %572 = vmatprep.subr.mxu0 0.0
        %573 = vmatpush2.msra.mxu0 0.0
        %574 = vmatprep.subr.mxu0 0.0
        %575 = vmatpush2.msra.mxu0 0.0
        %576 = vmatprep.subr.mxu0 0.0
        %577 = vmatpush2.msra.mxu0 0.0
        %578 = vmatprep.subr.mxu0 0.0
        %579 = vmatpush2.msra.mxu0 0.0
        %580 = vmatprep.subr.mxu0 0.0
        %581 = vmatpush2.msra.mxu0 0.0
        %582 = vmatprep.subr.mxu0 0.0
        %583 = vmatpush2.msra.mxu0 0.0
        %584 = vmatprep.subr.mxu0 0.0
        %585 = vmatpush2.msra.mxu0 0.0
        %586 = vmatprep.mubr.f32.mxu0 0.0
        %587 = vmatmul.mubr.f32.gmra.mxu0 %v511
        %v588 = vpop.f32.mrf.mxu0
        %v589 = vadd.f32 0.0, %v588
        %v590 = vpop.f32.mrf.mxu0
        %591 = vmatprep.mubr.f32.mxu0 0.0
        %592 = vmatmul.mubr.f32.gmra.mxu0 %v514
        %v593 = vpop.f32.mrf.mxu0
        %v594 = vadd.f32 0.0, %v593
        %v595 = vpop.f32.mrf.mxu0
        %596 = vmatprep.mubr.f32.mxu0 0.0
        %597 = vmatmul.mubr.f32.gmra.mxu0 %v517
        %v598 = vpop.f32.mrf.mxu0
        %v599 = vadd.f32 0.0, %v598
        %v600 = vpop.f32.mrf.mxu0
        %601 = vmatprep.mubr.f32.mxu0 0.0
        %602 = vmatmul.mubr.f32.gmra.mxu0 %v520
        %v603 = vpop.f32.mrf.mxu0
        %v604 = vadd.f32 0.0, %v603
        %v605 = vpop.f32.mrf.mxu0
        %606 = vdwg.mxu0
        %v607 = vld [vmem:[#allocation8] sm:$0xff]
        %v608 = vld [vmem:[#allocation8 + $0x8] sm:$0xff]
        %v609 = vld [vmem:[#allocation8 + $0x10] sm:$0xff]
        %v610 = vld [vmem:[#allocation8 + $0x18] sm:$0xff]
        %611 = vmatprep.subr.mxu0 0.0
        %612 = vmatpush1.msra.mxu0 0.0
        %613 = vmatprep.subr.mxu0 0.0
        %614 = vmatpush1.msra.mxu0 0.0
        %615 = vmatprep.subr.mxu0 0.0
        %616 = vmatpush1.msra.mxu0 0.0
        %617 = vmatprep.subr.mxu0 0.0
        %618 = vmatpush1.msra.mxu0 0.0
        %619 = vmatprep.subr.mxu0 0.0
        %620 = vmatpush1.msra.mxu0 0.0
        %621 = vmatprep.subr.mxu0 0.0
        %622 = vmatpush1.msra.mxu0 0.0
        %623 = vmatprep.subr.mxu0 0.0
        %624 = vmatpush1.msra.mxu0 0.0
        %625 = vmatprep.subr.mxu0 0.0
        %626 = vmatpush1.msra.mxu0 0.0
        %627 = vmatprep.subr.mxu0 0.0
        %628 = vmatpush1.msra.mxu0 0.0
        %629 = vmatprep.subr.mxu0 0.0
        %630 = vmatpush1.msra.mxu0 0.0
        %631 = vmatprep.subr.mxu0 0.0
        %632 = vmatpush1.msra.mxu0 0.0
        %633 = vmatprep.subr.mxu0 0.0
        %634 = vmatpush1.msra.mxu0 0.0
        %635 = vmatprep.subr.mxu0 0.0
        %636 = vmatpush1.msra.mxu0 %v610
        %637 = vmatprep.subr.mxu0 0.0
        %638 = vmatpush1.msra.mxu0 %v609
        %639 = vmatprep.subr.mxu0 0.0
        %640 = vmatpush1.msra.mxu0 %v608
        %641 = vmatprep.subr.mxu0 0.0
        %642 = vmatpush1.msra.mxu0 %v607
        %643 = vmatprep.subr.mxu0 0.0
        %644 = vmatpush2.msra.mxu0 0.0
        %645 = vmatprep.subr.mxu0 0.0
        %646 = vmatpush2.msra.mxu0 0.0
        %647 = vmatprep.subr.mxu0 0.0
        %648 = vmatpush2.msra.mxu0 0.0
        %649 = vmatprep.subr.mxu0 0.0
        %650 = vmatpush2.msra.mxu0 0.0
        %651 = vmatprep.subr.mxu0 0.0
        %652 = vmatpush2.msra.mxu0 0.0
        %653 = vmatprep.subr.mxu0 0.0
        %654 = vmatpush2.msra.mxu0 0.0
        %655 = vmatprep.subr.mxu0 0.0
        %656 = vmatpush2.msra.mxu0 0.0
        %657 = vmatprep.subr.mxu0 0.0
        %658 = vmatpush2.msra.mxu0 0.0
        %659 = vmatprep.subr.mxu0 0.0
        %660 = vmatpush2.msra.mxu0 0.0
        %661 = vmatprep.subr.mxu0 0.0
        %662 = vmatpush2.msra.mxu0 0.0
        %663 = vmatprep.subr.mxu0 0.0
        %664 = vmatpush2.msra.mxu0 0.0
        %665 = vmatprep.subr.mxu0 0.0
        %666 = vmatpush2.msra.mxu0 0.0
        %667 = vmatprep.subr.mxu0 0.0
        %668 = vmatpush2.msra.mxu0 0.0
        %669 = vmatprep.subr.mxu0 0.0
        %670 = vmatpush2.msra.mxu0 0.0
        %671 = vmatprep.subr.mxu0 0.0
        %672 = vmatpush2.msra.mxu0 0.0
        %673 = vmatprep.subr.mxu0 0.0
        %674 = vmatpush2.msra.mxu0 0.0
        %675 = vmatprep.mubr.f32.mxu0 0.0
        %676 = vmatmul.mubr.f32.gmra.mxu0 %v511
        %v677 = vpop.f32.mrf.mxu0
        %v678 = vadd.f32 0.0, %v677
        %v679 = vpop.f32.mrf.mxu0
        %680 = vmatprep.mubr.f32.mxu0 0.0
        %681 = vmatmul.mubr.f32.gmra.mxu0 %v514
        %v682 = vpop.f32.mrf.mxu0
        %v683 = vadd.f32 0.0, %v682
        %v684 = vpop.f32.mrf.mxu0
        %685 = vmatprep.mubr.f32.mxu0 0.0
        %686 = vmatmul.mubr.f32.gmra.mxu0 %v517
        %v687 = vpop.f32.mrf.mxu0
        %v688 = vadd.f32 0.0, %v687
        %v689 = vpop.f32.mrf.mxu0
        %690 = vmatprep.mubr.f32.mxu0 0.0
        %691 = vmatmul.mubr.f32.gmra.mxu0 %v520
        %v692 = vpop.f32.mrf.mxu0
        %v693 = vadd.f32 0.0, %v692
        %v694 = vpop.f32.mrf.mxu0
        %695 = vdwg.mxu0
        %v696 = vld [vmem:[#allocation10] sm:$0xff]
        %v697 = vld [vmem:[#allocation10 + $0x8] sm:$0xff]
        %v698 = vld [vmem:[#allocation10 + $0x10] sm:$0xff]
        %v699 = vld [vmem:[#allocation10 + $0x18] sm:$0xff]
        %700 = vmatprep.subr.mxu0 0.0
        %701 = vmatpush1.msra.mxu0 0.0
        %702 = vmatprep.subr.mxu0 0.0
        %703 = vmatpush1.msra.mxu0 0.0
        %704 = vmatprep.subr.mxu0 0.0
        %705 = vmatpush1.msra.mxu0 0.0
        %706 = vmatprep.subr.mxu0 0.0
        %707 = vmatpush1.msra.mxu0 0.0
        %708 = vmatprep.subr.mxu0 0.0
        %709 = vmatpush1.msra.mxu0 0.0
        %710 = vmatprep.subr.mxu0 0.0
        %711 = vmatpush1.msra.mxu0 0.0
        %712 = vmatprep.subr.mxu0 0.0
        %713 = vmatpush1.msra.mxu0 0.0
        %714 = vmatprep.subr.mxu0 0.0
        %715 = vmatpush1.msra.mxu0 0.0
        %716 = vmatprep.subr.mxu0 0.0
        %717 = vmatpush1.msra.mxu0 0.0
        %718 = vmatprep.subr.mxu0 0.0
        %719 = vmatpush1.msra.mxu0 0.0
        %720 = vmatprep.subr.mxu0 0.0
        %721 = vmatpush1.msra.mxu0 0.0
        %722 = vmatprep.subr.mxu0 0.0
        %723 = vmatpush1.msra.mxu0 0.0
        %724 = vmatprep.subr.mxu0 0.0
        %725 = vmatpush1.msra.mxu0 %v699
        %726 = vmatprep.subr.mxu0 0.0
        %727 = vmatpush1.msra.mxu0 %v698
        %728 = vmatprep.subr.mxu0 0.0
        %729 = vmatpush1.msra.mxu0 %v697
        %730 = vmatprep.subr.mxu0 0.0
        %731 = vmatpush1.msra.mxu0 %v696
        %732 = vmatprep.subr.mxu0 0.0
        %733 = vmatpush2.msra.mxu0 0.0
        %734 = vmatprep.subr.mxu0 0.0
        %735 = vmatpush2.msra.mxu0 0.0
        %736 = vmatprep.subr.mxu0 0.0
        %737 = vmatpush2.msra.mxu0 0.0
        %738 = vmatprep.subr.mxu0 0.0
        %739 = vmatpush2.msra.mxu0 0.0
        %740 = vmatprep.subr.mxu0 0.0
        %741 = vmatpush2.msra.mxu0 0.0
        %742 = vmatprep.subr.mxu0 0.0
        %743 = vmatpush2.msra.mxu0 0.0
        %744 = vmatprep.subr.mxu0 0.0
        %745 = vmatpush2.msra.mxu0 0.0
        %746 = vmatprep.subr.mxu0 0.0
        %747 = vmatpush2.msra.mxu0 0.0
        %748 = vmatprep.subr.mxu0 0.0
        %749 = vmatpush2.msra.mxu0 0.0
        %750 = vmatprep.subr.mxu0 0.0
        %751 = vmatpush2.msra.mxu0 0.0
        %752 = vmatprep.subr.mxu0 0.0
        %753 = vmatpush2.msra.mxu0 0.0
        %754 = vmatprep.subr.mxu0 0.0
        %755 = vmatpush2.msra.mxu0 0.0
        %756 = vmatprep.subr.mxu0 0.0
        %757 = vmatpush2.msra.mxu0 0.0
        %758 = vmatprep.subr.mxu0 0.0
        %759 = vmatpush2.msra.mxu0 0.0
        %760 = vmatprep.subr.mxu0 0.0
        %761 = vmatpush2.msra.mxu0 0.0
        %762 = vmatprep.subr.mxu0 0.0
        %763 = vmatpush2.msra.mxu0 0.0
        %764 = vmatprep.mubr.f32.mxu0 0.0
        %765 = vmatmul.mubr.f32.gmra.mxu0 %v511
        %v766 = vpop.f32.mrf.mxu0
        %v767 = vadd.f32 0.0, %v766
        %v768 = vpop.f32.mrf.mxu0
        %769 = vmatprep.mubr.f32.mxu0 0.0
        %770 = vmatmul.mubr.f32.gmra.mxu0 %v514
        %v771 = vpop.f32.mrf.mxu0
        %v772 = vadd.f32 0.0, %v771
        %v773 = vpop.f32.mrf.mxu0
        %774 = vmatprep.mubr.f32.mxu0 0.0
        %775 = vmatmul.mubr.f32.gmra.mxu0 %v517
        %v776 = vpop.f32.mrf.mxu0
        %v777 = vadd.f32 0.0, %v776
        %v778 = vpop.f32.mrf.mxu0
        %779 = vmatprep.mubr.f32.mxu0 0.0
        %780 = vmatmul.mubr.f32.gmra.mxu0 %v520
        %v781 = vpop.f32.mrf.mxu0
        %v782 = vadd.f32 0.0, %v781
        %v783 = vpop.f32.mrf.mxu0
        %784 = vdwg.mxu0
        %v785 = vld [vmem:[#allocation5] sm:$0xff]
        %v787 = vsel %vm432, %v589, 0
        %v790 = vsel %vm432, %v678, 0
        %792 = vmatprep.subr.mxu0 0.0
        %793 = vmatpush1.xpose.msra.mxu0 0.0
        %794 = vmatprep.subr.mxu0 0.0
        %795 = vmatpush1.xpose.msra.mxu0 0.0
        %796 = vmatprep.subr.mxu0 0.0
        %797 = vmatpush1.xpose.msra.mxu0 0.0
        %798 = vmatprep.subr.mxu0 0.0
        %799 = vmatpush1.xpose.msra.mxu0 0.0
        %800 = vmatprep.subr.mxu0 0.0
        %801 = vmatpush1.xpose.msra.mxu0 0.0
        %802 = vmatprep.subr.mxu0 0.0
        %803 = vmatpush1.xpose.msra.mxu0 0.0
        %804 = vmatprep.subr.mxu0 0.0
        %805 = vmatpush1.xpose.msra.mxu0 0.0
        %806 = vmatprep.subr.mxu0 0.0
        %807 = vmatpush1.xpose.msra.mxu0 0.0
        %808 = vmatprep.subr.mxu0 0.0
        %809 = vmatpush1.xpose.msra.mxu0 0.0
        %810 = vmatprep.subr.mxu0 0.0
        %811 = vmatpush1.xpose.msra.mxu0 0.0
        %812 = vmatprep.subr.mxu0 0.0
        %813 = vmatpush1.xpose.msra.mxu0 0.0
        %814 = vmatprep.subr.mxu0 0.0
        %815 = vmatpush1.xpose.msra.mxu0 0.0
        %816 = vmatprep.subr.mxu0 0.0
        %817 = vmatpush1.xpose.msra.mxu0 0.0
        %818 = vmatprep.subr.mxu0 0.0
        %819 = vmatpush1.xpose.msra.mxu0 0.0
        %820 = vmatprep.subr.mxu0 0.0
        %821 = vmatpush1.xpose.msra.mxu0 0.0
        %822 = vmatprep.subr.mxu0 0.0
        %823 = vmatpush1.xpose.msra.mxu0 %v790
        %824 = vmatprep.subr.mxu0 0.0
        %825 = vmatpush2.xpose.msra.mxu0 0.0
        %826 = vmatprep.subr.mxu0 0.0
        %827 = vmatpush2.xpose.msra.mxu0 0.0
        %828 = vmatprep.subr.mxu0 0.0
        %829 = vmatpush2.xpose.msra.mxu0 0.0
        %830 = vmatprep.subr.mxu0 0.0
        %831 = vmatpush2.xpose.msra.mxu0 0.0
        %832 = vmatprep.subr.mxu0 0.0
        %833 = vmatpush2.xpose.msra.mxu0 0.0
        %834 = vmatprep.subr.mxu0 0.0
        %835 = vmatpush2.xpose.msra.mxu0 0.0
        %836 = vmatprep.subr.mxu0 0.0
        %837 = vmatpush2.xpose.msra.mxu0 0.0
        %838 = vmatprep.subr.mxu0 0.0
        %839 = vmatpush2.xpose.msra.mxu0 0.0
        %840 = vmatprep.subr.mxu0 0.0
        %841 = vmatpush2.xpose.msra.mxu0 0.0
        %842 = vmatprep.subr.mxu0 0.0
        %843 = vmatpush2.xpose.msra.mxu0 0.0
        %844 = vmatprep.subr.mxu0 0.0
        %845 = vmatpush2.xpose.msra.mxu0 0.0
        %846 = vmatprep.subr.mxu0 0.0
        %847 = vmatpush2.xpose.msra.mxu0 0.0
        %848 = vmatprep.subr.mxu0 0.0
        %849 = vmatpush2.xpose.msra.mxu0 0.0
        %850 = vmatprep.subr.mxu0 0.0
        %851 = vmatpush2.xpose.msra.mxu0 0.0
        %852 = vmatprep.subr.mxu0 0.0
        %853 = vmatpush2.xpose.msra.mxu0 0.0
        %854 = vmatprep.subr.mxu0 0.0
        %855 = vmatpush2.xpose.msra.mxu0 0.0
        %856 = vmatprep.mubr.f32.mxu0 0.0
        %857 = vmatmul.mubr.f32.gmra.mxu0 %v787
        %v858 = vpop.f32.mrf.mxu0
        %v859 = vadd.f32 %v785, %v858
        %v860 = vpop.f32.mrf.mxu0
        %861 = vdwg.mxu0
        %v863 = vsel %vm432, %v594, 0
        %v866 = vsel %vm432, %v683, 0
        %868 = vmatprep.subr.mxu0 0.0
        %869 = vmatpush1.xpose.msra.mxu0 0.0
        %870 = vmatprep.subr.mxu0 0.0
        %871 = vmatpush1.xpose.msra.mxu0 0.0
        %872 = vmatprep.subr.mxu0 0.0
        %873 = vmatpush1.xpose.msra.mxu0 0.0
        %874 = vmatprep.subr.mxu0 0.0
        %875 = vmatpush1.xpose.msra.mxu0 0.0
        %876 = vmatprep.subr.mxu0 0.0
        %877 = vmatpush1.xpose.msra.mxu0 0.0
        %878 = vmatprep.subr.mxu0 0.0
        %879 = vmatpush1.xpose.msra.mxu0 0.0
        %880 = vmatprep.subr.mxu0 0.0
        %881 = vmatpush1.xpose.msra.mxu0 0.0
        %882 = vmatprep.subr.mxu0 0.0
        %883 = vmatpush1.xpose.msra.mxu0 0.0
        %884 = vmatprep.subr.mxu0 0.0
        %885 = vmatpush1.xpose.msra.mxu0 0.0
        %886 = vmatprep.subr.mxu0 0.0
        %887 = vmatpush1.xpose.msra.mxu0 0.0
        %888 = vmatprep.subr.mxu0 0.0
        %889 = vmatpush1.xpose.msra.mxu0 0.0
        %890 = vmatprep.subr.mxu0 0.0
        %891 = vmatpush1.xpose.msra.mxu0 0.0
        %892 = vmatprep.subr.mxu0 0.0
        %893 = vmatpush1.xpose.msra.mxu0 0.0
        %894 = vmatprep.subr.mxu0 0.0
        %895 = vmatpush1.xpose.msra.mxu0 0.0
        %896 = vmatprep.subr.mxu0 0.0
        %897 = vmatpush1.xpose.msra.mxu0 0.0
        %898 = vmatprep.subr.mxu0 0.0
        %899 = vmatpush1.xpose.msra.mxu0 %v866
        %900 = vmatprep.subr.mxu0 0.0
        %901 = vmatpush2.xpose.msra.mxu0 0.0
        %902 = vmatprep.subr.mxu0 0.0
        %903 = vmatpush2.xpose.msra.mxu0 0.0
        %904 = vmatprep.subr.mxu0 0.0
        %905 = vmatpush2.xpose.msra.mxu0 0.0
        %906 = vmatprep.subr.mxu0 0.0
        %907 = vmatpush2.xpose.msra.mxu0 0.0
        %908 = vmatprep.subr.mxu0 0.0
        %909 = vmatpush2.xpose.msra.mxu0 0.0
        %910 = vmatprep.subr.mxu0 0.0
        %911 = vmatpush2.xpose.msra.mxu0 0.0
        %912 = vmatprep.subr.mxu0 0.0
        %913 = vmatpush2.xpose.msra.mxu0 0.0
        %914 = vmatprep.subr.mxu0 0.0
        %915 = vmatpush2.xpose.msra.mxu0 0.0
        %916 = vmatprep.subr.mxu0 0.0
        %917 = vmatpush2.xpose.msra.mxu0 0.0
        %918 = vmatprep.subr.mxu0 0.0
        %919 = vmatpush2.xpose.msra.mxu0 0.0
        %920 = vmatprep.subr.mxu0 0.0
        %921 = vmatpush2.xpose.msra.mxu0 0.0
        %922 = vmatprep.subr.mxu0 0.0
        %923 = vmatpush2.xpose.msra.mxu0 0.0
        %924 = vmatprep.subr.mxu0 0.0
        %925 = vmatpush2.xpose.msra.mxu0 0.0
        %926 = vmatprep.subr.mxu0 0.0
        %927 = vmatpush2.xpose.msra.mxu0 0.0
        %928 = vmatprep.subr.mxu0 0.0
        %929 = vmatpush2.xpose.msra.mxu0 0.0
        %930 = vmatprep.subr.mxu0 0.0
        %931 = vmatpush2.xpose.msra.mxu0 0.0
        %932 = vmatprep.mubr.f32.mxu0 0.0
        %933 = vmatmul.mubr.f32.gmra.mxu0 %v863
        %v934 = vpop.f32.mrf.mxu0
        %v935 = vadd.f32 %v785, %v934
        %v936 = vpop.f32.mrf.mxu0
        %937 = vdwg.mxu0
        %v939 = vsel %vm432, %v599, 0
        %v942 = vsel %vm432, %v688, 0
        %944 = vmatprep.subr.mxu0 0.0
        %945 = vmatpush1.xpose.msra.mxu0 0.0
        %946 = vmatprep.subr.mxu0 0.0
        %947 = vmatpush1.xpose.msra.mxu0 0.0
        %948 = vmatprep.subr.mxu0 0.0
        %949 = vmatpush1.xpose.msra.mxu0 0.0
        %950 = vmatprep.subr.mxu0 0.0
        %951 = vmatpush1.xpose.msra.mxu0 0.0
        %952 = vmatprep.subr.mxu0 0.0
        %953 = vmatpush1.xpose.msra.mxu0 0.0
        %954 = vmatprep.subr.mxu0 0.0
        %955 = vmatpush1.xpose.msra.mxu0 0.0
        %956 = vmatprep.subr.mxu0 0.0
        %957 = vmatpush1.xpose.msra.mxu0 0.0
        %958 = vmatprep.subr.mxu0 0.0
        %959 = vmatpush1.xpose.msra.mxu0 0.0
        %960 = vmatprep.subr.mxu0 0.0
        %961 = vmatpush1.xpose.msra.mxu0 0.0
        %962 = vmatprep.subr.mxu0 0.0
        %963 = vmatpush1.xpose.msra.mxu0 0.0
        %964 = vmatprep.subr.mxu0 0.0
        %965 = vmatpush1.xpose.msra.mxu0 0.0
        %966 = vmatprep.subr.mxu0 0.0
        %967 = vmatpush1.xpose.msra.mxu0 0.0
        %968 = vmatprep.subr.mxu0 0.0
        %969 = vmatpush1.xpose.msra.mxu0 0.0
        %970 = vmatprep.subr.mxu0 0.0
        %971 = vmatpush1.xpose.msra.mxu0 0.0
        %972 = vmatprep.subr.mxu0 0.0
        %973 = vmatpush1.xpose.msra.mxu0 0.0
        %974 = vmatprep.subr.mxu0 0.0
        %975 = vmatpush1.xpose.msra.mxu0 %v942
        %976 = vmatprep.subr.mxu0 0.0
        %977 = vmatpush2.xpose.msra.mxu0 0.0
        %978 = vmatprep.subr.mxu0 0.0
        %979 = vmatpush2.xpose.msra.mxu0 0.0
        %980 = vmatprep.subr.mxu0 0.0
        %981 = vmatpush2.xpose.msra.mxu0 0.0
        %982 = vmatprep.subr.mxu0 0.0
        %983 = vmatpush2.xpose.msra.mxu0 0.0
        %984 = vmatprep.subr.mxu0 0.0
        %985 = vmatpush2.xpose.msra.mxu0 0.0
        %986 = vmatprep.subr.mxu0 0.0
        %987 = vmatpush2.xpose.msra.mxu0 0.0
        %988 = vmatprep.subr.mxu0 0.0
        %989 = vmatpush2.xpose.msra.mxu0 0.0
        %990 = vmatprep.subr.mxu0 0.0
        %991 = vmatpush2.xpose.msra.mxu0 0.0
        %992 = vmatprep.subr.mxu0 0.0
        %993 = vmatpush2.xpose.msra.mxu0 0.0
        %994 = vmatprep.subr.mxu0 0.0
        %995 = vmatpush2.xpose.msra.mxu0 0.0
        %996 = vmatprep.subr.mxu0 0.0
        %997 = vmatpush2.xpose.msra.mxu0 0.0
        %998 = vmatprep.subr.mxu0 0.0
        %999 = vmatpush2.xpose.msra.mxu0 0.0
        %1000 = vmatprep.subr.mxu0 0.0
        %1001 = vmatpush2.xpose.msra.mxu0 0.0
        %1002 = vmatprep.subr.mxu0 0.0
        %1003 = vmatpush2.xpose.msra.mxu0 0.0
        %1004 = vmatprep.subr.mxu0 0.0
        %1005 = vmatpush2.xpose.msra.mxu0 0.0
        %1006 = vmatprep.subr.mxu0 0.0
        %1007 = vmatpush2.xpose.msra.mxu0 0.0
        %1008 = vmatprep.mubr.f32.mxu0 0.0
        %1009 = vmatmul.mubr.f32.gmra.mxu0 %v939
        %v1010 = vpop.f32.mrf.mxu0
        %v1011 = vadd.f32 %v785, %v1010
        %v1012 = vpop.f32.mrf.mxu0
        %1013 = vdwg.mxu0
        %v1015 = vsel %vm432, %v604, 0
        %v1018 = vsel %vm432, %v693, 0
        %1020 = vmatprep.subr.mxu0 0.0
        %1021 = vmatpush1.xpose.msra.mxu0 0.0
        %1022 = vmatprep.subr.mxu0 0.0
        %1023 = vmatpush1.xpose.msra.mxu0 0.0
        %1024 = vmatprep.subr.mxu0 0.0
        %1025 = vmatpush1.xpose.msra.mxu0 0.0
        %1026 = vmatprep.subr.mxu0 0.0
        %1027 = vmatpush1.xpose.msra.mxu0 0.0
        %1028 = vmatprep.subr.mxu0 0.0
        %1029 = vmatpush1.xpose.msra.mxu0 0.0
        %1030 = vmatprep.subr.mxu0 0.0
        %1031 = vmatpush1.xpose.msra.mxu0 0.0
        %1032 = vmatprep.subr.mxu0 0.0
        %1033 = vmatpush1.xpose.msra.mxu0 0.0
        %1034 = vmatprep.subr.mxu0 0.0
        %1035 = vmatpush1.xpose.msra.mxu0 0.0
        %1036 = vmatprep.subr.mxu0 0.0
        %1037 = vmatpush1.xpose.msra.mxu0 0.0
        %1038 = vmatprep.subr.mxu0 0.0
        %1039 = vmatpush1.xpose.msra.mxu0 0.0
        %1040 = vmatprep.subr.mxu0 0.0
        %1041 = vmatpush1.xpose.msra.mxu0 0.0
        %1042 = vmatprep.subr.mxu0 0.0
        %1043 = vmatpush1.xpose.msra.mxu0 0.0
        %1044 = vmatprep.subr.mxu0 0.0
        %1045 = vmatpush1.xpose.msra.mxu0 0.0
        %1046 = vmatprep.subr.mxu0 0.0
        %1047 = vmatpush1.xpose.msra.mxu0 0.0
        %1048 = vmatprep.subr.mxu0 0.0
        %1049 = vmatpush1.xpose.msra.mxu0 0.0
        %1050 = vmatprep.subr.mxu0 0.0
        %1051 = vmatpush1.xpose.msra.mxu0 %v1018
        %1052 = vmatprep.subr.mxu0 0.0
        %1053 = vmatpush2.xpose.msra.mxu0 0.0
        %1054 = vmatprep.subr.mxu0 0.0
        %1055 = vmatpush2.xpose.msra.mxu0 0.0
        %1056 = vmatprep.subr.mxu0 0.0
        %1057 = vmatpush2.xpose.msra.mxu0 0.0
        %1058 = vmatprep.subr.mxu0 0.0
        %1059 = vmatpush2.xpose.msra.mxu0 0.0
        %1060 = vmatprep.subr.mxu0 0.0
        %1061 = vmatpush2.xpose.msra.mxu0 0.0
        %1062 = vmatprep.subr.mxu0 0.0
        %1063 = vmatpush2.xpose.msra.mxu0 0.0
        %1064 = vmatprep.subr.mxu0 0.0
        %1065 = vmatpush2.xpose.msra.mxu0 0.0
        %1066 = vmatprep.subr.mxu0 0.0
        %1067 = vmatpush2.xpose.msra.mxu0 0.0
        %1068 = vmatprep.subr.mxu0 0.0
        %1069 = vmatpush2.xpose.msra.mxu0 0.0
        %1070 = vmatprep.subr.mxu0 0.0
        %1071 = vmatpush2.xpose.msra.mxu0 0.0
        %1072 = vmatprep.subr.mxu0 0.0
        %1073 = vmatpush2.xpose.msra.mxu0 0.0
        %1074 = vmatprep.subr.mxu0 0.0
        %1075 = vmatpush2.xpose.msra.mxu0 0.0
        %1076 = vmatprep.subr.mxu0 0.0
        %1077 = vmatpush2.xpose.msra.mxu0 0.0
        %1078 = vmatprep.subr.mxu0 0.0
        %1079 = vmatpush2.xpose.msra.mxu0 0.0
        %1080 = vmatprep.subr.mxu0 0.0
        %1081 = vmatpush2.xpose.msra.mxu0 0.0
        %1082 = vmatprep.subr.mxu0 0.0
        %1083 = vmatpush2.xpose.msra.mxu0 0.0
        %1084 = vmatprep.mubr.f32.mxu0 0.0
        %1085 = vmatmul.mubr.f32.gmra.mxu0 %v1015
        %v1086 = vpop.f32.mrf.mxu0
        %v1087 = vadd.f32 %v785, %v1086
        %v1088 = vpop.f32.mrf.mxu0
        %1089 = vdwg.mxu0
        %vm1090 = vcmask 64512
        %v1091 = vsel %vm1090, %v859, -inf
        %1092 = vmax.xlane.f32.xlu0 %v1091
        %v1093 = vpop.xlane.xlu0 %1092
        %v1094 = vsel %vm1090, %v935, -inf
        %1095 = vmax.xlane.f32.xlu0 %v1094
        %v1096 = vpop.xlane.xlu0 %1095
        %v1097 = vsel %vm1090, %v1011, -inf
        %1098 = vmax.xlane.f32.xlu0 %v1097
        %v1099 = vpop.xlane.xlu0 %1098
        %v1100 = vsel %vm1090, %v1087, -inf
        %1101 = vmax.xlane.f32.xlu0 %v1100
        %v1102 = vpop.xlane.xlu0 %1101
        %v1103 = vsub.f32 %v859, %v1093
        %v1104 = vsub.f32 %v935, %v1096
        %v1105 = vsub.f32 %v1011, %v1099
        %v1106 = vsub.f32 %v1087, %v1102
        %v1107 = vmul.f32 %v1103, 1.442695
        %v1108 = vpow.pop %v1107
        %v1109 = vmul.f32 %v1104, 1.442695
        %v1110 = vpow.pop %v1109
        %v1111 = vmul.f32 %v1105, 1.442695
        %v1112 = vpow.pop %v1111
        %v1113 = vmul.f32 %v1106, 1.442695
        %v1114 = vpow.pop %v1113
        %v1115 = vsel %vm1090, %v1108, 0.0
        %1116 = vadd.xlane.f32.xlu0 %v1115
        %v1117 = vpop.xlane.xlu0 %1116
        %v1118 = vsel %vm1090, %v1110, 0.0
        %1119 = vadd.xlane.f32.xlu0 %v1118
        %v1120 = vpop.xlane.xlu0 %1119
        %v1121 = vsel %vm1090, %v1112, 0.0
        %1122 = vadd.xlane.f32.xlu0 %v1121
        %v1123 = vpop.xlane.xlu0 %1122
        %v1124 = vsel %vm1090, %v1114, 0.0
        %1125 = vadd.xlane.f32.xlu0 %v1124
        %v1126 = vpop.xlane.xlu0 %1125
        %v1127 = vrcp.pop %v1117
        %v1128 = vrcp.pop %v1120
        %v1129 = vrcp.pop %v1123
        %v1130 = vrcp.pop %v1126
        %v1131 = vmul.f32 %v1108, %v1127
        %v1132 = vmul.f32 %v1110, %v1128
        %v1133 = vmul.f32 %v1112, %v1129
        %v1134 = vmul.f32 %v1114, %v1130
        %v1136 = vsel %vm1090, %v1131, 0
        %1138 = vmatprep.subr.mxu0 0.0
        %1139 = vmatpush1.msra.mxu0 0.0
        %1140 = vmatprep.subr.mxu0 0.0
        %1141 = vmatpush1.msra.mxu0 0.0
        %1142 = vmatprep.subr.mxu0 0.0
        %1143 = vmatpush1.msra.mxu0 0.0
        %1144 = vmatprep.subr.mxu0 0.0
        %1145 = vmatpush1.msra.mxu0 0.0
        %1146 = vmatprep.subr.mxu0 0.0
        %1147 = vmatpush1.msra.mxu0 0.0
        %1148 = vmatprep.subr.mxu0 0.0
        %1149 = vmatpush1.msra.mxu0 0.0
        %1150 = vmatprep.subr.mxu0 0.0
        %1151 = vmatpush1.msra.mxu0 0.0
        %1152 = vmatprep.subr.mxu0 0.0
        %1153 = vmatpush1.msra.mxu0 0.0
        %1154 = vmatprep.subr.mxu0 0.0
        %1155 = vmatpush1.msra.mxu0 0.0
        %1156 = vmatprep.subr.mxu0 0.0
        %1157 = vmatpush1.msra.mxu0 0.0
        %1158 = vmatprep.subr.mxu0 0.0
        %1159 = vmatpush1.msra.mxu0 0.0
        %1160 = vmatprep.subr.mxu0 0.0
        %1161 = vmatpush1.msra.mxu0 0.0
        %1162 = vmatprep.subr.mxu0 0.0
        %1163 = vmatpush1.msra.mxu0 0.0
        %1164 = vmatprep.subr.mxu0 0.0
        %1165 = vmatpush1.msra.mxu0 0.0
        %1166 = vmatprep.subr.mxu0 0.0
        %1167 = vmatpush1.msra.mxu0 0.0
        %1168 = vmatprep.subr.mxu0 0.0
        %1169 = vmatpush1.msra.mxu0 %v767
        %1170 = vmatprep.subr.mxu0 0.0
        %1171 = vmatpush2.msra.mxu0 0.0
        %1172 = vmatprep.subr.mxu0 0.0
        %1173 = vmatpush2.msra.mxu0 0.0
        %1174 = vmatprep.subr.mxu0 0.0
        %1175 = vmatpush2.msra.mxu0 0.0
        %1176 = vmatprep.subr.mxu0 0.0
        %1177 = vmatpush2.msra.mxu0 0.0
        %1178 = vmatprep.subr.mxu0 0.0
        %1179 = vmatpush2.msra.mxu0 0.0
        %1180 = vmatprep.subr.mxu0 0.0
        %1181 = vmatpush2.msra.mxu0 0.0
        %1182 = vmatprep.subr.mxu0 0.0
        %1183 = vmatpush2.msra.mxu0 0.0
        %1184 = vmatprep.subr.mxu0 0.0
        %1185 = vmatpush2.msra.mxu0 0.0
        %1186 = vmatprep.subr.mxu0 0.0
        %1187 = vmatpush2.msra.mxu0 0.0
        %1188 = vmatprep.subr.mxu0 0.0
        %1189 = vmatpush2.msra.mxu0 0.0
        %1190 = vmatprep.subr.mxu0 0.0
        %1191 = vmatpush2.msra.mxu0 0.0
        %1192 = vmatprep.subr.mxu0 0.0
        %1193 = vmatpush2.msra.mxu0 0.0
        %1194 = vmatprep.subr.mxu0 0.0
        %1195 = vmatpush2.msra.mxu0 0.0
        %1196 = vmatprep.subr.mxu0 0.0
        %1197 = vmatpush2.msra.mxu0 0.0
        %1198 = vmatprep.subr.mxu0 0.0
        %1199 = vmatpush2.msra.mxu0 0.0
        %1200 = vmatprep.subr.mxu0 0.0
        %1201 = vmatpush2.msra.mxu0 0.0
        %1202 = vmatprep.mubr.f32.mxu0 0.0
        %1203 = vmatmul.mubr.f32.gmra.mxu0 %v1136
        %v1204 = vpop.f32.mrf.mxu0
        %v1205 = vadd.f32 0.0, %v1204
        %v1206 = vpop.f32.mrf.mxu0
        %1207 = vdwg.mxu0
        %v1209 = vsel %vm1090, %v1132, 0
        %1211 = vmatprep.subr.mxu0 0.0
        %1212 = vmatpush1.msra.mxu0 0.0
        %1213 = vmatprep.subr.mxu0 0.0
        %1214 = vmatpush1.msra.mxu0 0.0
        %1215 = vmatprep.subr.mxu0 0.0
        %1216 = vmatpush1.msra.mxu0 0.0
        %1217 = vmatprep.subr.mxu0 0.0
        %1218 = vmatpush1.msra.mxu0 0.0
        %1219 = vmatprep.subr.mxu0 0.0
        %1220 = vmatpush1.msra.mxu0 0.0
        %1221 = vmatprep.subr.mxu0 0.0
        %1222 = vmatpush1.msra.mxu0 0.0
        %1223 = vmatprep.subr.mxu0 0.0
        %1224 = vmatpush1.msra.mxu0 0.0
        %1225 = vmatprep.subr.mxu0 0.0
        %1226 = vmatpush1.msra.mxu0 0.0
        %1227 = vmatprep.subr.mxu0 0.0
        %1228 = vmatpush1.msra.mxu0 0.0
        %1229 = vmatprep.subr.mxu0 0.0
        %1230 = vmatpush1.msra.mxu0 0.0
        %1231 = vmatprep.subr.mxu0 0.0
        %1232 = vmatpush1.msra.mxu0 0.0
        %1233 = vmatprep.subr.mxu0 0.0
        %1234 = vmatpush1.msra.mxu0 0.0
        %1235 = vmatprep.subr.mxu0 0.0
        %1236 = vmatpush1.msra.mxu0 0.0
        %1237 = vmatprep.subr.mxu0 0.0
        %1238 = vmatpush1.msra.mxu0 0.0
        %1239 = vmatprep.subr.mxu0 0.0
        %1240 = vmatpush1.msra.mxu0 0.0
        %1241 = vmatprep.subr.mxu0 0.0
        %1242 = vmatpush1.msra.mxu0 %v772
        %1243 = vmatprep.subr.mxu0 0.0
        %1244 = vmatpush2.msra.mxu0 0.0
        %1245 = vmatprep.subr.mxu0 0.0
        %1246 = vmatpush2.msra.mxu0 0.0
        %1247 = vmatprep.subr.mxu0 0.0
        %1248 = vmatpush2.msra.mxu0 0.0
        %1249 = vmatprep.subr.mxu0 0.0
        %1250 = vmatpush2.msra.mxu0 0.0
        %1251 = vmatprep.subr.mxu0 0.0
        %1252 = vmatpush2.msra.mxu0 0.0
        %1253 = vmatprep.subr.mxu0 0.0
        %1254 = vmatpush2.msra.mxu0 0.0
        %1255 = vmatprep.subr.mxu0 0.0
        %1256 = vmatpush2.msra.mxu0 0.0
        %1257 = vmatprep.subr.mxu0 0.0
        %1258 = vmatpush2.msra.mxu0 0.0
        %1259 = vmatprep.subr.mxu0 0.0
        %1260 = vmatpush2.msra.mxu0 0.0
        %1261 = vmatprep.subr.mxu0 0.0
        %1262 = vmatpush2.msra.mxu0 0.0
        %1263 = vmatprep.subr.mxu0 0.0
        %1264 = vmatpush2.msra.mxu0 0.0
        %1265 = vmatprep.subr.mxu0 0.0
        %1266 = vmatpush2.msra.mxu0 0.0
        %1267 = vmatprep.subr.mxu0 0.0
        %1268 = vmatpush2.msra.mxu0 0.0
        %1269 = vmatprep.subr.mxu0 0.0
        %1270 = vmatpush2.msra.mxu0 0.0
        %1271 = vmatprep.subr.mxu0 0.0
        %1272 = vmatpush2.msra.mxu0 0.0
        %1273 = vmatprep.subr.mxu0 0.0
        %1274 = vmatpush2.msra.mxu0 0.0
        %1275 = vmatprep.mubr.f32.mxu0 0.0
        %1276 = vmatmul.mubr.f32.gmra.mxu0 %v1209
        %v1277 = vpop.f32.mrf.mxu0
        %v1278 = vadd.f32 0.0, %v1277
        %v1279 = vpop.f32.mrf.mxu0
        %1280 = vdwg.mxu0
        %v1282 = vsel %vm1090, %v1133, 0
        %1284 = vmatprep.subr.mxu0 0.0
        %1285 = vmatpush1.msra.mxu0 0.0
        %1286 = vmatprep.subr.mxu0 0.0
        %1287 = vmatpush1.msra.mxu0 0.0
        %1288 = vmatprep.subr.mxu0 0.0
        %1289 = vmatpush1.msra.mxu0 0.0
        %1290 = vmatprep.subr.mxu0 0.0
        %1291 = vmatpush1.msra.mxu0 0.0
        %1292 = vmatprep.subr.mxu0 0.0
        %1293 = vmatpush1.msra.mxu0 0.0
        %1294 = vmatprep.subr.mxu0 0.0
        %1295 = vmatpush1.msra.mxu0 0.0
        %1296 = vmatprep.subr.mxu0 0.0
        %1297 = vmatpush1.msra.mxu0 0.0
        %1298 = vmatprep.subr.mxu0 0.0
        %1299 = vmatpush1.msra.mxu0 0.0
        %1300 = vmatprep.subr.mxu0 0.0
        %1301 = vmatpush1.msra.mxu0 0.0
        %1302 = vmatprep.subr.mxu0 0.0
        %1303 = vmatpush1.msra.mxu0 0.0
        %1304 = vmatprep.subr.mxu0 0.0
        %1305 = vmatpush1.msra.mxu0 0.0
        %1306 = vmatprep.subr.mxu0 0.0
        %1307 = vmatpush1.msra.mxu0 0.0
        %1308 = vmatprep.subr.mxu0 0.0
        %1309 = vmatpush1.msra.mxu0 0.0
        %1310 = vmatprep.subr.mxu0 0.0
        %1311 = vmatpush1.msra.mxu0 0.0
        %1312 = vmatprep.subr.mxu0 0.0
        %1313 = vmatpush1.msra.mxu0 0.0
        %1314 = vmatprep.subr.mxu0 0.0
        %1315 = vmatpush1.msra.mxu0 %v777
        %1316 = vmatprep.subr.mxu0 0.0
        %1317 = vmatpush2.msra.mxu0 0.0
        %1318 = vmatprep.subr.mxu0 0.0
        %1319 = vmatpush2.msra.mxu0 0.0
        %1320 = vmatprep.subr.mxu0 0.0
        %1321 = vmatpush2.msra.mxu0 0.0
        %1322 = vmatprep.subr.mxu0 0.0
        %1323 = vmatpush2.msra.mxu0 0.0
        %1324 = vmatprep.subr.mxu0 0.0
        %1325 = vmatpush2.msra.mxu0 0.0
        %1326 = vmatprep.subr.mxu0 0.0
        %1327 = vmatpush2.msra.mxu0 0.0
        %1328 = vmatprep.subr.mxu0 0.0
        %1329 = vmatpush2.msra.mxu0 0.0
        %1330 = vmatprep.subr.mxu0 0.0
        %1331 = vmatpush2.msra.mxu0 0.0
        %1332 = vmatprep.subr.mxu0 0.0
        %1333 = vmatpush2.msra.mxu0 0.0
        %1334 = vmatprep.subr.mxu0 0.0
        %1335 = vmatpush2.msra.mxu0 0.0
        %1336 = vmatprep.subr.mxu0 0.0
        %1337 = vmatpush2.msra.mxu0 0.0
        %1338 = vmatprep.subr.mxu0 0.0
        %1339 = vmatpush2.msra.mxu0 0.0
        %1340 = vmatprep.subr.mxu0 0.0
        %1341 = vmatpush2.msra.mxu0 0.0
        %1342 = vmatprep.subr.mxu0 0.0
        %1343 = vmatpush2.msra.mxu0 0.0
        %1344 = vmatprep.subr.mxu0 0.0
        %1345 = vmatpush2.msra.mxu0 0.0
        %1346 = vmatprep.subr.mxu0 0.0
        %1347 = vmatpush2.msra.mxu0 0.0
        %1348 = vmatprep.mubr.f32.mxu0 0.0
        %1349 = vmatmul.mubr.f32.gmra.mxu0 %v1282
        %v1350 = vpop.f32.mrf.mxu0
        %v1351 = vadd.f32 0.0, %v1350
        %v1352 = vpop.f32.mrf.mxu0
        %1353 = vdwg.mxu0
        %v1355 = vsel %vm1090, %v1134, 0
        %1357 = vmatprep.subr.mxu0 0.0
        %1358 = vmatpush1.msra.mxu0 0.0
        %1359 = vmatprep.subr.mxu0 0.0
        %1360 = vmatpush1.msra.mxu0 0.0
        %1361 = vmatprep.subr.mxu0 0.0
        %1362 = vmatpush1.msra.mxu0 0.0
        %1363 = vmatprep.subr.mxu0 0.0
        %1364 = vmatpush1.msra.mxu0 0.0
        %1365 = vmatprep.subr.mxu0 0.0
        %1366 = vmatpush1.msra.mxu0 0.0
        %1367 = vmatprep.subr.mxu0 0.0
        %1368 = vmatpush1.msra.mxu0 0.0
        %1369 = vmatprep.subr.mxu0 0.0
        %1370 = vmatpush1.msra.mxu0 0.0
        %1371 = vmatprep.subr.mxu0 0.0
        %1372 = vmatpush1.msra.mxu0 0.0
        %1373 = vmatprep.subr.mxu0 0.0
        %1374 = vmatpush1.msra.mxu0 0.0
        %1375 = vmatprep.subr.mxu0 0.0
        %1376 = vmatpush1.msra.mxu0 0.0
        %1377 = vmatprep.subr.mxu0 0.0
        %1378 = vmatpush1.msra.mxu0 0.0
        %1379 = vmatprep.subr.mxu0 0.0
        %1380 = vmatpush1.msra.mxu0 0.0
        %1381 = vmatprep.subr.mxu0 0.0
        %1382 = vmatpush1.msra.mxu0 0.0
        %1383 = vmatprep.subr.mxu0 0.0
        %1384 = vmatpush1.msra.mxu0 0.0
        %1385 = vmatprep.subr.mxu0 0.0
        %1386 = vmatpush1.msra.mxu0 0.0
        %1387 = vmatprep.subr.mxu0 0.0
        %1388 = vmatpush1.msra.mxu0 %v782
        %1389 = vmatprep.subr.mxu0 0.0
        %1390 = vmatpush2.msra.mxu0 0.0
        %1391 = vmatprep.subr.mxu0 0.0
        %1392 = vmatpush2.msra.mxu0 0.0
        %1393 = vmatprep.subr.mxu0 0.0
        %1394 = vmatpush2.msra.mxu0 0.0
        %1395 = vmatprep.subr.mxu0 0.0
        %1396 = vmatpush2.msra.mxu0 0.0
        %1397 = vmatprep.subr.mxu0 0.0
        %1398 = vmatpush2.msra.mxu0 0.0
        %1399 = vmatprep.subr.mxu0 0.0
        %1400 = vmatpush2.msra.mxu0 0.0
        %1401 = vmatprep.subr.mxu0 0.0
        %1402 = vmatpush2.msra.mxu0 0.0
        %1403 = vmatprep.subr.mxu0 0.0
        %1404 = vmatpush2.msra.mxu0 0.0
        %1405 = vmatprep.subr.mxu0 0.0
        %1406 = vmatpush2.msra.mxu0 0.0
        %1407 = vmatprep.subr.mxu0 0.0
        %1408 = vmatpush2.msra.mxu0 0.0
        %1409 = vmatprep.subr.mxu0 0.0
        %1410 = vmatpush2.msra.mxu0 0.0
        %1411 = vmatprep.subr.mxu0 0.0
        %1412 = vmatpush2.msra.mxu0 0.0
        %1413 = vmatprep.subr.mxu0 0.0
        %1414 = vmatpush2.msra.mxu0 0.0
        %1415 = vmatprep.subr.mxu0 0.0
        %1416 = vmatpush2.msra.mxu0 0.0
        %1417 = vmatprep.subr.mxu0 0.0
        %1418 = vmatpush2.msra.mxu0 0.0
        %1419 = vmatprep.subr.mxu0 0.0
        %1420 = vmatpush2.msra.mxu0 0.0
        %1421 = vmatprep.mubr.f32.mxu0 0.0
        %1422 = vmatmul.mubr.f32.gmra.mxu0 %v1355
        %v1423 = vpop.f32.mrf.mxu0
        %v1424 = vadd.f32 0.0, %v1423
        %v1425 = vpop.f32.mrf.mxu0
        %1426 = vdwg.mxu0
        %v1427 = vld [vmem:[#allocation11] sm:$0xff]
        %v1428 = vld [vmem:[#allocation11 + $0x8] sm:$0xff]
        %v1429 = vld [vmem:[#allocation11 + $0x10] sm:$0xff]
        %v1430 = vld [vmem:[#allocation11 + $0x18] sm:$0xff]
        %s1431 = scalar_lea.vmem [#allocation7], 32
        %v1432 = vld [vmem:[%s1431] sm:$0xff]
        %v1433 = vld [vmem:[%s1431 + $0x8] sm:$0xff]
        %v1434 = vld [vmem:[%s1431 + $0x10] sm:$0xff]
        %v1435 = vld [vmem:[%s1431 + $0x18] sm:$0xff]
        %1436 = vmatprep.subr.mxu0 0.0
        %1437 = vmatpush1.msra.mxu0 0.0
        %1438 = vmatprep.subr.mxu0 0.0
        %1439 = vmatpush1.msra.mxu0 0.0
        %1440 = vmatprep.subr.mxu0 0.0
        %1441 = vmatpush1.msra.mxu0 0.0
        %1442 = vmatprep.subr.mxu0 0.0
        %1443 = vmatpush1.msra.mxu0 0.0
        %1444 = vmatprep.subr.mxu0 0.0
        %1445 = vmatpush1.msra.mxu0 0.0
        %1446 = vmatprep.subr.mxu0 0.0
        %1447 = vmatpush1.msra.mxu0 0.0
        %1448 = vmatprep.subr.mxu0 0.0
        %1449 = vmatpush1.msra.mxu0 0.0
        %1450 = vmatprep.subr.mxu0 0.0
        %1451 = vmatpush1.msra.mxu0 0.0
        %1452 = vmatprep.subr.mxu0 0.0
        %1453 = vmatpush1.msra.mxu0 0.0
        %1454 = vmatprep.subr.mxu0 0.0
        %1455 = vmatpush1.msra.mxu0 0.0
        %1456 = vmatprep.subr.mxu0 0.0
        %1457 = vmatpush1.msra.mxu0 0.0
        %1458 = vmatprep.subr.mxu0 0.0
        %1459 = vmatpush1.msra.mxu0 0.0
        %1460 = vmatprep.subr.mxu0 0.0
        %1461 = vmatpush1.msra.mxu0 %v1435
        %1462 = vmatprep.subr.mxu0 0.0
        %1463 = vmatpush1.msra.mxu0 %v1434
        %1464 = vmatprep.subr.mxu0 0.0
        %1465 = vmatpush1.msra.mxu0 %v1433
        %1466 = vmatprep.subr.mxu0 0.0
        %1467 = vmatpush1.msra.mxu0 %v1432
        %1468 = vmatprep.subr.mxu0 0.0
        %1469 = vmatpush2.msra.mxu0 0.0
        %1470 = vmatprep.subr.mxu0 0.0
        %1471 = vmatpush2.msra.mxu0 0.0
        %1472 = vmatprep.subr.mxu0 0.0
        %1473 = vmatpush2.msra.mxu0 0.0
        %1474 = vmatprep.subr.mxu0 0.0
        %1475 = vmatpush2.msra.mxu0 0.0
        %1476 = vmatprep.subr.mxu0 0.0
        %1477 = vmatpush2.msra.mxu0 0.0
        %1478 = vmatprep.subr.mxu0 0.0
        %1479 = vmatpush2.msra.mxu0 0.0
        %1480 = vmatprep.subr.mxu0 0.0
        %1481 = vmatpush2.msra.mxu0 0.0
        %1482 = vmatprep.subr.mxu0 0.0
        %1483 = vmatpush2.msra.mxu0 0.0
        %1484 = vmatprep.subr.mxu0 0.0
        %1485 = vmatpush2.msra.mxu0 0.0
        %1486 = vmatprep.subr.mxu0 0.0
        %1487 = vmatpush2.msra.mxu0 0.0
        %1488 = vmatprep.subr.mxu0 0.0
        %1489 = vmatpush2.msra.mxu0 0.0
        %1490 = vmatprep.subr.mxu0 0.0
        %1491 = vmatpush2.msra.mxu0 0.0
        %1492 = vmatprep.subr.mxu0 0.0
        %1493 = vmatpush2.msra.mxu0 0.0
        %1494 = vmatprep.subr.mxu0 0.0
        %1495 = vmatpush2.msra.mxu0 0.0
        %1496 = vmatprep.subr.mxu0 0.0
        %1497 = vmatpush2.msra.mxu0 0.0
        %1498 = vmatprep.subr.mxu0 0.0
        %1499 = vmatpush2.msra.mxu0 0.0
        %1500 = vmatprep.mubr.f32.mxu0 0.0
        %1501 = vmatmul.mubr.f32.gmra.mxu0 %v511
        %v1502 = vpop.f32.mrf.mxu0
        %v1503 = vadd.f32 0.0, %v1502
        %v1504 = vpop.f32.mrf.mxu0
        %1505 = vmatprep.mubr.f32.mxu0 0.0
        %1506 = vmatmul.mubr.f32.gmra.mxu0 %v514
        %v1507 = vpop.f32.mrf.mxu0
        %v1508 = vadd.f32 0.0, %v1507
        %v1509 = vpop.f32.mrf.mxu0
        %1510 = vmatprep.mubr.f32.mxu0 0.0
        %1511 = vmatmul.mubr.f32.gmra.mxu0 %v517
        %v1512 = vpop.f32.mrf.mxu0
        %v1513 = vadd.f32 0.0, %v1512
        %v1514 = vpop.f32.mrf.mxu0
        %1515 = vmatprep.mubr.f32.mxu0 0.0
        %1516 = vmatmul.mubr.f32.gmra.mxu0 %v520
        %v1517 = vpop.f32.mrf.mxu0
        %v1518 = vadd.f32 0.0, %v1517
        %v1519 = vpop.f32.mrf.mxu0
        %1520 = vdwg.mxu0
        %s1521 = scalar_lea.vmem [#allocation8], 32
        %v1522 = vld [vmem:[%s1521] sm:$0xff]
        %v1523 = vld [vmem:[%s1521 + $0x8] sm:$0xff]
        %v1524 = vld [vmem:[%s1521 + $0x10] sm:$0xff]
        %v1525 = vld [vmem:[%s1521 + $0x18] sm:$0xff]
        %1526 = vmatprep.subr.mxu0 0.0
        %1527 = vmatpush1.msra.mxu0 0.0
        %1528 = vmatprep.subr.mxu0 0.0
        %1529 = vmatpush1.msra.mxu0 0.0
        %1530 = vmatprep.subr.mxu0 0.0
        %1531 = vmatpush1.msra.mxu0 0.0
        %1532 = vmatprep.subr.mxu0 0.0
        %1533 = vmatpush1.msra.mxu0 0.0
        %1534 = vmatprep.subr.mxu0 0.0
        %1535 = vmatpush1.msra.mxu0 0.0
        %1536 = vmatprep.subr.mxu0 0.0
        %1537 = vmatpush1.msra.mxu0 0.0
        %1538 = vmatprep.subr.mxu0 0.0
        %1539 = vmatpush1.msra.mxu0 0.0
        %1540 = vmatprep.subr.mxu0 0.0
        %1541 = vmatpush1.msra.mxu0 0.0
        %1542 = vmatprep.subr.mxu0 0.0
        %1543 = vmatpush1.msra.mxu0 0.0
        %1544 = vmatprep.subr.mxu0 0.0
        %1545 = vmatpush1.msra.mxu0 0.0
        %1546 = vmatprep.subr.mxu0 0.0
        %1547 = vmatpush1.msra.mxu0 0.0
        %1548 = vmatprep.subr.mxu0 0.0
        %1549 = vmatpush1.msra.mxu0 0.0
        %1550 = vmatprep.subr.mxu0 0.0
        %1551 = vmatpush1.msra.mxu0 %v1525
        %1552 = vmatprep.subr.mxu0 0.0
        %1553 = vmatpush1.msra.mxu0 %v1524
        %1554 = vmatprep.subr.mxu0 0.0
        %1555 = vmatpush1.msra.mxu0 %v1523
        %1556 = vmatprep.subr.mxu0 0.0
        %1557 = vmatpush1.msra.mxu0 %v1522
        %1558 = vmatprep.subr.mxu0 0.0
        %1559 = vmatpush2.msra.mxu0 0.0
        %1560 = vmatprep.subr.mxu0 0.0
        %1561 = vmatpush2.msra.mxu0 0.0
        %1562 = vmatprep.subr.mxu0 0.0
        %1563 = vmatpush2.msra.mxu0 0.0
        %1564 = vmatprep.subr.mxu0 0.0
        %1565 = vmatpush2.msra.mxu0 0.0
        %1566 = vmatprep.subr.mxu0 0.0
        %1567 = vmatpush2.msra.mxu0 0.0
        %1568 = vmatprep.subr.mxu0 0.0
        %1569 = vmatpush2.msra.mxu0 0.0
        %1570 = vmatprep.subr.mxu0 0.0
        %1571 = vmatpush2.msra.mxu0 0.0
        %1572 = vmatprep.subr.mxu0 0.0
        %1573 = vmatpush2.msra.mxu0 0.0
        %1574 = vmatprep.subr.mxu0 0.0
        %1575 = vmatpush2.msra.mxu0 0.0
        %1576 = vmatprep.subr.mxu0 0.0
        %1577 = vmatpush2.msra.mxu0 0.0
        %1578 = vmatprep.subr.mxu0 0.0
        %1579 = vmatpush2.msra.mxu0 0.0
        %1580 = vmatprep.subr.mxu0 0.0
        %1581 = vmatpush2.msra.mxu0 0.0
        %1582 = vmatprep.subr.mxu0 0.0
        %1583 = vmatpush2.msra.mxu0 0.0
        %1584 = vmatprep.subr.mxu0 0.0
        %1585 = vmatpush2.msra.mxu0 0.0
        %1586 = vmatprep.subr.mxu0 0.0
        %1587 = vmatpush2.msra.mxu0 0.0
        %1588 = vmatprep.subr.mxu0 0.0
        %1589 = vmatpush2.msra.mxu0 0.0
        %1590 = vmatprep.mubr.f32.mxu0 0.0
        %1591 = vmatmul.mubr.f32.gmra.mxu0 %v511
        %v1592 = vpop.f32.mrf.mxu0
        %v1593 = vadd.f32 0.0, %v1592
        %v1594 = vpop.f32.mrf.mxu0
        %1595 = vmatprep.mubr.f32.mxu0 0.0
        %1596 = vmatmul.mubr.f32.gmra.mxu0 %v514
        %v1597 = vpop.f32.mrf.mxu0
        %v1598 = vadd.f32 0.0, %v1597
        %v1599 = vpop.f32.mrf.mxu0
        %1600 = vmatprep.mubr.f32.mxu0 0.0
        %1601 = vmatmul.mubr.f32.gmra.mxu0 %v517
        %v1602 = vpop.f32.mrf.mxu0
        %v1603 = vadd.f32 0.0, %v1602
        %v1604 = vpop.f32.mrf.mxu0
        %1605 = vmatprep.mubr.f32.mxu0 0.0
        %1606 = vmatmul.mubr.f32.gmra.mxu0 %v520
        %v1607 = vpop.f32.mrf.mxu0
        %v1608 = vadd.f32 0.0, %v1607
        %v1609 = vpop.f32.mrf.mxu0
        %1610 = vdwg.mxu0
        %s1611 = scalar_lea.vmem [#allocation10], 32
        %v1612 = vld [vmem:[%s1611] sm:$0xff]
        %v1613 = vld [vmem:[%s1611 + $0x8] sm:$0xff]
        %v1614 = vld [vmem:[%s1611 + $0x10] sm:$0xff]
        %v1615 = vld [vmem:[%s1611 + $0x18] sm:$0xff]
        %1616 = vmatprep.subr.mxu0 0.0
        %1617 = vmatpush1.msra.mxu0 0.0
        %1618 = vmatprep.subr.mxu0 0.0
        %1619 = vmatpush1.msra.mxu0 0.0
        %1620 = vmatprep.subr.mxu0 0.0
        %1621 = vmatpush1.msra.mxu0 0.0
        %1622 = vmatprep.subr.mxu0 0.0
        %1623 = vmatpush1.msra.mxu0 0.0
        %1624 = vmatprep.subr.mxu0 0.0
        %1625 = vmatpush1.msra.mxu0 0.0
        %1626 = vmatprep.subr.mxu0 0.0
        %1627 = vmatpush1.msra.mxu0 0.0
        %1628 = vmatprep.subr.mxu0 0.0
        %1629 = vmatpush1.msra.mxu0 0.0
        %1630 = vmatprep.subr.mxu0 0.0
        %1631 = vmatpush1.msra.mxu0 0.0
        %1632 = vmatprep.subr.mxu0 0.0
        %1633 = vmatpush1.msra.mxu0 0.0
        %1634 = vmatprep.subr.mxu0 0.0
        %1635 = vmatpush1.msra.mxu0 0.0
        %1636 = vmatprep.subr.mxu0 0.0
        %1637 = vmatpush1.msra.mxu0 0.0
        %1638 = vmatprep.subr.mxu0 0.0
        %1639 = vmatpush1.msra.mxu0 0.0
        %1640 = vmatprep.subr.mxu0 0.0
        %1641 = vmatpush1.msra.mxu0 %v1615
        %1642 = vmatprep.subr.mxu0 0.0
        %1643 = vmatpush1.msra.mxu0 %v1614
        %1644 = vmatprep.subr.mxu0 0.0
        %1645 = vmatpush1.msra.mxu0 %v1613
        %1646 = vmatprep.subr.mxu0 0.0
        %1647 = vmatpush1.msra.mxu0 %v1612
        %1648 = vmatprep.subr.mxu0 0.0
        %1649 = vmatpush2.msra.mxu0 0.0
        %1650 = vmatprep.subr.mxu0 0.0
        %1651 = vmatpush2.msra.mxu0 0.0
        %1652 = vmatprep.subr.mxu0 0.0
        %1653 = vmatpush2.msra.mxu0 0.0
        %1654 = vmatprep.subr.mxu0 0.0
        %1655 = vmatpush2.msra.mxu0 0.0
        %1656 = vmatprep.subr.mxu0 0.0
        %1657 = vmatpush2.msra.mxu0 0.0
        %1658 = vmatprep.subr.mxu0 0.0
        %1659 = vmatpush2.msra.mxu0 0.0
        %1660 = vmatprep.subr.mxu0 0.0
        %1661 = vmatpush2.msra.mxu0 0.0
        %1662 = vmatprep.subr.mxu0 0.0
        %1663 = vmatpush2.msra.mxu0 0.0
        %1664 = vmatprep.subr.mxu0 0.0
        %1665 = vmatpush2.msra.mxu0 0.0
        %1666 = vmatprep.subr.mxu0 0.0
        %1667 = vmatpush2.msra.mxu0 0.0
        %1668 = vmatprep.subr.mxu0 0.0
        %1669 = vmatpush2.msra.mxu0 0.0
        %1670 = vmatprep.subr.mxu0 0.0
        %1671 = vmatpush2.msra.mxu0 0.0
        %1672 = vmatprep.subr.mxu0 0.0
        %1673 = vmatpush2.msra.mxu0 0.0
        %1674 = vmatprep.subr.mxu0 0.0
        %1675 = vmatpush2.msra.mxu0 0.0
        %1676 = vmatprep.subr.mxu0 0.0
        %1677 = vmatpush2.msra.mxu0 0.0
        %1678 = vmatprep.subr.mxu0 0.0
        %1679 = vmatpush2.msra.mxu0 0.0
        %1680 = vmatprep.mubr.f32.mxu0 0.0
        %1681 = vmatmul.mubr.f32.gmra.mxu0 %v511
        %v1682 = vpop.f32.mrf.mxu0
        %v1683 = vadd.f32 0.0, %v1682
        %v1684 = vpop.f32.mrf.mxu0
        %1685 = vmatprep.mubr.f32.mxu0 0.0
        %1686 = vmatmul.mubr.f32.gmra.mxu0 %v514
        %v1687 = vpop.f32.mrf.mxu0
        %v1688 = vadd.f32 0.0, %v1687
        %v1689 = vpop.f32.mrf.mxu0
        %1690 = vmatprep.mubr.f32.mxu0 0.0
        %1691 = vmatmul.mubr.f32.gmra.mxu0 %v517
        %v1692 = vpop.f32.mrf.mxu0
        %v1693 = vadd.f32 0.0, %v1692
        %v1694 = vpop.f32.mrf.mxu0
        %1695 = vmatprep.mubr.f32.mxu0 0.0
        %1696 = vmatmul.mubr.f32.gmra.mxu0 %v520
        %v1697 = vpop.f32.mrf.mxu0
        %v1698 = vadd.f32 0.0, %v1697
        %v1699 = vpop.f32.mrf.mxu0
        %1700 = vdwg.mxu0
        %s1701 = scalar_lea.vmem [#allocation5], 8
        %v1702 = vld [vmem:[%s1701] sm:$0xff]
        %v1704 = vsel %vm432, %v1503, 0
        %v1707 = vsel %vm432, %v1593, 0
        %1709 = vmatprep.subr.mxu0 0.0
        %1710 = vmatpush1.xpose.msra.mxu0 0.0
        %1711 = vmatprep.subr.mxu0 0.0
        %1712 = vmatpush1.xpose.msra.mxu0 0.0
        %1713 = vmatprep.subr.mxu0 0.0
        %1714 = vmatpush1.xpose.msra.mxu0 0.0
        %1715 = vmatprep.subr.mxu0 0.0
        %1716 = vmatpush1.xpose.msra.mxu0 0.0
        %1717 = vmatprep.subr.mxu0 0.0
        %1718 = vmatpush1.xpose.msra.mxu0 0.0
        %1719 = vmatprep.subr.mxu0 0.0
        %1720 = vmatpush1.xpose.msra.mxu0 0.0
        %1721 = vmatprep.subr.mxu0 0.0
        %1722 = vmatpush1.xpose.msra.mxu0 0.0
        %1723 = vmatprep.subr.mxu0 0.0
        %1724 = vmatpush1.xpose.msra.mxu0 0.0
        %1725 = vmatprep.subr.mxu0 0.0
        %1726 = vmatpush1.xpose.msra.mxu0 0.0
        %1727 = vmatprep.subr.mxu0 0.0
        %1728 = vmatpush1.xpose.msra.mxu0 0.0
        %1729 = vmatprep.subr.mxu0 0.0
        %1730 = vmatpush1.xpose.msra.mxu0 0.0
        %1731 = vmatprep.subr.mxu0 0.0
        %1732 = vmatpush1.xpose.msra.mxu0 0.0
        %1733 = vmatprep.subr.mxu0 0.0
        %1734 = vmatpush1.xpose.msra.mxu0 0.0
        %1735 = vmatprep.subr.mxu0 0.0
        %1736 = vmatpush1.xpose.msra.mxu0 0.0
        %1737 = vmatprep.subr.mxu0 0.0
        %1738 = vmatpush1.xpose.msra.mxu0 0.0
        %1739 = vmatprep.subr.mxu0 0.0
        %1740 = vmatpush1.xpose.msra.mxu0 %v1707
        %1741 = vmatprep.subr.mxu0 0.0
        %1742 = vmatpush2.xpose.msra.mxu0 0.0
        %1743 = vmatprep.subr.mxu0 0.0
        %1744 = vmatpush2.xpose.msra.mxu0 0.0
        %1745 = vmatprep.subr.mxu0 0.0
        %1746 = vmatpush2.xpose.msra.mxu0 0.0
        %1747 = vmatprep.subr.mxu0 0.0
        %1748 = vmatpush2.xpose.msra.mxu0 0.0
        %1749 = vmatprep.subr.mxu0 0.0
        %1750 = vmatpush2.xpose.msra.mxu0 0.0
        %1751 = vmatprep.subr.mxu0 0.0
        %1752 = vmatpush2.xpose.msra.mxu0 0.0
        %1753 = vmatprep.subr.mxu0 0.0
        %1754 = vmatpush2.xpose.msra.mxu0 0.0
        %1755 = vmatprep.subr.mxu0 0.0
        %1756 = vmatpush2.xpose.msra.mxu0 0.0
        %1757 = vmatprep.subr.mxu0 0.0
        %1758 = vmatpush2.xpose.msra.mxu0 0.0
        %1759 = vmatprep.subr.mxu0 0.0
        %1760 = vmatpush2.xpose.msra.mxu0 0.0
        %1761 = vmatprep.subr.mxu0 0.0
        %1762 = vmatpush2.xpose.msra.mxu0 0.0
        %1763 = vmatprep.subr.mxu0 0.0
        %1764 = vmatpush2.xpose.msra.mxu0 0.0
        %1765 = vmatprep.subr.mxu0 0.0
        %1766 = vmatpush2.xpose.msra.mxu0 0.0
        %1767 = vmatprep.subr.mxu0 0.0
        %1768 = vmatpush2.xpose.msra.mxu0 0.0
        %1769 = vmatprep.subr.mxu0 0.0
        %1770 = vmatpush2.xpose.msra.mxu0 0.0
        %1771 = vmatprep.subr.mxu0 0.0
        %1772 = vmatpush2.xpose.msra.mxu0 0.0
        %1773 = vmatprep.mubr.f32.mxu0 0.0
        %1774 = vmatmul.mubr.f32.gmra.mxu0 %v1704
        %v1775 = vpop.f32.mrf.mxu0
        %v1776 = vadd.f32 %v1702, %v1775
        %v1777 = vpop.f32.mrf.mxu0
        %1778 = vdwg.mxu0
        %v1780 = vsel %vm432, %v1508, 0
        %v1783 = vsel %vm432, %v1598, 0
        %1785 = vmatprep.subr.mxu0 0.0
        %1786 = vmatpush1.xpose.msra.mxu0 0.0
        %1787 = vmatprep.subr.mxu0 0.0
        %1788 = vmatpush1.xpose.msra.mxu0 0.0
        %1789 = vmatprep.subr.mxu0 0.0
        %1790 = vmatpush1.xpose.msra.mxu0 0.0
        %1791 = vmatprep.subr.mxu0 0.0
        %1792 = vmatpush1.xpose.msra.mxu0 0.0
        %1793 = vmatprep.subr.mxu0 0.0
        %1794 = vmatpush1.xpose.msra.mxu0 0.0
        %1795 = vmatprep.subr.mxu0 0.0
        %1796 = vmatpush1.xpose.msra.mxu0 0.0
        %1797 = vmatprep.subr.mxu0 0.0
        %1798 = vmatpush1.xpose.msra.mxu0 0.0
        %1799 = vmatprep.subr.mxu0 0.0
        %1800 = vmatpush1.xpose.msra.mxu0 0.0
        %1801 = vmatprep.subr.mxu0 0.0
        %1802 = vmatpush1.xpose.msra.mxu0 0.0
        %1803 = vmatprep.subr.mxu0 0.0
        %1804 = vmatpush1.xpose.msra.mxu0 0.0
        %1805 = vmatprep.subr.mxu0 0.0
        %1806 = vmatpush1.xpose.msra.mxu0 0.0
        %1807 = vmatprep.subr.mxu0 0.0
        %1808 = vmatpush1.xpose.msra.mxu0 0.0
        %1809 = vmatprep.subr.mxu0 0.0
        %1810 = vmatpush1.xpose.msra.mxu0 0.0
        %1811 = vmatprep.subr.mxu0 0.0
        %1812 = vmatpush1.xpose.msra.mxu0 0.0
        %1813 = vmatprep.subr.mxu0 0.0
        %1814 = vmatpush1.xpose.msra.mxu0 0.0
        %1815 = vmatprep.subr.mxu0 0.0
        %1816 = vmatpush1.xpose.msra.mxu0 %v1783
        %1817 = vmatprep.subr.mxu0 0.0
        %1818 = vmatpush2.xpose.msra.mxu0 0.0
        %1819 = vmatprep.subr.mxu0 0.0
        %1820 = vmatpush2.xpose.msra.mxu0 0.0
        %1821 = vmatprep.subr.mxu0 0.0
        %1822 = vmatpush2.xpose.msra.mxu0 0.0
        %1823 = vmatprep.subr.mxu0 0.0
        %1824 = vmatpush2.xpose.msra.mxu0 0.0
        %1825 = vmatprep.subr.mxu0 0.0
        %1826 = vmatpush2.xpose.msra.mxu0 0.0
        %1827 = vmatprep.subr.mxu0 0.0
        %1828 = vmatpush2.xpose.msra.mxu0 0.0
        %1829 = vmatprep.subr.mxu0 0.0
        %1830 = vmatpush2.xpose.msra.mxu0 0.0
        %1831 = vmatprep.subr.mxu0 0.0
        %1832 = vmatpush2.xpose.msra.mxu0 0.0
        %1833 = vmatprep.subr.mxu0 0.0
        %1834 = vmatpush2.xpose.msra.mxu0 0.0
        %1835 = vmatprep.subr.mxu0 0.0
        %1836 = vmatpush2.xpose.msra.mxu0 0.0
        %1837 = vmatprep.subr.mxu0 0.0
        %1838 = vmatpush2.xpose.msra.mxu0 0.0
        %1839 = vmatprep.subr.mxu0 0.0
        %1840 = vmatpush2.xpose.msra.mxu0 0.0
        %1841 = vmatprep.subr.mxu0 0.0
        %1842 = vmatpush2.xpose.msra.mxu0 0.0
        %1843 = vmatprep.subr.mxu0 0.0
        %1844 = vmatpush2.xpose.msra.mxu0 0.0
        %1845 = vmatprep.subr.mxu0 0.0
        %1846 = vmatpush2.xpose.msra.mxu0 0.0
        %1847 = vmatprep.subr.mxu0 0.0
        %1848 = vmatpush2.xpose.msra.mxu0 0.0
        %1849 = vmatprep.mubr.f32.mxu0 0.0
        %1850 = vmatmul.mubr.f32.gmra.mxu0 %v1780
        %v1851 = vpop.f32.mrf.mxu0
        %v1852 = vadd.f32 %v1702, %v1851
        %v1853 = vpop.f32.mrf.mxu0
        %1854 = vdwg.mxu0
        %v1856 = vsel %vm432, %v1513, 0
        %v1859 = vsel %vm432, %v1603, 0
        %1861 = vmatprep.subr.mxu0 0.0
        %1862 = vmatpush1.xpose.msra.mxu0 0.0
        %1863 = vmatprep.subr.mxu0 0.0
        %1864 = vmatpush1.xpose.msra.mxu0 0.0
        %1865 = vmatprep.subr.mxu0 0.0
        %1866 = vmatpush1.xpose.msra.mxu0 0.0
        %1867 = vmatprep.subr.mxu0 0.0
        %1868 = vmatpush1.xpose.msra.mxu0 0.0
        %1869 = vmatprep.subr.mxu0 0.0
        %1870 = vmatpush1.xpose.msra.mxu0 0.0
        %1871 = vmatprep.subr.mxu0 0.0
        %1872 = vmatpush1.xpose.msra.mxu0 0.0
        %1873 = vmatprep.subr.mxu0 0.0
        %1874 = vmatpush1.xpose.msra.mxu0 0.0
        %1875 = vmatprep.subr.mxu0 0.0
        %1876 = vmatpush1.xpose.msra.mxu0 0.0
        %1877 = vmatprep.subr.mxu0 0.0
        %1878 = vmatpush1.xpose.msra.mxu0 0.0
        %1879 = vmatprep.subr.mxu0 0.0
        %1880 = vmatpush1.xpose.msra.mxu0 0.0
        %1881 = vmatprep.subr.mxu0 0.0
        %1882 = vmatpush1.xpose.msra.mxu0 0.0
        %1883 = vmatprep.subr.mxu0 0.0
        %1884 = vmatpush1.xpose.msra.mxu0 0.0
        %1885 = vmatprep.subr.mxu0 0.0
        %1886 = vmatpush1.xpose.msra.mxu0 0.0
        %1887 = vmatprep.subr.mxu0 0.0
        %1888 = vmatpush1.xpose.msra.mxu0 0.0
        %1889 = vmatprep.subr.mxu0 0.0
        %1890 = vmatpush1.xpose.msra.mxu0 0.0
        %1891 = vmatprep.subr.mxu0 0.0
        %1892 = vmatpush1.xpose.msra.mxu0 %v1859
        %1893 = vmatprep.subr.mxu0 0.0
        %1894 = vmatpush2.xpose.msra.mxu0 0.0
        %1895 = vmatprep.subr.mxu0 0.0
        %1896 = vmatpush2.xpose.msra.mxu0 0.0
        %1897 = vmatprep.subr.mxu0 0.0
        %1898 = vmatpush2.xpose.msra.mxu0 0.0
        %1899 = vmatprep.subr.mxu0 0.0
        %1900 = vmatpush2.xpose.msra.mxu0 0.0
        %1901 = vmatprep.subr.mxu0 0.0
        %1902 = vmatpush2.xpose.msra.mxu0 0.0
        %1903 = vmatprep.subr.mxu0 0.0
        %1904 = vmatpush2.xpose.msra.mxu0 0.0
        %1905 = vmatprep.subr.mxu0 0.0
        %1906 = vmatpush2.xpose.msra.mxu0 0.0
        %1907 = vmatprep.subr.mxu0 0.0
        %1908 = vmatpush2.xpose.msra.mxu0 0.0
        %1909 = vmatprep.subr.mxu0 0.0
        %1910 = vmatpush2.xpose.msra.mxu0 0.0
        %1911 = vmatprep.subr.mxu0 0.0
        %1912 = vmatpush2.xpose.msra.mxu0 0.0
        %1913 = vmatprep.subr.mxu0 0.0
        %1914 = vmatpush2.xpose.msra.mxu0 0.0
        %1915 = vmatprep.subr.mxu0 0.0
        %1916 = vmatpush2.xpose.msra.mxu0 0.0
        %1917 = vmatprep.subr.mxu0 0.0
        %1918 = vmatpush2.xpose.msra.mxu0 0.0
        %1919 = vmatprep.subr.mxu0 0.0
        %1920 = vmatpush2.xpose.msra.mxu0 0.0
        %1921 = vmatprep.subr.mxu0 0.0
        %1922 = vmatpush2.xpose.msra.mxu0 0.0
        %1923 = vmatprep.subr.mxu0 0.0
        %1924 = vmatpush2.xpose.msra.mxu0 0.0
        %1925 = vmatprep.mubr.f32.mxu0 0.0
        %1926 = vmatmul.mubr.f32.gmra.mxu0 %v1856
        %v1927 = vpop.f32.mrf.mxu0
        %v1928 = vadd.f32 %v1702, %v1927
        %v1929 = vpop.f32.mrf.mxu0
        %1930 = vdwg.mxu0
        %v1932 = vsel %vm432, %v1518, 0
        %v1935 = vsel %vm432, %v1608, 0
        %1937 = vmatprep.subr.mxu0 0.0
        %1938 = vmatpush1.xpose.msra.mxu0 0.0
        %1939 = vmatprep.subr.mxu0 0.0
        %1940 = vmatpush1.xpose.msra.mxu0 0.0
        %1941 = vmatprep.subr.mxu0 0.0
        %1942 = vmatpush1.xpose.msra.mxu0 0.0
        %1943 = vmatprep.subr.mxu0 0.0
        %1944 = vmatpush1.xpose.msra.mxu0 0.0
        %1945 = vmatprep.subr.mxu0 0.0
        %1946 = vmatpush1.xpose.msra.mxu0 0.0
        %1947 = vmatprep.subr.mxu0 0.0
        %1948 = vmatpush1.xpose.msra.mxu0 0.0
        %1949 = vmatprep.subr.mxu0 0.0
        %1950 = vmatpush1.xpose.msra.mxu0 0.0
        %1951 = vmatprep.subr.mxu0 0.0
        %1952 = vmatpush1.xpose.msra.mxu0 0.0
        %1953 = vmatprep.subr.mxu0 0.0
        %1954 = vmatpush1.xpose.msra.mxu0 0.0
        %1955 = vmatprep.subr.mxu0 0.0
        %1956 = vmatpush1.xpose.msra.mxu0 0.0
        %1957 = vmatprep.subr.mxu0 0.0
        %1958 = vmatpush1.xpose.msra.mxu0 0.0
        %1959 = vmatprep.subr.mxu0 0.0
        %1960 = vmatpush1.xpose.msra.mxu0 0.0
        %1961 = vmatprep.subr.mxu0 0.0
        %1962 = vmatpush1.xpose.msra.mxu0 0.0
        %1963 = vmatprep.subr.mxu0 0.0
        %1964 = vmatpush1.xpose.msra.mxu0 0.0
        %1965 = vmatprep.subr.mxu0 0.0
        %1966 = vmatpush1.xpose.msra.mxu0 0.0
        %1967 = vmatprep.subr.mxu0 0.0
        %1968 = vmatpush1.xpose.msra.mxu0 %v1935
        %1969 = vmatprep.subr.mxu0 0.0
        %1970 = vmatpush2.xpose.msra.mxu0 0.0
        %1971 = vmatprep.subr.mxu0 0.0
        %1972 = vmatpush2.xpose.msra.mxu0 0.0
        %1973 = vmatprep.subr.mxu0 0.0
        %1974 = vmatpush2.xpose.msra.mxu0 0.0
        %1975 = vmatprep.subr.mxu0 0.0
        %1976 = vmatpush2.xpose.msra.mxu0 0.0
        %1977 = vmatprep.subr.mxu0 0.0
        %1978 = vmatpush2.xpose.msra.mxu0 0.0
        %1979 = vmatprep.subr.mxu0 0.0
        %1980 = vmatpush2.xpose.msra.mxu0 0.0
        %1981 = vmatprep.subr.mxu0 0.0
        %1982 = vmatpush2.xpose.msra.mxu0 0.0
        %1983 = vmatprep.subr.mxu0 0.0
        %1984 = vmatpush2.xpose.msra.mxu0 0.0
        %1985 = vmatprep.subr.mxu0 0.0
        %1986 = vmatpush2.xpose.msra.mxu0 0.0
        %1987 = vmatprep.subr.mxu0 0.0
        %1988 = vmatpush2.xpose.msra.mxu0 0.0
        %1989 = vmatprep.subr.mxu0 0.0
        %1990 = vmatpush2.xpose.msra.mxu0 0.0
        %1991 = vmatprep.subr.mxu0 0.0
        %1992 = vmatpush2.xpose.msra.mxu0 0.0
        %1993 = vmatprep.subr.mxu0 0.0
        %1994 = vmatpush2.xpose.msra.mxu0 0.0
        %1995 = vmatprep.subr.mxu0 0.0
        %1996 = vmatpush2.xpose.msra.mxu0 0.0
        %1997 = vmatprep.subr.mxu0 0.0
        %1998 = vmatpush2.xpose.msra.mxu0 0.0
        %1999 = vmatprep.subr.mxu0 0.0
        %2000 = vmatpush2.xpose.msra.mxu0 0.0
        %2001 = vmatprep.mubr.f32.mxu0 0.0
        %2002 = vmatmul.mubr.f32.gmra.mxu0 %v1932
        %v2003 = vpop.f32.mrf.mxu0
        %v2004 = vadd.f32 %v1702, %v2003
        %v2005 = vpop.f32.mrf.mxu0
        %2006 = vdwg.mxu0
        %v2007 = vsel %vm1090, %v1776, -inf
        %2008 = vmax.xlane.f32.xlu0 %v2007
        %v2009 = vpop.xlane.xlu0 %2008
        %v2010 = vsel %vm1090, %v1852, -inf
        %2011 = vmax.xlane.f32.xlu0 %v2010
        %v2012 = vpop.xlane.xlu0 %2011
        %v2013 = vsel %vm1090, %v1928, -inf
        %2014 = vmax.xlane.f32.xlu0 %v2013
        %v2015 = vpop.xlane.xlu0 %2014
        %v2016 = vsel %vm1090, %v2004, -inf
        %2017 = vmax.xlane.f32.xlu0 %v2016
        %v2018 = vpop.xlane.xlu0 %2017
        %v2019 = vsub.f32 %v1776, %v2009
        %v2020 = vsub.f32 %v1852, %v2012
        %v2021 = vsub.f32 %v1928, %v2015
        %v2022 = vsub.f32 %v2004, %v2018
        %v2023 = vmul.f32 %v2019, 1.442695
        %v2024 = vpow.pop %v2023
        %v2025 = vmul.f32 %v2020, 1.442695
        %v2026 = vpow.pop %v2025
        %v2027 = vmul.f32 %v2021, 1.442695
        %v2028 = vpow.pop %v2027
        %v2029 = vmul.f32 %v2022, 1.442695
        %v2030 = vpow.pop %v2029
        %v2031 = vsel %vm1090, %v2024, 0.0
        %2032 = vadd.xlane.f32.xlu0 %v2031
        %v2033 = vpop.xlane.xlu0 %2032
        %v2034 = vsel %vm1090, %v2026, 0.0
        %2035 = vadd.xlane.f32.xlu0 %v2034
        %v2036 = vpop.xlane.xlu0 %2035
        %v2037 = vsel %vm1090, %v2028, 0.0
        %2038 = vadd.xlane.f32.xlu0 %v2037
        %v2039 = vpop.xlane.xlu0 %2038
        %v2040 = vsel %vm1090, %v2030, 0.0
        %2041 = vadd.xlane.f32.xlu0 %v2040
        %v2042 = vpop.xlane.xlu0 %2041
        %v2043 = vrcp.pop %v2033
        %v2044 = vrcp.pop %v2036
        %v2045 = vrcp.pop %v2039
        %v2046 = vrcp.pop %v2042
        %v2047 = vmul.f32 %v2024, %v2043
        %v2048 = vmul.f32 %v2026, %v2044
        %v2049 = vmul.f32 %v2028, %v2045
        %v2050 = vmul.f32 %v2030, %v2046
        %v2052 = vsel %vm1090, %v2047, 0
        %2054 = vmatprep.subr.mxu0 0.0
        %2055 = vmatpush1.msra.mxu0 0.0
        %2056 = vmatprep.subr.mxu0 0.0
        %2057 = vmatpush1.msra.mxu0 0.0
        %2058 = vmatprep.subr.mxu0 0.0
        %2059 = vmatpush1.msra.mxu0 0.0
        %2060 = vmatprep.subr.mxu0 0.0
        %2061 = vmatpush1.msra.mxu0 0.0
        %2062 = vmatprep.subr.mxu0 0.0
        %2063 = vmatpush1.msra.mxu0 0.0
        %2064 = vmatprep.subr.mxu0 0.0
        %2065 = vmatpush1.msra.mxu0 0.0
        %2066 = vmatprep.subr.mxu0 0.0
        %2067 = vmatpush1.msra.mxu0 0.0
        %2068 = vmatprep.subr.mxu0 0.0
        %2069 = vmatpush1.msra.mxu0 0.0
        %2070 = vmatprep.subr.mxu0 0.0
        %2071 = vmatpush1.msra.mxu0 0.0
        %2072 = vmatprep.subr.mxu0 0.0
        %2073 = vmatpush1.msra.mxu0 0.0
        %2074 = vmatprep.subr.mxu0 0.0
        %2075 = vmatpush1.msra.mxu0 0.0
        %2076 = vmatprep.subr.mxu0 0.0
        %2077 = vmatpush1.msra.mxu0 0.0
        %2078 = vmatprep.subr.mxu0 0.0
        %2079 = vmatpush1.msra.mxu0 0.0
        %2080 = vmatprep.subr.mxu0 0.0
        %2081 = vmatpush1.msra.mxu0 0.0
        %2082 = vmatprep.subr.mxu0 0.0
        %2083 = vmatpush1.msra.mxu0 0.0
        %2084 = vmatprep.subr.mxu0 0.0
        %2085 = vmatpush1.msra.mxu0 %v1683
        %2086 = vmatprep.subr.mxu0 0.0
        %2087 = vmatpush2.msra.mxu0 0.0
        %2088 = vmatprep.subr.mxu0 0.0
        %2089 = vmatpush2.msra.mxu0 0.0
        %2090 = vmatprep.subr.mxu0 0.0
        %2091 = vmatpush2.msra.mxu0 0.0
        %2092 = vmatprep.subr.mxu0 0.0
        %2093 = vmatpush2.msra.mxu0 0.0
        %2094 = vmatprep.subr.mxu0 0.0
        %2095 = vmatpush2.msra.mxu0 0.0
        %2096 = vmatprep.subr.mxu0 0.0
        %2097 = vmatpush2.msra.mxu0 0.0
        %2098 = vmatprep.subr.mxu0 0.0
        %2099 = vmatpush2.msra.mxu0 0.0
        %2100 = vmatprep.subr.mxu0 0.0
        %2101 = vmatpush2.msra.mxu0 0.0
        %2102 = vmatprep.subr.mxu0 0.0
        %2103 = vmatpush2.msra.mxu0 0.0
        %2104 = vmatprep.subr.mxu0 0.0
        %2105 = vmatpush2.msra.mxu0 0.0
        %2106 = vmatprep.subr.mxu0 0.0
        %2107 = vmatpush2.msra.mxu0 0.0
        %2108 = vmatprep.subr.mxu0 0.0
        %2109 = vmatpush2.msra.mxu0 0.0
        %2110 = vmatprep.subr.mxu0 0.0
        %2111 = vmatpush2.msra.mxu0 0.0
        %2112 = vmatprep.subr.mxu0 0.0
        %2113 = vmatpush2.msra.mxu0 0.0
        %2114 = vmatprep.subr.mxu0 0.0
        %2115 = vmatpush2.msra.mxu0 0.0
        %2116 = vmatprep.subr.mxu0 0.0
        %2117 = vmatpush2.msra.mxu0 0.0
        %2118 = vmatprep.mubr.f32.mxu0 0.0
        %2119 = vmatmul.mubr.f32.gmra.mxu0 %v2052
        %v2120 = vpop.f32.mrf.mxu0
        %v2121 = vadd.f32 0.0, %v2120
        %v2122 = vpop.f32.mrf.mxu0
        %2123 = vdwg.mxu0
        %v2125 = vsel %vm1090, %v2048, 0
        %2127 = vmatprep.subr.mxu0 0.0
        %2128 = vmatpush1.msra.mxu0 0.0
        %2129 = vmatprep.subr.mxu0 0.0
        %2130 = vmatpush1.msra.mxu0 0.0
        %2131 = vmatprep.subr.mxu0 0.0
        %2132 = vmatpush1.msra.mxu0 0.0
        %2133 = vmatprep.subr.mxu0 0.0
        %2134 = vmatpush1.msra.mxu0 0.0
        %2135 = vmatprep.subr.mxu0 0.0
        %2136 = vmatpush1.msra.mxu0 0.0
        %2137 = vmatprep.subr.mxu0 0.0
        %2138 = vmatpush1.msra.mxu0 0.0
        %2139 = vmatprep.subr.mxu0 0.0
        %2140 = vmatpush1.msra.mxu0 0.0
        %2141 = vmatprep.subr.mxu0 0.0
        %2142 = vmatpush1.msra.mxu0 0.0
        %2143 = vmatprep.subr.mxu0 0.0
        %2144 = vmatpush1.msra.mxu0 0.0
        %2145 = vmatprep.subr.mxu0 0.0
        %2146 = vmatpush1.msra.mxu0 0.0
        %2147 = vmatprep.subr.mxu0 0.0
        %2148 = vmatpush1.msra.mxu0 0.0
        %2149 = vmatprep.subr.mxu0 0.0
        %2150 = vmatpush1.msra.mxu0 0.0
        %2151 = vmatprep.subr.mxu0 0.0
        %2152 = vmatpush1.msra.mxu0 0.0
        %2153 = vmatprep.subr.mxu0 0.0
        %2154 = vmatpush1.msra.mxu0 0.0
        %2155 = vmatprep.subr.mxu0 0.0
        %2156 = vmatpush1.msra.mxu0 0.0
        %2157 = vmatprep.subr.mxu0 0.0
        %2158 = vmatpush1.msra.mxu0 %v1688
        %2159 = vmatprep.subr.mxu0 0.0
        %2160 = vmatpush2.msra.mxu0 0.0
        %2161 = vmatprep.subr.mxu0 0.0
        %2162 = vmatpush2.msra.mxu0 0.0
        %2163 = vmatprep.subr.mxu0 0.0
        %2164 = vmatpush2.msra.mxu0 0.0
        %2165 = vmatprep.subr.mxu0 0.0
        %2166 = vmatpush2.msra.mxu0 0.0
        %2167 = vmatprep.subr.mxu0 0.0
        %2168 = vmatpush2.msra.mxu0 0.0
        %2169 = vmatprep.subr.mxu0 0.0
        %2170 = vmatpush2.msra.mxu0 0.0
        %2171 = vmatprep.subr.mxu0 0.0
        %2172 = vmatpush2.msra.mxu0 0.0
        %2173 = vmatprep.subr.mxu0 0.0
        %2174 = vmatpush2.msra.mxu0 0.0
        %2175 = vmatprep.subr.mxu0 0.0
        %2176 = vmatpush2.msra.mxu0 0.0
        %2177 = vmatprep.subr.mxu0 0.0
        %2178 = vmatpush2.msra.mxu0 0.0
        %2179 = vmatprep.subr.mxu0 0.0
        %2180 = vmatpush2.msra.mxu0 0.0
        %2181 = vmatprep.subr.mxu0 0.0
        %2182 = vmatpush2.msra.mxu0 0.0
        %2183 = vmatprep.subr.mxu0 0.0
        %2184 = vmatpush2.msra.mxu0 0.0
        %2185 = vmatprep.subr.mxu0 0.0
        %2186 = vmatpush2.msra.mxu0 0.0
        %2187 = vmatprep.subr.mxu0 0.0
        %2188 = vmatpush2.msra.mxu0 0.0
        %2189 = vmatprep.subr.mxu0 0.0
        %2190 = vmatpush2.msra.mxu0 0.0
        %2191 = vmatprep.mubr.f32.mxu0 0.0
        %2192 = vmatmul.mubr.f32.gmra.mxu0 %v2125
        %v2193 = vpop.f32.mrf.mxu0
        %v2194 = vadd.f32 0.0, %v2193
        %v2195 = vpop.f32.mrf.mxu0
        %2196 = vdwg.mxu0
        %v2198 = vsel %vm1090, %v2049, 0
        %2200 = vmatprep.subr.mxu0 0.0
        %2201 = vmatpush1.msra.mxu0 0.0
        %2202 = vmatprep.subr.mxu0 0.0
        %2203 = vmatpush1.msra.mxu0 0.0
        %2204 = vmatprep.subr.mxu0 0.0
        %2205 = vmatpush1.msra.mxu0 0.0
        %2206 = vmatprep.subr.mxu0 0.0
        %2207 = vmatpush1.msra.mxu0 0.0
        %2208 = vmatprep.subr.mxu0 0.0
        %2209 = vmatpush1.msra.mxu0 0.0
        %2210 = vmatprep.subr.mxu0 0.0
        %2211 = vmatpush1.msra.mxu0 0.0
        %2212 = vmatprep.subr.mxu0 0.0
        %2213 = vmatpush1.msra.mxu0 0.0
        %2214 = vmatprep.subr.mxu0 0.0
        %2215 = vmatpush1.msra.mxu0 0.0
        %2216 = vmatprep.subr.mxu0 0.0
        %2217 = vmatpush1.msra.mxu0 0.0
        %2218 = vmatprep.subr.mxu0 0.0
        %2219 = vmatpush1.msra.mxu0 0.0
        %2220 = vmatprep.subr.mxu0 0.0
        %2221 = vmatpush1.msra.mxu0 0.0
        %2222 = vmatprep.subr.mxu0 0.0
        %2223 = vmatpush1.msra.mxu0 0.0
        %2224 = vmatprep.subr.mxu0 0.0
        %2225 = vmatpush1.msra.mxu0 0.0
        %2226 = vmatprep.subr.mxu0 0.0
        %2227 = vmatpush1.msra.mxu0 0.0
        %2228 = vmatprep.subr.mxu0 0.0
        %2229 = vmatpush1.msra.mxu0 0.0
        %2230 = vmatprep.subr.mxu0 0.0
        %2231 = vmatpush1.msra.mxu0 %v1693
        %2232 = vmatprep.subr.mxu0 0.0
        %2233 = vmatpush2.msra.mxu0 0.0
        %2234 = vmatprep.subr.mxu0 0.0
        %2235 = vmatpush2.msra.mxu0 0.0
        %2236 = vmatprep.subr.mxu0 0.0
        %2237 = vmatpush2.msra.mxu0 0.0
        %2238 = vmatprep.subr.mxu0 0.0
        %2239 = vmatpush2.msra.mxu0 0.0
        %2240 = vmatprep.subr.mxu0 0.0
        %2241 = vmatpush2.msra.mxu0 0.0
        %2242 = vmatprep.subr.mxu0 0.0
        %2243 = vmatpush2.msra.mxu0 0.0
        %2244 = vmatprep.subr.mxu0 0.0
        %2245 = vmatpush2.msra.mxu0 0.0
        %2246 = vmatprep.subr.mxu0 0.0
        %2247 = vmatpush2.msra.mxu0 0.0
        %2248 = vmatprep.subr.mxu0 0.0
        %2249 = vmatpush2.msra.mxu0 0.0
        %2250 = vmatprep.subr.mxu0 0.0
        %2251 = vmatpush2.msra.mxu0 0.0
        %2252 = vmatprep.subr.mxu0 0.0
        %2253 = vmatpush2.msra.mxu0 0.0
        %2254 = vmatprep.subr.mxu0 0.0
        %2255 = vmatpush2.msra.mxu0 0.0
        %2256 = vmatprep.subr.mxu0 0.0
        %2257 = vmatpush2.msra.mxu0 0.0
        %2258 = vmatprep.subr.mxu0 0.0
        %2259 = vmatpush2.msra.mxu0 0.0
        %2260 = vmatprep.subr.mxu0 0.0
        %2261 = vmatpush2.msra.mxu0 0.0
        %2262 = vmatprep.subr.mxu0 0.0
        %2263 = vmatpush2.msra.mxu0 0.0
        %2264 = vmatprep.mubr.f32.mxu0 0.0
        %2265 = vmatmul.mubr.f32.gmra.mxu0 %v2198
        %v2266 = vpop.f32.mrf.mxu0
        %v2267 = vadd.f32 0.0, %v2266
        %v2268 = vpop.f32.mrf.mxu0
        %2269 = vdwg.mxu0
        %v2271 = vsel %vm1090, %v2050, 0
        %2273 = vmatprep.subr.mxu0 0.0
        %2274 = vmatpush1.msra.mxu0 0.0
        %2275 = vmatprep.subr.mxu0 0.0
        %2276 = vmatpush1.msra.mxu0 0.0
        %2277 = vmatprep.subr.mxu0 0.0
        %2278 = vmatpush1.msra.mxu0 0.0
        %2279 = vmatprep.subr.mxu0 0.0
        %2280 = vmatpush1.msra.mxu0 0.0
        %2281 = vmatprep.subr.mxu0 0.0
        %2282 = vmatpush1.msra.mxu0 0.0
        %2283 = vmatprep.subr.mxu0 0.0
        %2284 = vmatpush1.msra.mxu0 0.0
        %2285 = vmatprep.subr.mxu0 0.0
        %2286 = vmatpush1.msra.mxu0 0.0
        %2287 = vmatprep.subr.mxu0 0.0
        %2288 = vmatpush1.msra.mxu0 0.0
        %2289 = vmatprep.subr.mxu0 0.0
        %2290 = vmatpush1.msra.mxu0 0.0
        %2291 = vmatprep.subr.mxu0 0.0
        %2292 = vmatpush1.msra.mxu0 0.0
        %2293 = vmatprep.subr.mxu0 0.0
        %2294 = vmatpush1.msra.mxu0 0.0
        %2295 = vmatprep.subr.mxu0 0.0
        %2296 = vmatpush1.msra.mxu0 0.0
        %2297 = vmatprep.subr.mxu0 0.0
        %2298 = vmatpush1.msra.mxu0 0.0
        %2299 = vmatprep.subr.mxu0 0.0
        %2300 = vmatpush1.msra.mxu0 0.0
        %2301 = vmatprep.subr.mxu0 0.0
        %2302 = vmatpush1.msra.mxu0 0.0
        %2303 = vmatprep.subr.mxu0 0.0
        %2304 = vmatpush1.msra.mxu0 %v1698
        %2305 = vmatprep.subr.mxu0 0.0
        %2306 = vmatpush2.msra.mxu0 0.0
        %2307 = vmatprep.subr.mxu0 0.0
        %2308 = vmatpush2.msra.mxu0 0.0
        %2309 = vmatprep.subr.mxu0 0.0
        %2310 = vmatpush2.msra.mxu0 0.0
        %2311 = vmatprep.subr.mxu0 0.0
        %2312 = vmatpush2.msra.mxu0 0.0
        %2313 = vmatprep.subr.mxu0 0.0
        %2314 = vmatpush2.msra.mxu0 0.0
        %2315 = vmatprep.subr.mxu0 0.0
        %2316 = vmatpush2.msra.mxu0 0.0
        %2317 = vmatprep.subr.mxu0 0.0
        %2318 = vmatpush2.msra.mxu0 0.0
        %2319 = vmatprep.subr.mxu0 0.0
        %2320 = vmatpush2.msra.mxu0 0.0
        %2321 = vmatprep.subr.mxu0 0.0
        %2322 = vmatpush2.msra.mxu0 0.0
        %2323 = vmatprep.subr.mxu0 0.0
        %2324 = vmatpush2.msra.mxu0 0.0
        %2325 = vmatprep.subr.mxu0 0.0
        %2326 = vmatpush2.msra.mxu0 0.0
        %2327 = vmatprep.subr.mxu0 0.0
        %2328 = vmatpush2.msra.mxu0 0.0
        %2329 = vmatprep.subr.mxu0 0.0
        %2330 = vmatpush2.msra.mxu0 0.0
        %2331 = vmatprep.subr.mxu0 0.0
        %2332 = vmatpush2.msra.mxu0 0.0
        %2333 = vmatprep.subr.mxu0 0.0
        %2334 = vmatpush2.msra.mxu0 0.0
        %2335 = vmatprep.subr.mxu0 0.0
        %2336 = vmatpush2.msra.mxu0 0.0
        %2337 = vmatprep.mubr.f32.mxu0 0.0
        %2338 = vmatmul.mubr.f32.gmra.mxu0 %v2271
        %v2339 = vpop.f32.mrf.mxu0
        %v2340 = vadd.f32 0.0, %v2339
        %v2341 = vpop.f32.mrf.mxu0
        %2342 = vdwg.mxu0
        %s2343 = scalar_lea.vmem [#allocation11], 32
        %v2344 = vld [vmem:[%s2343] sm:$0xff]
        %v2345 = vld [vmem:[%s2343 + $0x8] sm:$0xff]
        %v2346 = vld [vmem:[%s2343 + $0x10] sm:$0xff]
        %v2347 = vld [vmem:[%s2343 + $0x18] sm:$0xff]
        %v2349 = vsel %vm432, %v2121, 0
        %v2352 = vsel %vm432, %v2194, 0
        %v2355 = vsel %vm432, %v2267, 0
        %v2358 = vsel %vm432, %v2340, 0
        %2360 = vmatprep.subr.mxu0 0.0
        %2361 = vmatpush1.msra.mxu0 0.0
        %2362 = vmatprep.subr.mxu0 0.0
        %2363 = vmatpush1.msra.mxu0 0.0
        %2364 = vmatprep.subr.mxu0 0.0
        %2365 = vmatpush1.msra.mxu0 0.0
        %2366 = vmatprep.subr.mxu0 0.0
        %2367 = vmatpush1.msra.mxu0 0.0
        %2368 = vmatprep.subr.mxu0 0.0
        %2369 = vmatpush1.msra.mxu0 0.0
        %2370 = vmatprep.subr.mxu0 0.0
        %2371 = vmatpush1.msra.mxu0 0.0
        %2372 = vmatprep.subr.mxu0 0.0
        %2373 = vmatpush1.msra.mxu0 0.0
        %2374 = vmatprep.subr.mxu0 0.0
        %2375 = vmatpush1.msra.mxu0 0.0
        %2376 = vmatprep.subr.mxu0 0.0
        %2377 = vmatpush1.msra.mxu0 0.0
        %2378 = vmatprep.subr.mxu0 0.0
        %2379 = vmatpush1.msra.mxu0 0.0
        %2380 = vmatprep.subr.mxu0 0.0
        %2381 = vmatpush1.msra.mxu0 0.0
        %2382 = vmatprep.subr.mxu0 0.0
        %2383 = vmatpush1.msra.mxu0 0.0
        %2384 = vmatprep.subr.mxu0 0.0
        %2385 = vmatpush1.msra.mxu0 %v2347
        %2386 = vmatprep.subr.mxu0 0.0
        %2387 = vmatpush1.msra.mxu0 %v2346
        %2388 = vmatprep.subr.mxu0 0.0
        %2389 = vmatpush1.msra.mxu0 %v2345
        %2390 = vmatprep.subr.mxu0 0.0
        %2391 = vmatpush1.msra.mxu0 %v2344
        %2392 = vmatprep.subr.mxu0 0.0
        %2393 = vmatpush2.msra.mxu0 0.0
        %2394 = vmatprep.subr.mxu0 0.0
        %2395 = vmatpush2.msra.mxu0 0.0
        %2396 = vmatprep.subr.mxu0 0.0
        %2397 = vmatpush2.msra.mxu0 0.0
        %2398 = vmatprep.subr.mxu0 0.0
        %2399 = vmatpush2.msra.mxu0 0.0
        %2400 = vmatprep.subr.mxu0 0.0
        %2401 = vmatpush2.msra.mxu0 0.0
        %2402 = vmatprep.subr.mxu0 0.0
        %2403 = vmatpush2.msra.mxu0 0.0
        %2404 = vmatprep.subr.mxu0 0.0
        %2405 = vmatpush2.msra.mxu0 0.0
        %2406 = vmatprep.subr.mxu0 0.0
        %2407 = vmatpush2.msra.mxu0 0.0
        %2408 = vmatprep.subr.mxu0 0.0
        %2409 = vmatpush2.msra.mxu0 0.0
        %2410 = vmatprep.subr.mxu0 0.0
        %2411 = vmatpush2.msra.mxu0 0.0
        %2412 = vmatprep.subr.mxu0 0.0
        %2413 = vmatpush2.msra.mxu0 0.0
        %2414 = vmatprep.subr.mxu0 0.0
        %2415 = vmatpush2.msra.mxu0 0.0
        %2416 = vmatprep.subr.mxu0 0.0
        %2417 = vmatpush2.msra.mxu0 0.0
        %2418 = vmatprep.subr.mxu0 0.0
        %2419 = vmatpush2.msra.mxu0 0.0
        %2420 = vmatprep.subr.mxu0 0.0
        %2421 = vmatpush2.msra.mxu0 0.0
        %2422 = vmatprep.subr.mxu0 0.0
        %2423 = vmatpush2.msra.mxu0 0.0
        %2424 = vmatprep.mubr.f32.mxu0 0.0
        %2425 = vmatmul.mubr.f32.gmra.mxu0 %v2349
        %v2426 = vpop.f32.mrf.mxu0
        %v2427 = vadd.f32 0.0, %v2426
        %v2428 = vpop.f32.mrf.mxu0
        %2429 = vmatprep.mubr.f32.mxu0 0.0
        %2430 = vmatmul.mubr.f32.gmra.mxu0 %v2352
        %v2431 = vpop.f32.mrf.mxu0
        %v2432 = vadd.f32 0.0, %v2431
        %v2433 = vpop.f32.mrf.mxu0
        %2434 = vmatprep.mubr.f32.mxu0 0.0
        %2435 = vmatmul.mubr.f32.gmra.mxu0 %v2355
        %v2436 = vpop.f32.mrf.mxu0
        %v2437 = vadd.f32 0.0, %v2436
        %v2438 = vpop.f32.mrf.mxu0
        %2439 = vmatprep.mubr.f32.mxu0 0.0
        %2440 = vmatmul.mubr.f32.gmra.mxu0 %v2358
        %v2441 = vpop.f32.mrf.mxu0
        %v2442 = vadd.f32 0.0, %v2441
        %v2443 = vpop.f32.mrf.mxu0
        %2444 = vdwg.mxu0
        %v2446 = vsel %vm432, %v1205, 0
        %v2449 = vsel %vm432, %v1278, 0
        %v2452 = vsel %vm432, %v1351, 0
        %v2455 = vsel %vm432, %v1424, 0
        %2457 = vmatprep.subr.mxu0 0.0
        %2458 = vmatpush1.msra.mxu0 0.0
        %2459 = vmatprep.subr.mxu0 0.0
        %2460 = vmatpush1.msra.mxu0 0.0
        %2461 = vmatprep.subr.mxu0 0.0
        %2462 = vmatpush1.msra.mxu0 0.0
        %2463 = vmatprep.subr.mxu0 0.0
        %2464 = vmatpush1.msra.mxu0 0.0
        %2465 = vmatprep.subr.mxu0 0.0
        %2466 = vmatpush1.msra.mxu0 0.0
        %2467 = vmatprep.subr.mxu0 0.0
        %2468 = vmatpush1.msra.mxu0 0.0
        %2469 = vmatprep.subr.mxu0 0.0
        %2470 = vmatpush1.msra.mxu0 0.0
        %2471 = vmatprep.subr.mxu0 0.0
        %2472 = vmatpush1.msra.mxu0 0.0
        %2473 = vmatprep.subr.mxu0 0.0
        %2474 = vmatpush1.msra.mxu0 0.0
        %2475 = vmatprep.subr.mxu0 0.0
        %2476 = vmatpush1.msra.mxu0 0.0
        %2477 = vmatprep.subr.mxu0 0.0
        %2478 = vmatpush1.msra.mxu0 0.0
        %2479 = vmatprep.subr.mxu0 0.0
        %2480 = vmatpush1.msra.mxu0 0.0
        %2481 = vmatprep.subr.mxu0 0.0
        %2482 = vmatpush1.msra.mxu0 %v1430
        %2483 = vmatprep.subr.mxu0 0.0
        %2484 = vmatpush1.msra.mxu0 %v1429
        %2485 = vmatprep.subr.mxu0 0.0
        %2486 = vmatpush1.msra.mxu0 %v1428
        %2487 = vmatprep.subr.mxu0 0.0
        %2488 = vmatpush1.msra.mxu0 %v1427
        %2489 = vmatprep.subr.mxu0 0.0
        %2490 = vmatpush2.msra.mxu0 0.0
        %2491 = vmatprep.subr.mxu0 0.0
        %2492 = vmatpush2.msra.mxu0 0.0
        %2493 = vmatprep.subr.mxu0 0.0
        %2494 = vmatpush2.msra.mxu0 0.0
        %2495 = vmatprep.subr.mxu0 0.0
        %2496 = vmatpush2.msra.mxu0 0.0
        %2497 = vmatprep.subr.mxu0 0.0
        %2498 = vmatpush2.msra.mxu0 0.0
        %2499 = vmatprep.subr.mxu0 0.0
        %2500 = vmatpush2.msra.mxu0 0.0
        %2501 = vmatprep.subr.mxu0 0.0
        %2502 = vmatpush2.msra.mxu0 0.0
        %2503 = vmatprep.subr.mxu0 0.0
        %2504 = vmatpush2.msra.mxu0 0.0
        %2505 = vmatprep.subr.mxu0 0.0
        %2506 = vmatpush2.msra.mxu0 0.0
        %2507 = vmatprep.subr.mxu0 0.0
        %2508 = vmatpush2.msra.mxu0 0.0
        %2509 = vmatprep.subr.mxu0 0.0
        %2510 = vmatpush2.msra.mxu0 0.0
        %2511 = vmatprep.subr.mxu0 0.0
        %2512 = vmatpush2.msra.mxu0 0.0
        %2513 = vmatprep.subr.mxu0 0.0
        %2514 = vmatpush2.msra.mxu0 0.0
        %2515 = vmatprep.subr.mxu0 0.0
        %2516 = vmatpush2.msra.mxu0 0.0
        %2517 = vmatprep.subr.mxu0 0.0
        %2518 = vmatpush2.msra.mxu0 0.0
        %2519 = vmatprep.subr.mxu0 0.0
        %2520 = vmatpush2.msra.mxu0 0.0
        %2521 = vmatprep.mubr.f32.mxu0 0.0
        %2522 = vmatmul.mubr.f32.gmra.mxu0 %v2446
        %v2523 = vpop.f32.mrf.mxu0
        %v2524 = vadd.f32 %v2427, %v2523
        %v2525 = vpop.f32.mrf.mxu0
        %2526 = vmatprep.mubr.f32.mxu0 0.0
        %2527 = vmatmul.mubr.f32.gmra.mxu0 %v2449
        %v2528 = vpop.f32.mrf.mxu0
        %v2529 = vadd.f32 %v2432, %v2528
        %v2530 = vpop.f32.mrf.mxu0
        %2531 = vmatprep.mubr.f32.mxu0 0.0
        %2532 = vmatmul.mubr.f32.gmra.mxu0 %v2452
        %v2533 = vpop.f32.mrf.mxu0
        %v2534 = vadd.f32 %v2437, %v2533
        %v2535 = vpop.f32.mrf.mxu0
        %2536 = vmatprep.mubr.f32.mxu0 0.0
        %2537 = vmatmul.mubr.f32.gmra.mxu0 %v2455
        %v2538 = vpop.f32.mrf.mxu0
        %v2539 = vadd.f32 %v2442, %v2538
        %v2540 = vpop.f32.mrf.mxu0
        %2541 = vdwg.mxu0
        %s2542 = scalar_lea.vmem [#allocation7], 64
        %v2543 = vld [vmem:[%s2542] sm:$0xff]
        %v2544 = vld [vmem:[%s2542 + $0x8] sm:$0xff]
        %v2545 = vld [vmem:[%s2542 + $0x10] sm:$0xff]
        %v2546 = vld [vmem:[%s2542 + $0x18] sm:$0xff]
        %2547 = vmatprep.subr.mxu0 0.0
        %2548 = vmatpush1.msra.mxu0 0.0
        %2549 = vmatprep.subr.mxu0 0.0
        %2550 = vmatpush1.msra.mxu0 0.0
        %2551 = vmatprep.subr.mxu0 0.0
        %2552 = vmatpush1.msra.mxu0 0.0
        %2553 = vmatprep.subr.mxu0 0.0
        %2554 = vmatpush1.msra.mxu0 0.0
        %2555 = vmatprep.subr.mxu0 0.0
        %2556 = vmatpush1.msra.mxu0 0.0
        %2557 = vmatprep.subr.mxu0 0.0
        %2558 = vmatpush1.msra.mxu0 0.0
        %2559 = vmatprep.subr.mxu0 0.0
        %2560 = vmatpush1.msra.mxu0 0.0
        %2561 = vmatprep.subr.mxu0 0.0
        %2562 = vmatpush1.msra.mxu0 0.0
        %2563 = vmatprep.subr.mxu0 0.0
        %2564 = vmatpush1.msra.mxu0 0.0
        %2565 = vmatprep.subr.mxu0 0.0
        %2566 = vmatpush1.msra.mxu0 0.0
        %2567 = vmatprep.subr.mxu0 0.0
        %2568 = vmatpush1.msra.mxu0 0.0
        %2569 = vmatprep.subr.mxu0 0.0
        %2570 = vmatpush1.msra.mxu0 0.0
        %2571 = vmatprep.subr.mxu0 0.0
        %2572 = vmatpush1.msra.mxu0 %v2546
        %2573 = vmatprep.subr.mxu0 0.0
        %2574 = vmatpush1.msra.mxu0 %v2545
        %2575 = vmatprep.subr.mxu0 0.0
        %2576 = vmatpush1.msra.mxu0 %v2544
        %2577 = vmatprep.subr.mxu0 0.0
        %2578 = vmatpush1.msra.mxu0 %v2543
        %2579 = vmatprep.subr.mxu0 0.0
        %2580 = vmatpush2.msra.mxu0 0.0
        %2581 = vmatprep.subr.mxu0 0.0
        %2582 = vmatpush2.msra.mxu0 0.0
        %2583 = vmatprep.subr.mxu0 0.0
        %2584 = vmatpush2.msra.mxu0 0.0
        %2585 = vmatprep.subr.mxu0 0.0
        %2586 = vmatpush2.msra.mxu0 0.0
        %2587 = vmatprep.subr.mxu0 0.0
        %2588 = vmatpush2.msra.mxu0 0.0
        %2589 = vmatprep.subr.mxu0 0.0
        %2590 = vmatpush2.msra.mxu0 0.0
        %2591 = vmatprep.subr.mxu0 0.0
        %2592 = vmatpush2.msra.mxu0 0.0
        %2593 = vmatprep.subr.mxu0 0.0
        %2594 = vmatpush2.msra.mxu0 0.0
        %2595 = vmatprep.subr.mxu0 0.0
        %2596 = vmatpush2.msra.mxu0 0.0
        %2597 = vmatprep.subr.mxu0 0.0
        %2598 = vmatpush2.msra.mxu0 0.0
        %2599 = vmatprep.subr.mxu0 0.0
        %2600 = vmatpush2.msra.mxu0 0.0
        %2601 = vmatprep.subr.mxu0 0.0
        %2602 = vmatpush2.msra.mxu0 0.0
        %2603 = vmatprep.subr.mxu0 0.0
        %2604 = vmatpush2.msra.mxu0 0.0
        %2605 = vmatprep.subr.mxu0 0.0
        %2606 = vmatpush2.msra.mxu0 0.0
        %2607 = vmatprep.subr.mxu0 0.0
        %2608 = vmatpush2.msra.mxu0 0.0
        %2609 = vmatprep.subr.mxu0 0.0
        %2610 = vmatpush2.msra.mxu0 0.0
        %2611 = vmatprep.mubr.f32.mxu0 0.0
        %2612 = vmatmul.mubr.f32.gmra.mxu0 %v511
        %v2613 = vpop.f32.mrf.mxu0
        %v2614 = vadd.f32 0.0, %v2613
        %v2615 = vpop.f32.mrf.mxu0
        %2616 = vmatprep.mubr.f32.mxu0 0.0
        %2617 = vmatmul.mubr.f32.gmra.mxu0 %v514
        %v2618 = vpop.f32.mrf.mxu0
        %v2619 = vadd.f32 0.0, %v2618
        %v2620 = vpop.f32.mrf.mxu0
        %2621 = vmatprep.mubr.f32.mxu0 0.0
        %2622 = vmatmul.mubr.f32.gmra.mxu0 %v517
        %v2623 = vpop.f32.mrf.mxu0
        %v2624 = vadd.f32 0.0, %v2623
        %v2625 = vpop.f32.mrf.mxu0
        %2626 = vmatprep.mubr.f32.mxu0 0.0
        %2627 = vmatmul.mubr.f32.gmra.mxu0 %v520
        %v2628 = vpop.f32.mrf.mxu0
        %v2629 = vadd.f32 0.0, %v2628
        %v2630 = vpop.f32.mrf.mxu0
        %2631 = vdwg.mxu0
        %s2632 = scalar_lea.vmem [#allocation8], 64
        %v2633 = vld [vmem:[%s2632] sm:$0xff]
        %v2634 = vld [vmem:[%s2632 + $0x8] sm:$0xff]
        %v2635 = vld [vmem:[%s2632 + $0x10] sm:$0xff]
        %v2636 = vld [vmem:[%s2632 + $0x18] sm:$0xff]
        %2637 = vmatprep.subr.mxu0 0.0
        %2638 = vmatpush1.msra.mxu0 0.0
        %2639 = vmatprep.subr.mxu0 0.0
        %2640 = vmatpush1.msra.mxu0 0.0
        %2641 = vmatprep.subr.mxu0 0.0
        %2642 = vmatpush1.msra.mxu0 0.0
        %2643 = vmatprep.subr.mxu0 0.0
        %2644 = vmatpush1.msra.mxu0 0.0
        %2645 = vmatprep.subr.mxu0 0.0
        %2646 = vmatpush1.msra.mxu0 0.0
        %2647 = vmatprep.subr.mxu0 0.0
        %2648 = vmatpush1.msra.mxu0 0.0
        %2649 = vmatprep.subr.mxu0 0.0
        %2650 = vmatpush1.msra.mxu0 0.0
        %2651 = vmatprep.subr.mxu0 0.0
        %2652 = vmatpush1.msra.mxu0 0.0
        %2653 = vmatprep.subr.mxu0 0.0
        %2654 = vmatpush1.msra.mxu0 0.0
        %2655 = vmatprep.subr.mxu0 0.0
        %2656 = vmatpush1.msra.mxu0 0.0
        %2657 = vmatprep.subr.mxu0 0.0
        %2658 = vmatpush1.msra.mxu0 0.0
        %2659 = vmatprep.subr.mxu0 0.0
        %2660 = vmatpush1.msra.mxu0 0.0
        %2661 = vmatprep.subr.mxu0 0.0
        %2662 = vmatpush1.msra.mxu0 %v2636
        %2663 = vmatprep.subr.mxu0 0.0
        %2664 = vmatpush1.msra.mxu0 %v2635
        %2665 = vmatprep.subr.mxu0 0.0
        %2666 = vmatpush1.msra.mxu0 %v2634
        %2667 = vmatprep.subr.mxu0 0.0
        %2668 = vmatpush1.msra.mxu0 %v2633
        %2669 = vmatprep.subr.mxu0 0.0
        %2670 = vmatpush2.msra.mxu0 0.0
        %2671 = vmatprep.subr.mxu0 0.0
        %2672 = vmatpush2.msra.mxu0 0.0
        %2673 = vmatprep.subr.mxu0 0.0
        %2674 = vmatpush2.msra.mxu0 0.0
        %2675 = vmatprep.subr.mxu0 0.0
        %2676 = vmatpush2.msra.mxu0 0.0
        %2677 = vmatprep.subr.mxu0 0.0
        %2678 = vmatpush2.msra.mxu0 0.0
        %2679 = vmatprep.subr.mxu0 0.0
        %2680 = vmatpush2.msra.mxu0 0.0
        %2681 = vmatprep.subr.mxu0 0.0
        %2682 = vmatpush2.msra.mxu0 0.0
        %2683 = vmatprep.subr.mxu0 0.0
        %2684 = vmatpush2.msra.mxu0 0.0
        %2685 = vmatprep.subr.mxu0 0.0
        %2686 = vmatpush2.msra.mxu0 0.0
        %2687 = vmatprep.subr.mxu0 0.0
        %2688 = vmatpush2.msra.mxu0 0.0
        %2689 = vmatprep.subr.mxu0 0.0
        %2690 = vmatpush2.msra.mxu0 0.0
        %2691 = vmatprep.subr.mxu0 0.0
        %2692 = vmatpush2.msra.mxu0 0.0
        %2693 = vmatprep.subr.mxu0 0.0
        %2694 = vmatpush2.msra.mxu0 0.0
        %2695 = vmatprep.subr.mxu0 0.0
        %2696 = vmatpush2.msra.mxu0 0.0
        %2697 = vmatprep.subr.mxu0 0.0
        %2698 = vmatpush2.msra.mxu0 0.0
        %2699 = vmatprep.subr.mxu0 0.0
        %2700 = vmatpush2.msra.mxu0 0.0
        %2701 = vmatprep.mubr.f32.mxu0 0.0
        %2702 = vmatmul.mubr.f32.gmra.mxu0 %v511
        %v2703 = vpop.f32.mrf.mxu0
        %v2704 = vadd.f32 0.0, %v2703
        %v2705 = vpop.f32.mrf.mxu0
        %2706 = vmatprep.mubr.f32.mxu0 0.0
        %2707 = vmatmul.mubr.f32.gmra.mxu0 %v514
        %v2708 = vpop.f32.mrf.mxu0
        %v2709 = vadd.f32 0.0, %v2708
        %v2710 = vpop.f32.mrf.mxu0
        %2711 = vmatprep.mubr.f32.mxu0 0.0
        %2712 = vmatmul.mubr.f32.gmra.mxu0 %v517
        %v2713 = vpop.f32.mrf.mxu0
        %v2714 = vadd.f32 0.0, %v2713
        %v2715 = vpop.f32.mrf.mxu0
        %2716 = vmatprep.mubr.f32.mxu0 0.0
        %2717 = vmatmul.mubr.f32.gmra.mxu0 %v520
        %v2718 = vpop.f32.mrf.mxu0
        %v2719 = vadd.f32 0.0, %v2718
        %v2720 = vpop.f32.mrf.mxu0
        %2721 = vdwg.mxu0
        %s2722 = scalar_lea.vmem [#allocation10], 64
        %v2723 = vld [vmem:[%s2722] sm:$0xff]
        %v2724 = vld [vmem:[%s2722 + $0x8] sm:$0xff]
        %v2725 = vld [vmem:[%s2722 + $0x10] sm:$0xff]
        %v2726 = vld [vmem:[%s2722 + $0x18] sm:$0xff]
        %2727 = vmatprep.subr.mxu0 0.0
        %2728 = vmatpush1.msra.mxu0 0.0
        %2729 = vmatprep.subr.mxu0 0.0
        %2730 = vmatpush1.msra.mxu0 0.0
        %2731 = vmatprep.subr.mxu0 0.0
        %2732 = vmatpush1.msra.mxu0 0.0
        %2733 = vmatprep.subr.mxu0 0.0
        %2734 = vmatpush1.msra.mxu0 0.0
        %2735 = vmatprep.subr.mxu0 0.0
        %2736 = vmatpush1.msra.mxu0 0.0
        %2737 = vmatprep.subr.mxu0 0.0
        %2738 = vmatpush1.msra.mxu0 0.0
        %2739 = vmatprep.subr.mxu0 0.0
        %2740 = vmatpush1.msra.mxu0 0.0
        %2741 = vmatprep.subr.mxu0 0.0
        %2742 = vmatpush1.msra.mxu0 0.0
        %2743 = vmatprep.subr.mxu0 0.0
        %2744 = vmatpush1.msra.mxu0 0.0
        %2745 = vmatprep.subr.mxu0 0.0
        %2746 = vmatpush1.msra.mxu0 0.0
        %2747 = vmatprep.subr.mxu0 0.0
        %2748 = vmatpush1.msra.mxu0 0.0
        %2749 = vmatprep.subr.mxu0 0.0
        %2750 = vmatpush1.msra.mxu0 0.0
        %2751 = vmatprep.subr.mxu0 0.0
        %2752 = vmatpush1.msra.mxu0 %v2726
        %2753 = vmatprep.subr.mxu0 0.0
        %2754 = vmatpush1.msra.mxu0 %v2725
        %2755 = vmatprep.subr.mxu0 0.0
        %2756 = vmatpush1.msra.mxu0 %v2724
        %2757 = vmatprep.subr.mxu0 0.0
        %2758 = vmatpush1.msra.mxu0 %v2723
        %2759 = vmatprep.subr.mxu0 0.0
        %2760 = vmatpush2.msra.mxu0 0.0
        %2761 = vmatprep.subr.mxu0 0.0
        %2762 = vmatpush2.msra.mxu0 0.0
        %2763 = vmatprep.subr.mxu0 0.0
        %2764 = vmatpush2.msra.mxu0 0.0
        %2765 = vmatprep.subr.mxu0 0.0
        %2766 = vmatpush2.msra.mxu0 0.0
        %2767 = vmatprep.subr.mxu0 0.0
        %2768 = vmatpush2.msra.mxu0 0.0
        %2769 = vmatprep.subr.mxu0 0.0
        %2770 = vmatpush2.msra.mxu0 0.0
        %2771 = vmatprep.subr.mxu0 0.0
        %2772 = vmatpush2.msra.mxu0 0.0
        %2773 = vmatprep.subr.mxu0 0.0
        %2774 = vmatpush2.msra.mxu0 0.0
        %2775 = vmatprep.subr.mxu0 0.0
        %2776 = vmatpush2.msra.mxu0 0.0
        %2777 = vmatprep.subr.mxu0 0.0
        %2778 = vmatpush2.msra.mxu0 0.0
        %2779 = vmatprep.subr.mxu0 0.0
        %2780 = vmatpush2.msra.mxu0 0.0
        %2781 = vmatprep.subr.mxu0 0.0
        %2782 = vmatpush2.msra.mxu0 0.0
        %2783 = vmatprep.subr.mxu0 0.0
        %2784 = vmatpush2.msra.mxu0 0.0
        %2785 = vmatprep.subr.mxu0 0.0
        %2786 = vmatpush2.msra.mxu0 0.0
        %2787 = vmatprep.subr.mxu0 0.0
        %2788 = vmatpush2.msra.mxu0 0.0
        %2789 = vmatprep.subr.mxu0 0.0
        %2790 = vmatpush2.msra.mxu0 0.0
        %2791 = vmatprep.mubr.f32.mxu0 0.0
        %2792 = vmatmul.mubr.f32.gmra.mxu0 %v511
        %v2793 = vpop.f32.mrf.mxu0
        %v2794 = vadd.f32 0.0, %v2793
        %v2795 = vpop.f32.mrf.mxu0
        %2796 = vmatprep.mubr.f32.mxu0 0.0
        %2797 = vmatmul.mubr.f32.gmra.mxu0 %v514
        %v2798 = vpop.f32.mrf.mxu0
        %v2799 = vadd.f32 0.0, %v2798
        %v2800 = vpop.f32.mrf.mxu0
        %2801 = vmatprep.mubr.f32.mxu0 0.0
        %2802 = vmatmul.mubr.f32.gmra.mxu0 %v517
        %v2803 = vpop.f32.mrf.mxu0
        %v2804 = vadd.f32 0.0, %v2803
        %v2805 = vpop.f32.mrf.mxu0
        %2806 = vmatprep.mubr.f32.mxu0 0.0
        %2807 = vmatmul.mubr.f32.gmra.mxu0 %v520
        %v2808 = vpop.f32.mrf.mxu0
        %v2809 = vadd.f32 0.0, %v2808
        %v2810 = vpop.f32.mrf.mxu0
        %2811 = vdwg.mxu0
        %s2812 = scalar_lea.vmem [#allocation5], 16
        %v2813 = vld [vmem:[%s2812] sm:$0xff]
        %v2815 = vsel %vm432, %v2614, 0
        %v2818 = vsel %vm432, %v2704, 0
        %2820 = vmatprep.subr.mxu0 0.0
        %2821 = vmatpush1.xpose.msra.mxu0 0.0
        %2822 = vmatprep.subr.mxu0 0.0
        %2823 = vmatpush1.xpose.msra.mxu0 0.0
        %2824 = vmatprep.subr.mxu0 0.0
        %2825 = vmatpush1.xpose.msra.mxu0 0.0
        %2826 = vmatprep.subr.mxu0 0.0
        %2827 = vmatpush1.xpose.msra.mxu0 0.0
        %2828 = vmatprep.subr.mxu0 0.0
        %2829 = vmatpush1.xpose.msra.mxu0 0.0
        %2830 = vmatprep.subr.mxu0 0.0
        %2831 = vmatpush1.xpose.msra.mxu0 0.0
        %2832 = vmatprep.subr.mxu0 0.0
        %2833 = vmatpush1.xpose.msra.mxu0 0.0
        %2834 = vmatprep.subr.mxu0 0.0
        %2835 = vmatpush1.xpose.msra.mxu0 0.0
        %2836 = vmatprep.subr.mxu0 0.0
        %2837 = vmatpush1.xpose.msra.mxu0 0.0
        %2838 = vmatprep.subr.mxu0 0.0
        %2839 = vmatpush1.xpose.msra.mxu0 0.0
        %2840 = vmatprep.subr.mxu0 0.0
        %2841 = vmatpush1.xpose.msra.mxu0 0.0
        %2842 = vmatprep.subr.mxu0 0.0
        %2843 = vmatpush1.xpose.msra.mxu0 0.0
        %2844 = vmatprep.subr.mxu0 0.0
        %2845 = vmatpush1.xpose.msra.mxu0 0.0
        %2846 = vmatprep.subr.mxu0 0.0
        %2847 = vmatpush1.xpose.msra.mxu0 0.0
        %2848 = vmatprep.subr.mxu0 0.0
        %2849 = vmatpush1.xpose.msra.mxu0 0.0
        %2850 = vmatprep.subr.mxu0 0.0
        %2851 = vmatpush1.xpose.msra.mxu0 %v2818
        %2852 = vmatprep.subr.mxu0 0.0
        %2853 = vmatpush2.xpose.msra.mxu0 0.0
        %2854 = vmatprep.subr.mxu0 0.0
        %2855 = vmatpush2.xpose.msra.mxu0 0.0
        %2856 = vmatprep.subr.mxu0 0.0
        %2857 = vmatpush2.xpose.msra.mxu0 0.0
        %2858 = vmatprep.subr.mxu0 0.0
        %2859 = vmatpush2.xpose.msra.mxu0 0.0
        %2860 = vmatprep.subr.mxu0 0.0
        %2861 = vmatpush2.xpose.msra.mxu0 0.0
        %2862 = vmatprep.subr.mxu0 0.0
        %2863 = vmatpush2.xpose.msra.mxu0 0.0
        %2864 = vmatprep.subr.mxu0 0.0
        %2865 = vmatpush2.xpose.msra.mxu0 0.0
        %2866 = vmatprep.subr.mxu0 0.0
        %2867 = vmatpush2.xpose.msra.mxu0 0.0
        %2868 = vmatprep.subr.mxu0 0.0
        %2869 = vmatpush2.xpose.msra.mxu0 0.0
        %2870 = vmatprep.subr.mxu0 0.0
        %2871 = vmatpush2.xpose.msra.mxu0 0.0
        %2872 = vmatprep.subr.mxu0 0.0
        %2873 = vmatpush2.xpose.msra.mxu0 0.0
        %2874 = vmatprep.subr.mxu0 0.0
        %2875 = vmatpush2.xpose.msra.mxu0 0.0
        %2876 = vmatprep.subr.mxu0 0.0
        %2877 = vmatpush2.xpose.msra.mxu0 0.0
        %2878 = vmatprep.subr.mxu0 0.0
        %2879 = vmatpush2.xpose.msra.mxu0 0.0
        %2880 = vmatprep.subr.mxu0 0.0
        %2881 = vmatpush2.xpose.msra.mxu0 0.0
        %2882 = vmatprep.subr.mxu0 0.0
        %2883 = vmatpush2.xpose.msra.mxu0 0.0
        %2884 = vmatprep.mubr.f32.mxu0 0.0
        %2885 = vmatmul.mubr.f32.gmra.mxu0 %v2815
        %v2886 = vpop.f32.mrf.mxu0
        %v2887 = vadd.f32 %v2813, %v2886
        %v2888 = vpop.f32.mrf.mxu0
        %2889 = vdwg.mxu0
        %v2891 = vsel %vm432, %v2619, 0
        %v2894 = vsel %vm432, %v2709, 0
        %2896 = vmatprep.subr.mxu0 0.0
        %2897 = vmatpush1.xpose.msra.mxu0 0.0
        %2898 = vmatprep.subr.mxu0 0.0
        %2899 = vmatpush1.xpose.msra.mxu0 0.0
        %2900 = vmatprep.subr.mxu0 0.0
        %2901 = vmatpush1.xpose.msra.mxu0 0.0
        %2902 = vmatprep.subr.mxu0 0.0
        %2903 = vmatpush1.xpose.msra.mxu0 0.0
        %2904 = vmatprep.subr.mxu0 0.0
        %2905 = vmatpush1.xpose.msra.mxu0 0.0
        %2906 = vmatprep.subr.mxu0 0.0
        %2907 = vmatpush1.xpose.msra.mxu0 0.0
        %2908 = vmatprep.subr.mxu0 0.0
        %2909 = vmatpush1.xpose.msra.mxu0 0.0
        %2910 = vmatprep.subr.mxu0 0.0
        %2911 = vmatpush1.xpose.msra.mxu0 0.0
        %2912 = vmatprep.subr.mxu0 0.0
        %2913 = vmatpush1.xpose.msra.mxu0 0.0
        %2914 = vmatprep.subr.mxu0 0.0
        %2915 = vmatpush1.xpose.msra.mxu0 0.0
        %2916 = vmatprep.subr.mxu0 0.0
        %2917 = vmatpush1.xpose.msra.mxu0 0.0
        %2918 = vmatprep.subr.mxu0 0.0
        %2919 = vmatpush1.xpose.msra.mxu0 0.0
        %2920 = vmatprep.subr.mxu0 0.0
        %2921 = vmatpush1.xpose.msra.mxu0 0.0
        %2922 = vmatprep.subr.mxu0 0.0
        %2923 = vmatpush1.xpose.msra.mxu0 0.0
        %2924 = vmatprep.subr.mxu0 0.0
        %2925 = vmatpush1.xpose.msra.mxu0 0.0
        %2926 = vmatprep.subr.mxu0 0.0
        %2927 = vmatpush1.xpose.msra.mxu0 %v2894
        %2928 = vmatprep.subr.mxu0 0.0
        %2929 = vmatpush2.xpose.msra.mxu0 0.0
        %2930 = vmatprep.subr.mxu0 0.0
        %2931 = vmatpush2.xpose.msra.mxu0 0.0
        %2932 = vmatprep.subr.mxu0 0.0
        %2933 = vmatpush2.xpose.msra.mxu0 0.0
        %2934 = vmatprep.subr.mxu0 0.0
        %2935 = vmatpush2.xpose.msra.mxu0 0.0
        %2936 = vmatprep.subr.mxu0 0.0
        %2937 = vmatpush2.xpose.msra.mxu0 0.0
        %2938 = vmatprep.subr.mxu0 0.0
        %2939 = vmatpush2.xpose.msra.mxu0 0.0
        %2940 = vmatprep.subr.mxu0 0.0
        %2941 = vmatpush2.xpose.msra.mxu0 0.0
        %2942 = vmatprep.subr.mxu0 0.0
        %2943 = vmatpush2.xpose.msra.mxu0 0.0
        %2944 = vmatprep.subr.mxu0 0.0
        %2945 = vmatpush2.xpose.msra.mxu0 0.0
        %2946 = vmatprep.subr.mxu0 0.0
        %2947 = vmatpush2.xpose.msra.mxu0 0.0
        %2948 = vmatprep.subr.mxu0 0.0
        %2949 = vmatpush2.xpose.msra.mxu0 0.0
        %2950 = vmatprep.subr.mxu0 0.0
        %2951 = vmatpush2.xpose.msra.mxu0 0.0
        %2952 = vmatprep.subr.mxu0 0.0
        %2953 = vmatpush2.xpose.msra.mxu0 0.0
        %2954 = vmatprep.subr.mxu0 0.0
        %2955 = vmatpush2.xpose.msra.mxu0 0.0
        %2956 = vmatprep.subr.mxu0 0.0
        %2957 = vmatpush2.xpose.msra.mxu0 0.0
        %2958 = vmatprep.subr.mxu0 0.0
        %2959 = vmatpush2.xpose.msra.mxu0 0.0
        %2960 = vmatprep.mubr.f32.mxu0 0.0
        %2961 = vmatmul.mubr.f32.gmra.mxu0 %v2891
        %v2962 = vpop.f32.mrf.mxu0
        %v2963 = vadd.f32 %v2813, %v2962
        %v2964 = vpop.f32.mrf.mxu0
        %2965 = vdwg.mxu0
        %v2967 = vsel %vm432, %v2624, 0
        %v2970 = vsel %vm432, %v2714, 0
        %2972 = vmatprep.subr.mxu0 0.0
        %2973 = vmatpush1.xpose.msra.mxu0 0.0
        %2974 = vmatprep.subr.mxu0 0.0
        %2975 = vmatpush1.xpose.msra.mxu0 0.0
        %2976 = vmatprep.subr.mxu0 0.0
        %2977 = vmatpush1.xpose.msra.mxu0 0.0
        %2978 = vmatprep.subr.mxu0 0.0
        %2979 = vmatpush1.xpose.msra.mxu0 0.0
        %2980 = vmatprep.subr.mxu0 0.0
        %2981 = vmatpush1.xpose.msra.mxu0 0.0
        %2982 = vmatprep.subr.mxu0 0.0
        %2983 = vmatpush1.xpose.msra.mxu0 0.0
        %2984 = vmatprep.subr.mxu0 0.0
        %2985 = vmatpush1.xpose.msra.mxu0 0.0
        %2986 = vmatprep.subr.mxu0 0.0
        %2987 = vmatpush1.xpose.msra.mxu0 0.0
        %2988 = vmatprep.subr.mxu0 0.0
        %2989 = vmatpush1.xpose.msra.mxu0 0.0
        %2990 = vmatprep.subr.mxu0 0.0
        %2991 = vmatpush1.xpose.msra.mxu0 0.0
        %2992 = vmatprep.subr.mxu0 0.0
        %2993 = vmatpush1.xpose.msra.mxu0 0.0
        %2994 = vmatprep.subr.mxu0 0.0
        %2995 = vmatpush1.xpose.msra.mxu0 0.0
        %2996 = vmatprep.subr.mxu0 0.0
        %2997 = vmatpush1.xpose.msra.mxu0 0.0
        %2998 = vmatprep.subr.mxu0 0.0
        %2999 = vmatpush1.xpose.msra.mxu0 0.0
        %3000 = vmatprep.subr.mxu0 0.0
        %3001 = vmatpush1.xpose.msra.mxu0 0.0
        %3002 = vmatprep.subr.mxu0 0.0
        %3003 = vmatpush1.xpose.msra.mxu0 %v2970
        %3004 = vmatprep.subr.mxu0 0.0
        %3005 = vmatpush2.xpose.msra.mxu0 0.0
        %3006 = vmatprep.subr.mxu0 0.0
        %3007 = vmatpush2.xpose.msra.mxu0 0.0
        %3008 = vmatprep.subr.mxu0 0.0
        %3009 = vmatpush2.xpose.msra.mxu0 0.0
        %3010 = vmatprep.subr.mxu0 0.0
        %3011 = vmatpush2.xpose.msra.mxu0 0.0
        %3012 = vmatprep.subr.mxu0 0.0
        %3013 = vmatpush2.xpose.msra.mxu0 0.0
        %3014 = vmatprep.subr.mxu0 0.0
        %3015 = vmatpush2.xpose.msra.mxu0 0.0
        %3016 = vmatprep.subr.mxu0 0.0
        %3017 = vmatpush2.xpose.msra.mxu0 0.0
        %3018 = vmatprep.subr.mxu0 0.0
        %3019 = vmatpush2.xpose.msra.mxu0 0.0
        %3020 = vmatprep.subr.mxu0 0.0
        %3021 = vmatpush2.xpose.msra.mxu0 0.0
        %3022 = vmatprep.subr.mxu0 0.0
        %3023 = vmatpush2.xpose.msra.mxu0 0.0
        %3024 = vmatprep.subr.mxu0 0.0
        %3025 = vmatpush2.xpose.msra.mxu0 0.0
        %3026 = vmatprep.subr.mxu0 0.0
        %3027 = vmatpush2.xpose.msra.mxu0 0.0
        %3028 = vmatprep.subr.mxu0 0.0
        %3029 = vmatpush2.xpose.msra.mxu0 0.0
        %3030 = vmatprep.subr.mxu0 0.0
        %3031 = vmatpush2.xpose.msra.mxu0 0.0
        %3032 = vmatprep.subr.mxu0 0.0
        %3033 = vmatpush2.xpose.msra.mxu0 0.0
        %3034 = vmatprep.subr.mxu0 0.0
        %3035 = vmatpush2.xpose.msra.mxu0 0.0
        %3036 = vmatprep.mubr.f32.mxu0 0.0
        %3037 = vmatmul.mubr.f32.gmra.mxu0 %v2967
        %v3038 = vpop.f32.mrf.mxu0
        %v3039 = vadd.f32 %v2813, %v3038
        %v3040 = vpop.f32.mrf.mxu0
        %3041 = vdwg.mxu0
        %v3043 = vsel %vm432, %v2629, 0
        %v3046 = vsel %vm432, %v2719, 0
        %3048 = vmatprep.subr.mxu0 0.0
        %3049 = vmatpush1.xpose.msra.mxu0 0.0
        %3050 = vmatprep.subr.mxu0 0.0
        %3051 = vmatpush1.xpose.msra.mxu0 0.0
        %3052 = vmatprep.subr.mxu0 0.0
        %3053 = vmatpush1.xpose.msra.mxu0 0.0
        %3054 = vmatprep.subr.mxu0 0.0
        %3055 = vmatpush1.xpose.msra.mxu0 0.0
        %3056 = vmatprep.subr.mxu0 0.0
        %3057 = vmatpush1.xpose.msra.mxu0 0.0
        %3058 = vmatprep.subr.mxu0 0.0
        %3059 = vmatpush1.xpose.msra.mxu0 0.0
        %3060 = vmatprep.subr.mxu0 0.0
        %3061 = vmatpush1.xpose.msra.mxu0 0.0
        %3062 = vmatprep.subr.mxu0 0.0
        %3063 = vmatpush1.xpose.msra.mxu0 0.0
        %3064 = vmatprep.subr.mxu0 0.0
        %3065 = vmatpush1.xpose.msra.mxu0 0.0
        %3066 = vmatprep.subr.mxu0 0.0
        %3067 = vmatpush1.xpose.msra.mxu0 0.0
        %3068 = vmatprep.subr.mxu0 0.0
        %3069 = vmatpush1.xpose.msra.mxu0 0.0
        %3070 = vmatprep.subr.mxu0 0.0
        %3071 = vmatpush1.xpose.msra.mxu0 0.0
        %3072 = vmatprep.subr.mxu0 0.0
        %3073 = vmatpush1.xpose.msra.mxu0 0.0
        %3074 = vmatprep.subr.mxu0 0.0
        %3075 = vmatpush1.xpose.msra.mxu0 0.0
        %3076 = vmatprep.subr.mxu0 0.0
        %3077 = vmatpush1.xpose.msra.mxu0 0.0
        %3078 = vmatprep.subr.mxu0 0.0
        %3079 = vmatpush1.xpose.msra.mxu0 %v3046
        %3080 = vmatprep.subr.mxu0 0.0
        %3081 = vmatpush2.xpose.msra.mxu0 0.0
        %3082 = vmatprep.subr.mxu0 0.0
        %3083 = vmatpush2.xpose.msra.mxu0 0.0
        %3084 = vmatprep.subr.mxu0 0.0
        %3085 = vmatpush2.xpose.msra.mxu0 0.0
        %3086 = vmatprep.subr.mxu0 0.0
        %3087 = vmatpush2.xpose.msra.mxu0 0.0
        %3088 = vmatprep.subr.mxu0 0.0
        %3089 = vmatpush2.xpose.msra.mxu0 0.0
        %3090 = vmatprep.subr.mxu0 0.0
        %3091 = vmatpush2.xpose.msra.mxu0 0.0
        %3092 = vmatprep.subr.mxu0 0.0
        %3093 = vmatpush2.xpose.msra.mxu0 0.0
        %3094 = vmatprep.subr.mxu0 0.0
        %3095 = vmatpush2.xpose.msra.mxu0 0.0
        %3096 = vmatprep.subr.mxu0 0.0
        %3097 = vmatpush2.xpose.msra.mxu0 0.0
        %3098 = vmatprep.subr.mxu0 0.0
        %3099 = vmatpush2.xpose.msra.mxu0 0.0
        %3100 = vmatprep.subr.mxu0 0.0
        %3101 = vmatpush2.xpose.msra.mxu0 0.0
        %3102 = vmatprep.subr.mxu0 0.0
        %3103 = vmatpush2.xpose.msra.mxu0 0.0
        %3104 = vmatprep.subr.mxu0 0.0
        %3105 = vmatpush2.xpose.msra.mxu0 0.0
        %3106 = vmatprep.subr.mxu0 0.0
        %3107 = vmatpush2.xpose.msra.mxu0 0.0
        %3108 = vmatprep.subr.mxu0 0.0
        %3109 = vmatpush2.xpose.msra.mxu0 0.0
        %3110 = vmatprep.subr.mxu0 0.0
        %3111 = vmatpush2.xpose.msra.mxu0 0.0
        %3112 = vmatprep.mubr.f32.mxu0 0.0
        %3113 = vmatmul.mubr.f32.gmra.mxu0 %v3043
        %v3114 = vpop.f32.mrf.mxu0
        %v3115 = vadd.f32 %v2813, %v3114
        %v3116 = vpop.f32.mrf.mxu0
        %3117 = vdwg.mxu0
        %v3118 = vsel %vm1090, %v2887, -inf
        %3119 = vmax.xlane.f32.xlu0 %v3118
        %v3120 = vpop.xlane.xlu0 %3119
        %v3121 = vsel %vm1090, %v2963, -inf
        %3122 = vmax.xlane.f32.xlu0 %v3121
        %v3123 = vpop.xlane.xlu0 %3122
        %v3124 = vsel %vm1090, %v3039, -inf
        %3125 = vmax.xlane.f32.xlu0 %v3124
        %v3126 = vpop.xlane.xlu0 %3125
        %v3127 = vsel %vm1090, %v3115, -inf
        %3128 = vmax.xlane.f32.xlu0 %v3127
        %v3129 = vpop.xlane.xlu0 %3128
        %v3130 = vsub.f32 %v2887, %v3120
        %v3131 = vsub.f32 %v2963, %v3123
        %v3132 = vsub.f32 %v3039, %v3126
        %v3133 = vsub.f32 %v3115, %v3129
        %v3134 = vmul.f32 %v3130, 1.442695
        %v3135 = vpow.pop %v3134
        %v3136 = vmul.f32 %v3131, 1.442695
        %v3137 = vpow.pop %v3136
        %v3138 = vmul.f32 %v3132, 1.442695
        %v3139 = vpow.pop %v3138
        %v3140 = vmul.f32 %v3133, 1.442695
        %v3141 = vpow.pop %v3140
        %v3142 = vsel %vm1090, %v3135, 0.0
        %3143 = vadd.xlane.f32.xlu0 %v3142
        %v3144 = vpop.xlane.xlu0 %3143
        %v3145 = vsel %vm1090, %v3137, 0.0
        %3146 = vadd.xlane.f32.xlu0 %v3145
        %v3147 = vpop.xlane.xlu0 %3146
        %v3148 = vsel %vm1090, %v3139, 0.0
        %3149 = vadd.xlane.f32.xlu0 %v3148
        %v3150 = vpop.xlane.xlu0 %3149
        %v3151 = vsel %vm1090, %v3141, 0.0
        %3152 = vadd.xlane.f32.xlu0 %v3151
        %v3153 = vpop.xlane.xlu0 %3152
        %v3154 = vrcp.pop %v3144
        %v3155 = vrcp.pop %v3147
        %v3156 = vrcp.pop %v3150
        %v3157 = vrcp.pop %v3153
        %v3158 = vmul.f32 %v3135, %v3154
        %v3159 = vmul.f32 %v3137, %v3155
        %v3160 = vmul.f32 %v3139, %v3156
        %v3161 = vmul.f32 %v3141, %v3157
        %v3163 = vsel %vm1090, %v3158, 0
        %3165 = vmatprep.subr.mxu0 0.0
        %3166 = vmatpush1.msra.mxu0 0.0
        %3167 = vmatprep.subr.mxu0 0.0
        %3168 = vmatpush1.msra.mxu0 0.0
        %3169 = vmatprep.subr.mxu0 0.0
        %3170 = vmatpush1.msra.mxu0 0.0
        %3171 = vmatprep.subr.mxu0 0.0
        %3172 = vmatpush1.msra.mxu0 0.0
        %3173 = vmatprep.subr.mxu0 0.0
        %3174 = vmatpush1.msra.mxu0 0.0
        %3175 = vmatprep.subr.mxu0 0.0
        %3176 = vmatpush1.msra.mxu0 0.0
        %3177 = vmatprep.subr.mxu0 0.0
        %3178 = vmatpush1.msra.mxu0 0.0
        %3179 = vmatprep.subr.mxu0 0.0
        %3180 = vmatpush1.msra.mxu0 0.0
        %3181 = vmatprep.subr.mxu0 0.0
        %3182 = vmatpush1.msra.mxu0 0.0
        %3183 = vmatprep.subr.mxu0 0.0
        %3184 = vmatpush1.msra.mxu0 0.0
        %3185 = vmatprep.subr.mxu0 0.0
        %3186 = vmatpush1.msra.mxu0 0.0
        %3187 = vmatprep.subr.mxu0 0.0
        %3188 = vmatpush1.msra.mxu0 0.0
        %3189 = vmatprep.subr.mxu0 0.0
        %3190 = vmatpush1.msra.mxu0 0.0
        %3191 = vmatprep.subr.mxu0 0.0
        %3192 = vmatpush1.msra.mxu0 0.0
        %3193 = vmatprep.subr.mxu0 0.0
        %3194 = vmatpush1.msra.mxu0 0.0
        %3195 = vmatprep.subr.mxu0 0.0
        %3196 = vmatpush1.msra.mxu0 %v2794
        %3197 = vmatprep.subr.mxu0 0.0
        %3198 = vmatpush2.msra.mxu0 0.0
        %3199 = vmatprep.subr.mxu0 0.0
        %3200 = vmatpush2.msra.mxu0 0.0
        %3201 = vmatprep.subr.mxu0 0.0
        %3202 = vmatpush2.msra.mxu0 0.0
        %3203 = vmatprep.subr.mxu0 0.0
        %3204 = vmatpush2.msra.mxu0 0.0
        %3205 = vmatprep.subr.mxu0 0.0
        %3206 = vmatpush2.msra.mxu0 0.0
        %3207 = vmatprep.subr.mxu0 0.0
        %3208 = vmatpush2.msra.mxu0 0.0
        %3209 = vmatprep.subr.mxu0 0.0
        %3210 = vmatpush2.msra.mxu0 0.0
        %3211 = vmatprep.subr.mxu0 0.0
        %3212 = vmatpush2.msra.mxu0 0.0
        %3213 = vmatprep.subr.mxu0 0.0
        %3214 = vmatpush2.msra.mxu0 0.0
        %3215 = vmatprep.subr.mxu0 0.0
        %3216 = vmatpush2.msra.mxu0 0.0
        %3217 = vmatprep.subr.mxu0 0.0
        %3218 = vmatpush2.msra.mxu0 0.0
        %3219 = vmatprep.subr.mxu0 0.0
        %3220 = vmatpush2.msra.mxu0 0.0
        %3221 = vmatprep.subr.mxu0 0.0
        %3222 = vmatpush2.msra.mxu0 0.0
        %3223 = vmatprep.subr.mxu0 0.0
        %3224 = vmatpush2.msra.mxu0 0.0
        %3225 = vmatprep.subr.mxu0 0.0
        %3226 = vmatpush2.msra.mxu0 0.0
        %3227 = vmatprep.subr.mxu0 0.0
        %3228 = vmatpush2.msra.mxu0 0.0
        %3229 = vmatprep.mubr.f32.mxu0 0.0
        %3230 = vmatmul.mubr.f32.gmra.mxu0 %v3163
        %v3231 = vpop.f32.mrf.mxu0
        %v3232 = vadd.f32 0.0, %v3231
        %v3233 = vpop.f32.mrf.mxu0
        %3234 = vdwg.mxu0
        %v3236 = vsel %vm1090, %v3159, 0
        %3238 = vmatprep.subr.mxu0 0.0
        %3239 = vmatpush1.msra.mxu0 0.0
        %3240 = vmatprep.subr.mxu0 0.0
        %3241 = vmatpush1.msra.mxu0 0.0
        %3242 = vmatprep.subr.mxu0 0.0
        %3243 = vmatpush1.msra.mxu0 0.0
        %3244 = vmatprep.subr.mxu0 0.0
        %3245 = vmatpush1.msra.mxu0 0.0
        %3246 = vmatprep.subr.mxu0 0.0
        %3247 = vmatpush1.msra.mxu0 0.0
        %3248 = vmatprep.subr.mxu0 0.0
        %3249 = vmatpush1.msra.mxu0 0.0
        %3250 = vmatprep.subr.mxu0 0.0
        %3251 = vmatpush1.msra.mxu0 0.0
        %3252 = vmatprep.subr.mxu0 0.0
        %3253 = vmatpush1.msra.mxu0 0.0
        %3254 = vmatprep.subr.mxu0 0.0
        %3255 = vmatpush1.msra.mxu0 0.0
        %3256 = vmatprep.subr.mxu0 0.0
        %3257 = vmatpush1.msra.mxu0 0.0
        %3258 = vmatprep.subr.mxu0 0.0
        %3259 = vmatpush1.msra.mxu0 0.0
        %3260 = vmatprep.subr.mxu0 0.0
        %3261 = vmatpush1.msra.mxu0 0.0
        %3262 = vmatprep.subr.mxu0 0.0
        %3263 = vmatpush1.msra.mxu0 0.0
        %3264 = vmatprep.subr.mxu0 0.0
        %3265 = vmatpush1.msra.mxu0 0.0
        %3266 = vmatprep.subr.mxu0 0.0
        %3267 = vmatpush1.msra.mxu0 0.0
        %3268 = vmatprep.subr.mxu0 0.0
        %3269 = vmatpush1.msra.mxu0 %v2799
        %3270 = vmatprep.subr.mxu0 0.0
        %3271 = vmatpush2.msra.mxu0 0.0
        %3272 = vmatprep.subr.mxu0 0.0
        %3273 = vmatpush2.msra.mxu0 0.0
        %3274 = vmatprep.subr.mxu0 0.0
        %3275 = vmatpush2.msra.mxu0 0.0
        %3276 = vmatprep.subr.mxu0 0.0
        %3277 = vmatpush2.msra.mxu0 0.0
        %3278 = vmatprep.subr.mxu0 0.0
        %3279 = vmatpush2.msra.mxu0 0.0
        %3280 = vmatprep.subr.mxu0 0.0
        %3281 = vmatpush2.msra.mxu0 0.0
        %3282 = vmatprep.subr.mxu0 0.0
        %3283 = vmatpush2.msra.mxu0 0.0
        %3284 = vmatprep.subr.mxu0 0.0
        %3285 = vmatpush2.msra.mxu0 0.0
        %3286 = vmatprep.subr.mxu0 0.0
        %3287 = vmatpush2.msra.mxu0 0.0
        %3288 = vmatprep.subr.mxu0 0.0
        %3289 = vmatpush2.msra.mxu0 0.0
        %3290 = vmatprep.subr.mxu0 0.0
        %3291 = vmatpush2.msra.mxu0 0.0
        %3292 = vmatprep.subr.mxu0 0.0
        %3293 = vmatpush2.msra.mxu0 0.0
        %3294 = vmatprep.subr.mxu0 0.0
        %3295 = vmatpush2.msra.mxu0 0.0
        %3296 = vmatprep.subr.mxu0 0.0
        %3297 = vmatpush2.msra.mxu0 0.0
        %3298 = vmatprep.subr.mxu0 0.0
        %3299 = vmatpush2.msra.mxu0 0.0
        %3300 = vmatprep.subr.mxu0 0.0
        %3301 = vmatpush2.msra.mxu0 0.0
        %3302 = vmatprep.mubr.f32.mxu0 0.0
        %3303 = vmatmul.mubr.f32.gmra.mxu0 %v3236
        %v3304 = vpop.f32.mrf.mxu0
        %v3305 = vadd.f32 0.0, %v3304
        %v3306 = vpop.f32.mrf.mxu0
        %3307 = vdwg.mxu0
        %v3309 = vsel %vm1090, %v3160, 0
        %3311 = vmatprep.subr.mxu0 0.0
        %3312 = vmatpush1.msra.mxu0 0.0
        %3313 = vmatprep.subr.mxu0 0.0
        %3314 = vmatpush1.msra.mxu0 0.0
        %3315 = vmatprep.subr.mxu0 0.0
        %3316 = vmatpush1.msra.mxu0 0.0
        %3317 = vmatprep.subr.mxu0 0.0
        %3318 = vmatpush1.msra.mxu0 0.0
        %3319 = vmatprep.subr.mxu0 0.0
        %3320 = vmatpush1.msra.mxu0 0.0
        %3321 = vmatprep.subr.mxu0 0.0
        %3322 = vmatpush1.msra.mxu0 0.0
        %3323 = vmatprep.subr.mxu0 0.0
        %3324 = vmatpush1.msra.mxu0 0.0
        %3325 = vmatprep.subr.mxu0 0.0
        %3326 = vmatpush1.msra.mxu0 0.0
        %3327 = vmatprep.subr.mxu0 0.0
        %3328 = vmatpush1.msra.mxu0 0.0
        %3329 = vmatprep.subr.mxu0 0.0
        %3330 = vmatpush1.msra.mxu0 0.0
        %3331 = vmatprep.subr.mxu0 0.0
        %3332 = vmatpush1.msra.mxu0 0.0
        %3333 = vmatprep.subr.mxu0 0.0
        %3334 = vmatpush1.msra.mxu0 0.0
        %3335 = vmatprep.subr.mxu0 0.0
        %3336 = vmatpush1.msra.mxu0 0.0
        %3337 = vmatprep.subr.mxu0 0.0
        %3338 = vmatpush1.msra.mxu0 0.0
        %3339 = vmatprep.subr.mxu0 0.0
        %3340 = vmatpush1.msra.mxu0 0.0
        %3341 = vmatprep.subr.mxu0 0.0
        %3342 = vmatpush1.msra.mxu0 %v2804
        %3343 = vmatprep.subr.mxu0 0.0
        %3344 = vmatpush2.msra.mxu0 0.0
        %3345 = vmatprep.subr.mxu0 0.0
        %3346 = vmatpush2.msra.mxu0 0.0
        %3347 = vmatprep.subr.mxu0 0.0
        %3348 = vmatpush2.msra.mxu0 0.0
        %3349 = vmatprep.subr.mxu0 0.0
        %3350 = vmatpush2.msra.mxu0 0.0
        %3351 = vmatprep.subr.mxu0 0.0
        %3352 = vmatpush2.msra.mxu0 0.0
        %3353 = vmatprep.subr.mxu0 0.0
        %3354 = vmatpush2.msra.mxu0 0.0
        %3355 = vmatprep.subr.mxu0 0.0
        %3356 = vmatpush2.msra.mxu0 0.0
        %3357 = vmatprep.subr.mxu0 0.0
        %3358 = vmatpush2.msra.mxu0 0.0
        %3359 = vmatprep.subr.mxu0 0.0
        %3360 = vmatpush2.msra.mxu0 0.0
        %3361 = vmatprep.subr.mxu0 0.0
        %3362 = vmatpush2.msra.mxu0 0.0
        %3363 = vmatprep.subr.mxu0 0.0
        %3364 = vmatpush2.msra.mxu0 0.0
        %3365 = vmatprep.subr.mxu0 0.0
        %3366 = vmatpush2.msra.mxu0 0.0
        %3367 = vmatprep.subr.mxu0 0.0
        %3368 = vmatpush2.msra.mxu0 0.0
        %3369 = vmatprep.subr.mxu0 0.0
        %3370 = vmatpush2.msra.mxu0 0.0
        %3371 = vmatprep.subr.mxu0 0.0
        %3372 = vmatpush2.msra.mxu0 0.0
        %3373 = vmatprep.subr.mxu0 0.0
        %3374 = vmatpush2.msra.mxu0 0.0
        %3375 = vmatprep.mubr.f32.mxu0 0.0
        %3376 = vmatmul.mubr.f32.gmra.mxu0 %v3309
        %v3377 = vpop.f32.mrf.mxu0
        %v3378 = vadd.f32 0.0, %v3377
        %v3379 = vpop.f32.mrf.mxu0
        %3380 = vdwg.mxu0
        %v3382 = vsel %vm1090, %v3161, 0
        %3384 = vmatprep.subr.mxu0 0.0
        %3385 = vmatpush1.msra.mxu0 0.0
        %3386 = vmatprep.subr.mxu0 0.0
        %3387 = vmatpush1.msra.mxu0 0.0
        %3388 = vmatprep.subr.mxu0 0.0
        %3389 = vmatpush1.msra.mxu0 0.0
        %3390 = vmatprep.subr.mxu0 0.0
        %3391 = vmatpush1.msra.mxu0 0.0
        %3392 = vmatprep.subr.mxu0 0.0
        %3393 = vmatpush1.msra.mxu0 0.0
        %3394 = vmatprep.subr.mxu0 0.0
        %3395 = vmatpush1.msra.mxu0 0.0
        %3396 = vmatprep.subr.mxu0 0.0
        %3397 = vmatpush1.msra.mxu0 0.0
        %3398 = vmatprep.subr.mxu0 0.0
        %3399 = vmatpush1.msra.mxu0 0.0
        %3400 = vmatprep.subr.mxu0 0.0
        %3401 = vmatpush1.msra.mxu0 0.0
        %3402 = vmatprep.subr.mxu0 0.0
        %3403 = vmatpush1.msra.mxu0 0.0
        %3404 = vmatprep.subr.mxu0 0.0
        %3405 = vmatpush1.msra.mxu0 0.0
        %3406 = vmatprep.subr.mxu0 0.0
        %3407 = vmatpush1.msra.mxu0 0.0
        %3408 = vmatprep.subr.mxu0 0.0
        %3409 = vmatpush1.msra.mxu0 0.0
        %3410 = vmatprep.subr.mxu0 0.0
        %3411 = vmatpush1.msra.mxu0 0.0
        %3412 = vmatprep.subr.mxu0 0.0
        %3413 = vmatpush1.msra.mxu0 0.0
        %3414 = vmatprep.subr.mxu0 0.0
        %3415 = vmatpush1.msra.mxu0 %v2809
        %3416 = vmatprep.subr.mxu0 0.0
        %3417 = vmatpush2.msra.mxu0 0.0
        %3418 = vmatprep.subr.mxu0 0.0
        %3419 = vmatpush2.msra.mxu0 0.0
        %3420 = vmatprep.subr.mxu0 0.0
        %3421 = vmatpush2.msra.mxu0 0.0
        %3422 = vmatprep.subr.mxu0 0.0
        %3423 = vmatpush2.msra.mxu0 0.0
        %3424 = vmatprep.subr.mxu0 0.0
        %3425 = vmatpush2.msra.mxu0 0.0
        %3426 = vmatprep.subr.mxu0 0.0
        %3427 = vmatpush2.msra.mxu0 0.0
        %3428 = vmatprep.subr.mxu0 0.0
        %3429 = vmatpush2.msra.mxu0 0.0
        %3430 = vmatprep.subr.mxu0 0.0
        %3431 = vmatpush2.msra.mxu0 0.0
        %3432 = vmatprep.subr.mxu0 0.0
        %3433 = vmatpush2.msra.mxu0 0.0
        %3434 = vmatprep.subr.mxu0 0.0
        %3435 = vmatpush2.msra.mxu0 0.0
        %3436 = vmatprep.subr.mxu0 0.0
        %3437 = vmatpush2.msra.mxu0 0.0
        %3438 = vmatprep.subr.mxu0 0.0
        %3439 = vmatpush2.msra.mxu0 0.0
        %3440 = vmatprep.subr.mxu0 0.0
        %3441 = vmatpush2.msra.mxu0 0.0
        %3442 = vmatprep.subr.mxu0 0.0
        %3443 = vmatpush2.msra.mxu0 0.0
        %3444 = vmatprep.subr.mxu0 0.0
        %3445 = vmatpush2.msra.mxu0 0.0
        %3446 = vmatprep.subr.mxu0 0.0
        %3447 = vmatpush2.msra.mxu0 0.0
        %3448 = vmatprep.mubr.f32.mxu0 0.0
        %3449 = vmatmul.mubr.f32.gmra.mxu0 %v3382
        %v3450 = vpop.f32.mrf.mxu0
        %v3451 = vadd.f32 0.0, %v3450
        %v3452 = vpop.f32.mrf.mxu0
        %3453 = vdwg.mxu0
        %s3454 = scalar_lea.vmem [#allocation11], 64
        %v3455 = vld [vmem:[%s3454] sm:$0xff]
        %v3456 = vld [vmem:[%s3454 + $0x8] sm:$0xff]
        %v3457 = vld [vmem:[%s3454 + $0x10] sm:$0xff]
        %v3458 = vld [vmem:[%s3454 + $0x18] sm:$0xff]
        %v3460 = vsel %vm432, %v3232, 0
        %v3463 = vsel %vm432, %v3305, 0
        %v3466 = vsel %vm432, %v3378, 0
        %v3469 = vsel %vm432, %v3451, 0
        %3471 = vmatprep.subr.mxu0 0.0
        %3472 = vmatpush1.msra.mxu0 0.0
        %3473 = vmatprep.subr.mxu0 0.0
        %3474 = vmatpush1.msra.mxu0 0.0
        %3475 = vmatprep.subr.mxu0 0.0
        %3476 = vmatpush1.msra.mxu0 0.0
        %3477 = vmatprep.subr.mxu0 0.0
        %3478 = vmatpush1.msra.mxu0 0.0
        %3479 = vmatprep.subr.mxu0 0.0
        %3480 = vmatpush1.msra.mxu0 0.0
        %3481 = vmatprep.subr.mxu0 0.0
        %3482 = vmatpush1.msra.mxu0 0.0
        %3483 = vmatprep.subr.mxu0 0.0
        %3484 = vmatpush1.msra.mxu0 0.0
        %3485 = vmatprep.subr.mxu0 0.0
        %3486 = vmatpush1.msra.mxu0 0.0
        %3487 = vmatprep.subr.mxu0 0.0
        %3488 = vmatpush1.msra.mxu0 0.0
        %3489 = vmatprep.subr.mxu0 0.0
        %3490 = vmatpush1.msra.mxu0 0.0
        %3491 = vmatprep.subr.mxu0 0.0
        %3492 = vmatpush1.msra.mxu0 0.0
        %3493 = vmatprep.subr.mxu0 0.0
        %3494 = vmatpush1.msra.mxu0 0.0
        %3495 = vmatprep.subr.mxu0 0.0
        %3496 = vmatpush1.msra.mxu0 %v3458
        %3497 = vmatprep.subr.mxu0 0.0
        %3498 = vmatpush1.msra.mxu0 %v3457
        %3499 = vmatprep.subr.mxu0 0.0
        %3500 = vmatpush1.msra.mxu0 %v3456
        %3501 = vmatprep.subr.mxu0 0.0
        %3502 = vmatpush1.msra.mxu0 %v3455
        %3503 = vmatprep.subr.mxu0 0.0
        %3504 = vmatpush2.msra.mxu0 0.0
        %3505 = vmatprep.subr.mxu0 0.0
        %3506 = vmatpush2.msra.mxu0 0.0
        %3507 = vmatprep.subr.mxu0 0.0
        %3508 = vmatpush2.msra.mxu0 0.0
        %3509 = vmatprep.subr.mxu0 0.0
        %3510 = vmatpush2.msra.mxu0 0.0
        %3511 = vmatprep.subr.mxu0 0.0
        %3512 = vmatpush2.msra.mxu0 0.0
        %3513 = vmatprep.subr.mxu0 0.0
        %3514 = vmatpush2.msra.mxu0 0.0
        %3515 = vmatprep.subr.mxu0 0.0
        %3516 = vmatpush2.msra.mxu0 0.0
        %3517 = vmatprep.subr.mxu0 0.0
        %3518 = vmatpush2.msra.mxu0 0.0
        %3519 = vmatprep.subr.mxu0 0.0
        %3520 = vmatpush2.msra.mxu0 0.0
        %3521 = vmatprep.subr.mxu0 0.0
        %3522 = vmatpush2.msra.mxu0 0.0
        %3523 = vmatprep.subr.mxu0 0.0
        %3524 = vmatpush2.msra.mxu0 0.0
        %3525 = vmatprep.subr.mxu0 0.0
        %3526 = vmatpush2.msra.mxu0 0.0
        %3527 = vmatprep.subr.mxu0 0.0
        %3528 = vmatpush2.msra.mxu0 0.0
        %3529 = vmatprep.subr.mxu0 0.0
        %3530 = vmatpush2.msra.mxu0 0.0
        %3531 = vmatprep.subr.mxu0 0.0
        %3532 = vmatpush2.msra.mxu0 0.0
        %3533 = vmatprep.subr.mxu0 0.0
        %3534 = vmatpush2.msra.mxu0 0.0
        %3535 = vmatprep.mubr.f32.mxu0 0.0
        %3536 = vmatmul.mubr.f32.gmra.mxu0 %v3460
        %v3537 = vpop.f32.mrf.mxu0
        %v3538 = vadd.f32 0.0, %v3537
        %v3539 = vpop.f32.mrf.mxu0
        %3540 = vmatprep.mubr.f32.mxu0 0.0
        %3541 = vmatmul.mubr.f32.gmra.mxu0 %v3463
        %v3542 = vpop.f32.mrf.mxu0
        %v3543 = vadd.f32 0.0, %v3542
        %v3544 = vpop.f32.mrf.mxu0
        %3545 = vmatprep.mubr.f32.mxu0 0.0
        %3546 = vmatmul.mubr.f32.gmra.mxu0 %v3466
        %v3547 = vpop.f32.mrf.mxu0
        %v3548 = vadd.f32 0.0, %v3547
        %v3549 = vpop.f32.mrf.mxu0
        %3550 = vmatprep.mubr.f32.mxu0 0.0
        %3551 = vmatmul.mubr.f32.gmra.mxu0 %v3469
        %v3552 = vpop.f32.mrf.mxu0
        %v3553 = vadd.f32 0.0, %v3552
        %v3554 = vpop.f32.mrf.mxu0
        %3555 = vdwg.mxu0
        %v3556 = vadd.f32 %v2524, %v3538
        %v3557 = vadd.f32 %v2529, %v3543
        %v3558 = vadd.f32 %v2534, %v3548
        %v3559 = vadd.f32 %v2539, %v3553
        %s3560 = scalar_lea.vmem [#allocation7], 96
        %v3561 = vld [vmem:[%s3560] sm:$0xff]
        %v3562 = vld [vmem:[%s3560 + $0x8] sm:$0xff]
        %v3563 = vld [vmem:[%s3560 + $0x10] sm:$0xff]
        %v3564 = vld [vmem:[%s3560 + $0x18] sm:$0xff]
        %3565 = vmatprep.subr.mxu0 0.0
        %3566 = vmatpush1.msra.mxu0 0.0
        %3567 = vmatprep.subr.mxu0 0.0
        %3568 = vmatpush1.msra.mxu0 0.0
        %3569 = vmatprep.subr.mxu0 0.0
        %3570 = vmatpush1.msra.mxu0 0.0
        %3571 = vmatprep.subr.mxu0 0.0
        %3572 = vmatpush1.msra.mxu0 0.0
        %3573 = vmatprep.subr.mxu0 0.0
        %3574 = vmatpush1.msra.mxu0 0.0
        %3575 = vmatprep.subr.mxu0 0.0
        %3576 = vmatpush1.msra.mxu0 0.0
        %3577 = vmatprep.subr.mxu0 0.0
        %3578 = vmatpush1.msra.mxu0 0.0
        %3579 = vmatprep.subr.mxu0 0.0
        %3580 = vmatpush1.msra.mxu0 0.0
        %3581 = vmatprep.subr.mxu0 0.0
        %3582 = vmatpush1.msra.mxu0 0.0
        %3583 = vmatprep.subr.mxu0 0.0
        %3584 = vmatpush1.msra.mxu0 0.0
        %3585 = vmatprep.subr.mxu0 0.0
        %3586 = vmatpush1.msra.mxu0 0.0
        %3587 = vmatprep.subr.mxu0 0.0
        %3588 = vmatpush1.msra.mxu0 0.0
        %3589 = vmatprep.subr.mxu0 0.0
        %3590 = vmatpush1.msra.mxu0 %v3564
        %3591 = vmatprep.subr.mxu0 0.0
        %3592 = vmatpush1.msra.mxu0 %v3563
        %3593 = vmatprep.subr.mxu0 0.0
        %3594 = vmatpush1.msra.mxu0 %v3562
        %3595 = vmatprep.subr.mxu0 0.0
        %3596 = vmatpush1.msra.mxu0 %v3561
        %3597 = vmatprep.subr.mxu0 0.0
        %3598 = vmatpush2.msra.mxu0 0.0
        %3599 = vmatprep.subr.mxu0 0.0
        %3600 = vmatpush2.msra.mxu0 0.0
        %3601 = vmatprep.subr.mxu0 0.0
        %3602 = vmatpush2.msra.mxu0 0.0
        %3603 = vmatprep.subr.mxu0 0.0
        %3604 = vmatpush2.msra.mxu0 0.0
        %3605 = vmatprep.subr.mxu0 0.0
        %3606 = vmatpush2.msra.mxu0 0.0
        %3607 = vmatprep.subr.mxu0 0.0
        %3608 = vmatpush2.msra.mxu0 0.0
        %3609 = vmatprep.subr.mxu0 0.0
        %3610 = vmatpush2.msra.mxu0 0.0
        %3611 = vmatprep.subr.mxu0 0.0
        %3612 = vmatpush2.msra.mxu0 0.0
        %3613 = vmatprep.subr.mxu0 0.0
        %3614 = vmatpush2.msra.mxu0 0.0
        %3615 = vmatprep.subr.mxu0 0.0
        %3616 = vmatpush2.msra.mxu0 0.0
        %3617 = vmatprep.subr.mxu0 0.0
        %3618 = vmatpush2.msra.mxu0 0.0
        %3619 = vmatprep.subr.mxu0 0.0
        %3620 = vmatpush2.msra.mxu0 0.0
        %3621 = vmatprep.subr.mxu0 0.0
        %3622 = vmatpush2.msra.mxu0 0.0
        %3623 = vmatprep.subr.mxu0 0.0
        %3624 = vmatpush2.msra.mxu0 0.0
        %3625 = vmatprep.subr.mxu0 0.0
        %3626 = vmatpush2.msra.mxu0 0.0
        %3627 = vmatprep.subr.mxu0 0.0
        %3628 = vmatpush2.msra.mxu0 0.0
        %3629 = vmatprep.mubr.f32.mxu0 0.0
        %3630 = vmatmul.mubr.f32.gmra.mxu0 %v511
        %v3631 = vpop.f32.mrf.mxu0
        %v3632 = vadd.f32 0.0, %v3631
        %v3633 = vpop.f32.mrf.mxu0
        %3634 = vmatprep.mubr.f32.mxu0 0.0
        %3635 = vmatmul.mubr.f32.gmra.mxu0 %v514
        %v3636 = vpop.f32.mrf.mxu0
        %v3637 = vadd.f32 0.0, %v3636
        %v3638 = vpop.f32.mrf.mxu0
        %3639 = vmatprep.mubr.f32.mxu0 0.0
        %3640 = vmatmul.mubr.f32.gmra.mxu0 %v517
        %v3641 = vpop.f32.mrf.mxu0
        %v3642 = vadd.f32 0.0, %v3641
        %v3643 = vpop.f32.mrf.mxu0
        %3644 = vmatprep.mubr.f32.mxu0 0.0
        %3645 = vmatmul.mubr.f32.gmra.mxu0 %v520
        %v3646 = vpop.f32.mrf.mxu0
        %v3647 = vadd.f32 0.0, %v3646
        %v3648 = vpop.f32.mrf.mxu0
        %3649 = vdwg.mxu0
        %s3650 = scalar_lea.vmem [#allocation8], 96
        %v3651 = vld [vmem:[%s3650] sm:$0xff]
        %v3652 = vld [vmem:[%s3650 + $0x8] sm:$0xff]
        %v3653 = vld [vmem:[%s3650 + $0x10] sm:$0xff]
        %v3654 = vld [vmem:[%s3650 + $0x18] sm:$0xff]
        %3655 = vmatprep.subr.mxu0 0.0
        %3656 = vmatpush1.msra.mxu0 0.0
        %3657 = vmatprep.subr.mxu0 0.0
        %3658 = vmatpush1.msra.mxu0 0.0
        %3659 = vmatprep.subr.mxu0 0.0
        %3660 = vmatpush1.msra.mxu0 0.0
        %3661 = vmatprep.subr.mxu0 0.0
        %3662 = vmatpush1.msra.mxu0 0.0
        %3663 = vmatprep.subr.mxu0 0.0
        %3664 = vmatpush1.msra.mxu0 0.0
        %3665 = vmatprep.subr.mxu0 0.0
        %3666 = vmatpush1.msra.mxu0 0.0
        %3667 = vmatprep.subr.mxu0 0.0
        %3668 = vmatpush1.msra.mxu0 0.0
        %3669 = vmatprep.subr.mxu0 0.0
        %3670 = vmatpush1.msra.mxu0 0.0
        %3671 = vmatprep.subr.mxu0 0.0
        %3672 = vmatpush1.msra.mxu0 0.0
        %3673 = vmatprep.subr.mxu0 0.0
        %3674 = vmatpush1.msra.mxu0 0.0
        %3675 = vmatprep.subr.mxu0 0.0
        %3676 = vmatpush1.msra.mxu0 0.0
        %3677 = vmatprep.subr.mxu0 0.0
        %3678 = vmatpush1.msra.mxu0 0.0
        %3679 = vmatprep.subr.mxu0 0.0
        %3680 = vmatpush1.msra.mxu0 %v3654
        %3681 = vmatprep.subr.mxu0 0.0
        %3682 = vmatpush1.msra.mxu0 %v3653
        %3683 = vmatprep.subr.mxu0 0.0
        %3684 = vmatpush1.msra.mxu0 %v3652
        %3685 = vmatprep.subr.mxu0 0.0
        %3686 = vmatpush1.msra.mxu0 %v3651
        %3687 = vmatprep.subr.mxu0 0.0
        %3688 = vmatpush2.msra.mxu0 0.0
        %3689 = vmatprep.subr.mxu0 0.0
        %3690 = vmatpush2.msra.mxu0 0.0
        %3691 = vmatprep.subr.mxu0 0.0
        %3692 = vmatpush2.msra.mxu0 0.0
        %3693 = vmatprep.subr.mxu0 0.0
        %3694 = vmatpush2.msra.mxu0 0.0
        %3695 = vmatprep.subr.mxu0 0.0
        %3696 = vmatpush2.msra.mxu0 0.0
        %3697 = vmatprep.subr.mxu0 0.0
        %3698 = vmatpush2.msra.mxu0 0.0
        %3699 = vmatprep.subr.mxu0 0.0
        %3700 = vmatpush2.msra.mxu0 0.0
        %3701 = vmatprep.subr.mxu0 0.0
        %3702 = vmatpush2.msra.mxu0 0.0
        %3703 = vmatprep.subr.mxu0 0.0
        %3704 = vmatpush2.msra.mxu0 0.0
        %3705 = vmatprep.subr.mxu0 0.0
        %3706 = vmatpush2.msra.mxu0 0.0
        %3707 = vmatprep.subr.mxu0 0.0
        %3708 = vmatpush2.msra.mxu0 0.0
        %3709 = vmatprep.subr.mxu0 0.0
        %3710 = vmatpush2.msra.mxu0 0.0
        %3711 = vmatprep.subr.mxu0 0.0
        %3712 = vmatpush2.msra.mxu0 0.0
        %3713 = vmatprep.subr.mxu0 0.0
        %3714 = vmatpush2.msra.mxu0 0.0
        %3715 = vmatprep.subr.mxu0 0.0
        %3716 = vmatpush2.msra.mxu0 0.0
        %3717 = vmatprep.subr.mxu0 0.0
        %3718 = vmatpush2.msra.mxu0 0.0
        %3719 = vmatprep.mubr.f32.mxu0 0.0
        %3720 = vmatmul.mubr.f32.gmra.mxu0 %v511
        %v3721 = vpop.f32.mrf.mxu0
        %v3722 = vadd.f32 0.0, %v3721
        %v3723 = vpop.f32.mrf.mxu0
        %3724 = vmatprep.mubr.f32.mxu0 0.0
        %3725 = vmatmul.mubr.f32.gmra.mxu0 %v514
        %v3726 = vpop.f32.mrf.mxu0
        %v3727 = vadd.f32 0.0, %v3726
        %v3728 = vpop.f32.mrf.mxu0
        %3729 = vmatprep.mubr.f32.mxu0 0.0
        %3730 = vmatmul.mubr.f32.gmra.mxu0 %v517
        %v3731 = vpop.f32.mrf.mxu0
        %v3732 = vadd.f32 0.0, %v3731
        %v3733 = vpop.f32.mrf.mxu0
        %3734 = vmatprep.mubr.f32.mxu0 0.0
        %3735 = vmatmul.mubr.f32.gmra.mxu0 %v520
        %v3736 = vpop.f32.mrf.mxu0
        %v3737 = vadd.f32 0.0, %v3736
        %v3738 = vpop.f32.mrf.mxu0
        %3739 = vdwg.mxu0
        %s3740 = scalar_lea.vmem [#allocation10], 96
        %v3741 = vld [vmem:[%s3740] sm:$0xff]
        %v3742 = vld [vmem:[%s3740 + $0x8] sm:$0xff]
        %v3743 = vld [vmem:[%s3740 + $0x10] sm:$0xff]
        %v3744 = vld [vmem:[%s3740 + $0x18] sm:$0xff]
        %3745 = vmatprep.subr.mxu0 0.0
        %3746 = vmatpush1.msra.mxu0 0.0
        %3747 = vmatprep.subr.mxu0 0.0
        %3748 = vmatpush1.msra.mxu0 0.0
        %3749 = vmatprep.subr.mxu0 0.0
        %3750 = vmatpush1.msra.mxu0 0.0
        %3751 = vmatprep.subr.mxu0 0.0
        %3752 = vmatpush1.msra.mxu0 0.0
        %3753 = vmatprep.subr.mxu0 0.0
        %3754 = vmatpush1.msra.mxu0 0.0
        %3755 = vmatprep.subr.mxu0 0.0
        %3756 = vmatpush1.msra.mxu0 0.0
        %3757 = vmatprep.subr.mxu0 0.0
        %3758 = vmatpush1.msra.mxu0 0.0
        %3759 = vmatprep.subr.mxu0 0.0
        %3760 = vmatpush1.msra.mxu0 0.0
        %3761 = vmatprep.subr.mxu0 0.0
        %3762 = vmatpush1.msra.mxu0 0.0
        %3763 = vmatprep.subr.mxu0 0.0
        %3764 = vmatpush1.msra.mxu0 0.0
        %3765 = vmatprep.subr.mxu0 0.0
        %3766 = vmatpush1.msra.mxu0 0.0
        %3767 = vmatprep.subr.mxu0 0.0
        %3768 = vmatpush1.msra.mxu0 0.0
        %3769 = vmatprep.subr.mxu0 0.0
        %3770 = vmatpush1.msra.mxu0 %v3744
        %3771 = vmatprep.subr.mxu0 0.0
        %3772 = vmatpush1.msra.mxu0 %v3743
        %3773 = vmatprep.subr.mxu0 0.0
        %3774 = vmatpush1.msra.mxu0 %v3742
        %3775 = vmatprep.subr.mxu0 0.0
        %3776 = vmatpush1.msra.mxu0 %v3741
        %3777 = vmatprep.subr.mxu0 0.0
        %3778 = vmatpush2.msra.mxu0 0.0
        %3779 = vmatprep.subr.mxu0 0.0
        %3780 = vmatpush2.msra.mxu0 0.0
        %3781 = vmatprep.subr.mxu0 0.0
        %3782 = vmatpush2.msra.mxu0 0.0
        %3783 = vmatprep.subr.mxu0 0.0
        %3784 = vmatpush2.msra.mxu0 0.0
        %3785 = vmatprep.subr.mxu0 0.0
        %3786 = vmatpush2.msra.mxu0 0.0
        %3787 = vmatprep.subr.mxu0 0.0
        %3788 = vmatpush2.msra.mxu0 0.0
        %3789 = vmatprep.subr.mxu0 0.0
        %3790 = vmatpush2.msra.mxu0 0.0
        %3791 = vmatprep.subr.mxu0 0.0
        %3792 = vmatpush2.msra.mxu0 0.0
        %3793 = vmatprep.subr.mxu0 0.0
        %3794 = vmatpush2.msra.mxu0 0.0
        %3795 = vmatprep.subr.mxu0 0.0
        %3796 = vmatpush2.msra.mxu0 0.0
        %3797 = vmatprep.subr.mxu0 0.0
        %3798 = vmatpush2.msra.mxu0 0.0
        %3799 = vmatprep.subr.mxu0 0.0
        %3800 = vmatpush2.msra.mxu0 0.0
        %3801 = vmatprep.subr.mxu0 0.0
        %3802 = vmatpush2.msra.mxu0 0.0
        %3803 = vmatprep.subr.mxu0 0.0
        %3804 = vmatpush2.msra.mxu0 0.0
        %3805 = vmatprep.subr.mxu0 0.0
        %3806 = vmatpush2.msra.mxu0 0.0
        %3807 = vmatprep.subr.mxu0 0.0
        %3808 = vmatpush2.msra.mxu0 0.0
        %3809 = vmatprep.mubr.f32.mxu0 0.0
        %3810 = vmatmul.mubr.f32.gmra.mxu0 %v511
        %v3811 = vpop.f32.mrf.mxu0
        %v3812 = vadd.f32 0.0, %v3811
        %v3813 = vpop.f32.mrf.mxu0
        %3814 = vmatprep.mubr.f32.mxu0 0.0
        %3815 = vmatmul.mubr.f32.gmra.mxu0 %v514
        %v3816 = vpop.f32.mrf.mxu0
        %v3817 = vadd.f32 0.0, %v3816
        %v3818 = vpop.f32.mrf.mxu0
        %3819 = vmatprep.mubr.f32.mxu0 0.0
        %3820 = vmatmul.mubr.f32.gmra.mxu0 %v517
        %v3821 = vpop.f32.mrf.mxu0
        %v3822 = vadd.f32 0.0, %v3821
        %v3823 = vpop.f32.mrf.mxu0
        %3824 = vmatprep.mubr.f32.mxu0 0.0
        %3825 = vmatmul.mubr.f32.gmra.mxu0 %v520
        %v3826 = vpop.f32.mrf.mxu0
        %v3827 = vadd.f32 0.0, %v3826
        %v3828 = vpop.f32.mrf.mxu0
        %3829 = vdwg.mxu0
        %s3830 = scalar_lea.vmem [#allocation5], 24
        %v3831 = vld [vmem:[%s3830] sm:$0xff]
        %v3833 = vsel %vm432, %v3632, 0
        %v3836 = vsel %vm432, %v3722, 0
        %3838 = vmatprep.subr.mxu0 0.0
        %3839 = vmatpush1.xpose.msra.mxu0 0.0
        %3840 = vmatprep.subr.mxu0 0.0
        %3841 = vmatpush1.xpose.msra.mxu0 0.0
        %3842 = vmatprep.subr.mxu0 0.0
        %3843 = vmatpush1.xpose.msra.mxu0 0.0
        %3844 = vmatprep.subr.mxu0 0.0
        %3845 = vmatpush1.xpose.msra.mxu0 0.0
        %3846 = vmatprep.subr.mxu0 0.0
        %3847 = vmatpush1.xpose.msra.mxu0 0.0
        %3848 = vmatprep.subr.mxu0 0.0
        %3849 = vmatpush1.xpose.msra.mxu0 0.0
        %3850 = vmatprep.subr.mxu0 0.0
        %3851 = vmatpush1.xpose.msra.mxu0 0.0
        %3852 = vmatprep.subr.mxu0 0.0
        %3853 = vmatpush1.xpose.msra.mxu0 0.0
        %3854 = vmatprep.subr.mxu0 0.0
        %3855 = vmatpush1.xpose.msra.mxu0 0.0
        %3856 = vmatprep.subr.mxu0 0.0
        %3857 = vmatpush1.xpose.msra.mxu0 0.0
        %3858 = vmatprep.subr.mxu0 0.0
        %3859 = vmatpush1.xpose.msra.mxu0 0.0
        %3860 = vmatprep.subr.mxu0 0.0
        %3861 = vmatpush1.xpose.msra.mxu0 0.0
        %3862 = vmatprep.subr.mxu0 0.0
        %3863 = vmatpush1.xpose.msra.mxu0 0.0
        %3864 = vmatprep.subr.mxu0 0.0
        %3865 = vmatpush1.xpose.msra.mxu0 0.0
        %3866 = vmatprep.subr.mxu0 0.0
        %3867 = vmatpush1.xpose.msra.mxu0 0.0
        %3868 = vmatprep.subr.mxu0 0.0
        %3869 = vmatpush1.xpose.msra.mxu0 %v3836
        %3870 = vmatprep.subr.mxu0 0.0
        %3871 = vmatpush2.xpose.msra.mxu0 0.0
        %3872 = vmatprep.subr.mxu0 0.0
        %3873 = vmatpush2.xpose.msra.mxu0 0.0
        %3874 = vmatprep.subr.mxu0 0.0
        %3875 = vmatpush2.xpose.msra.mxu0 0.0
        %3876 = vmatprep.subr.mxu0 0.0
        %3877 = vmatpush2.xpose.msra.mxu0 0.0
        %3878 = vmatprep.subr.mxu0 0.0
        %3879 = vmatpush2.xpose.msra.mxu0 0.0
        %3880 = vmatprep.subr.mxu0 0.0
        %3881 = vmatpush2.xpose.msra.mxu0 0.0
        %3882 = vmatprep.subr.mxu0 0.0
        %3883 = vmatpush2.xpose.msra.mxu0 0.0
        %3884 = vmatprep.subr.mxu0 0.0
        %3885 = vmatpush2.xpose.msra.mxu0 0.0
        %3886 = vmatprep.subr.mxu0 0.0
        %3887 = vmatpush2.xpose.msra.mxu0 0.0
        %3888 = vmatprep.subr.mxu0 0.0
        %3889 = vmatpush2.xpose.msra.mxu0 0.0
        %3890 = vmatprep.subr.mxu0 0.0
        %3891 = vmatpush2.xpose.msra.mxu0 0.0
        %3892 = vmatprep.subr.mxu0 0.0
        %3893 = vmatpush2.xpose.msra.mxu0 0.0
        %3894 = vmatprep.subr.mxu0 0.0
        %3895 = vmatpush2.xpose.msra.mxu0 0.0
        %3896 = vmatprep.subr.mxu0 0.0
        %3897 = vmatpush2.xpose.msra.mxu0 0.0
        %3898 = vmatprep.subr.mxu0 0.0
        %3899 = vmatpush2.xpose.msra.mxu0 0.0
        %3900 = vmatprep.subr.mxu0 0.0
        %3901 = vmatpush2.xpose.msra.mxu0 0.0
        %3902 = vmatprep.mubr.f32.mxu0 0.0
        %3903 = vmatmul.mubr.f32.gmra.mxu0 %v3833
        %v3904 = vpop.f32.mrf.mxu0
        %v3905 = vadd.f32 %v3831, %v3904
        %v3906 = vpop.f32.mrf.mxu0
        %3907 = vdwg.mxu0
        %v3909 = vsel %vm432, %v3637, 0
        %v3912 = vsel %vm432, %v3727, 0
        %3914 = vmatprep.subr.mxu0 0.0
        %3915 = vmatpush1.xpose.msra.mxu0 0.0
        %3916 = vmatprep.subr.mxu0 0.0
        %3917 = vmatpush1.xpose.msra.mxu0 0.0
        %3918 = vmatprep.subr.mxu0 0.0
        %3919 = vmatpush1.xpose.msra.mxu0 0.0
        %3920 = vmatprep.subr.mxu0 0.0
        %3921 = vmatpush1.xpose.msra.mxu0 0.0
        %3922 = vmatprep.subr.mxu0 0.0
        %3923 = vmatpush1.xpose.msra.mxu0 0.0
        %3924 = vmatprep.subr.mxu0 0.0
        %3925 = vmatpush1.xpose.msra.mxu0 0.0
        %3926 = vmatprep.subr.mxu0 0.0
        %3927 = vmatpush1.xpose.msra.mxu0 0.0
        %3928 = vmatprep.subr.mxu0 0.0
        %3929 = vmatpush1.xpose.msra.mxu0 0.0
        %3930 = vmatprep.subr.mxu0 0.0
        %3931 = vmatpush1.xpose.msra.mxu0 0.0
        %3932 = vmatprep.subr.mxu0 0.0
        %3933 = vmatpush1.xpose.msra.mxu0 0.0
        %3934 = vmatprep.subr.mxu0 0.0
        %3935 = vmatpush1.xpose.msra.mxu0 0.0
        %3936 = vmatprep.subr.mxu0 0.0
        %3937 = vmatpush1.xpose.msra.mxu0 0.0
        %3938 = vmatprep.subr.mxu0 0.0
        %3939 = vmatpush1.xpose.msra.mxu0 0.0
        %3940 = vmatprep.subr.mxu0 0.0
        %3941 = vmatpush1.xpose.msra.mxu0 0.0
        %3942 = vmatprep.subr.mxu0 0.0
        %3943 = vmatpush1.xpose.msra.mxu0 0.0
        %3944 = vmatprep.subr.mxu0 0.0
        %3945 = vmatpush1.xpose.msra.mxu0 %v3912
        %3946 = vmatprep.subr.mxu0 0.0
        %3947 = vmatpush2.xpose.msra.mxu0 0.0
        %3948 = vmatprep.subr.mxu0 0.0
        %3949 = vmatpush2.xpose.msra.mxu0 0.0
        %3950 = vmatprep.subr.mxu0 0.0
        %3951 = vmatpush2.xpose.msra.mxu0 0.0
        %3952 = vmatprep.subr.mxu0 0.0
        %3953 = vmatpush2.xpose.msra.mxu0 0.0
        %3954 = vmatprep.subr.mxu0 0.0
        %3955 = vmatpush2.xpose.msra.mxu0 0.0
        %3956 = vmatprep.subr.mxu0 0.0
        %3957 = vmatpush2.xpose.msra.mxu0 0.0
        %3958 = vmatprep.subr.mxu0 0.0
        %3959 = vmatpush2.xpose.msra.mxu0 0.0
        %3960 = vmatprep.subr.mxu0 0.0
        %3961 = vmatpush2.xpose.msra.mxu0 0.0
        %3962 = vmatprep.subr.mxu0 0.0
        %3963 = vmatpush2.xpose.msra.mxu0 0.0
        %3964 = vmatprep.subr.mxu0 0.0
        %3965 = vmatpush2.xpose.msra.mxu0 0.0
        %3966 = vmatprep.subr.mxu0 0.0
        %3967 = vmatpush2.xpose.msra.mxu0 0.0
        %3968 = vmatprep.subr.mxu0 0.0
        %3969 = vmatpush2.xpose.msra.mxu0 0.0
        %3970 = vmatprep.subr.mxu0 0.0
        %3971 = vmatpush2.xpose.msra.mxu0 0.0
        %3972 = vmatprep.subr.mxu0 0.0
        %3973 = vmatpush2.xpose.msra.mxu0 0.0
        %3974 = vmatprep.subr.mxu0 0.0
        %3975 = vmatpush2.xpose.msra.mxu0 0.0
        %3976 = vmatprep.subr.mxu0 0.0
        %3977 = vmatpush2.xpose.msra.mxu0 0.0
        %3978 = vmatprep.mubr.f32.mxu0 0.0
        %3979 = vmatmul.mubr.f32.gmra.mxu0 %v3909
        %v3980 = vpop.f32.mrf.mxu0
        %v3981 = vadd.f32 %v3831, %v3980
        %v3982 = vpop.f32.mrf.mxu0
        %3983 = vdwg.mxu0
        %v3985 = vsel %vm432, %v3642, 0
        %v3988 = vsel %vm432, %v3732, 0
        %3990 = vmatprep.subr.mxu0 0.0
        %3991 = vmatpush1.xpose.msra.mxu0 0.0
        %3992 = vmatprep.subr.mxu0 0.0
        %3993 = vmatpush1.xpose.msra.mxu0 0.0
        %3994 = vmatprep.subr.mxu0 0.0
        %3995 = vmatpush1.xpose.msra.mxu0 0.0
        %3996 = vmatprep.subr.mxu0 0.0
        %3997 = vmatpush1.xpose.msra.mxu0 0.0
        %3998 = vmatprep.subr.mxu0 0.0
        %3999 = vmatpush1.xpose.msra.mxu0 0.0
        %4000 = vmatprep.subr.mxu0 0.0
        %4001 = vmatpush1.xpose.msra.mxu0 0.0
        %4002 = vmatprep.subr.mxu0 0.0
        %4003 = vmatpush1.xpose.msra.mxu0 0.0
        %4004 = vmatprep.subr.mxu0 0.0
        %4005 = vmatpush1.xpose.msra.mxu0 0.0
        %4006 = vmatprep.subr.mxu0 0.0
        %4007 = vmatpush1.xpose.msra.mxu0 0.0
        %4008 = vmatprep.subr.mxu0 0.0
        %4009 = vmatpush1.xpose.msra.mxu0 0.0
        %4010 = vmatprep.subr.mxu0 0.0
        %4011 = vmatpush1.xpose.msra.mxu0 0.0
        %4012 = vmatprep.subr.mxu0 0.0
        %4013 = vmatpush1.xpose.msra.mxu0 0.0
        %4014 = vmatprep.subr.mxu0 0.0
        %4015 = vmatpush1.xpose.msra.mxu0 0.0
        %4016 = vmatprep.subr.mxu0 0.0
        %4017 = vmatpush1.xpose.msra.mxu0 0.0
        %4018 = vmatprep.subr.mxu0 0.0
        %4019 = vmatpush1.xpose.msra.mxu0 0.0
        %4020 = vmatprep.subr.mxu0 0.0
        %4021 = vmatpush1.xpose.msra.mxu0 %v3988
        %4022 = vmatprep.subr.mxu0 0.0
        %4023 = vmatpush2.xpose.msra.mxu0 0.0
        %4024 = vmatprep.subr.mxu0 0.0
        %4025 = vmatpush2.xpose.msra.mxu0 0.0
        %4026 = vmatprep.subr.mxu0 0.0
        %4027 = vmatpush2.xpose.msra.mxu0 0.0
        %4028 = vmatprep.subr.mxu0 0.0
        %4029 = vmatpush2.xpose.msra.mxu0 0.0
        %4030 = vmatprep.subr.mxu0 0.0
        %4031 = vmatpush2.xpose.msra.mxu0 0.0
        %4032 = vmatprep.subr.mxu0 0.0
        %4033 = vmatpush2.xpose.msra.mxu0 0.0
        %4034 = vmatprep.subr.mxu0 0.0
        %4035 = vmatpush2.xpose.msra.mxu0 0.0
        %4036 = vmatprep.subr.mxu0 0.0
        %4037 = vmatpush2.xpose.msra.mxu0 0.0
        %4038 = vmatprep.subr.mxu0 0.0
        %4039 = vmatpush2.xpose.msra.mxu0 0.0
        %4040 = vmatprep.subr.mxu0 0.0
        %4041 = vmatpush2.xpose.msra.mxu0 0.0
        %4042 = vmatprep.subr.mxu0 0.0
        %4043 = vmatpush2.xpose.msra.mxu0 0.0
        %4044 = vmatprep.subr.mxu0 0.0
        %4045 = vmatpush2.xpose.msra.mxu0 0.0
        %4046 = vmatprep.subr.mxu0 0.0
        %4047 = vmatpush2.xpose.msra.mxu0 0.0
        %4048 = vmatprep.subr.mxu0 0.0
        %4049 = vmatpush2.xpose.msra.mxu0 0.0
        %4050 = vmatprep.subr.mxu0 0.0
        %4051 = vmatpush2.xpose.msra.mxu0 0.0
        %4052 = vmatprep.subr.mxu0 0.0
        %4053 = vmatpush2.xpose.msra.mxu0 0.0
        %4054 = vmatprep.mubr.f32.mxu0 0.0
        %4055 = vmatmul.mubr.f32.gmra.mxu0 %v3985
        %v4056 = vpop.f32.mrf.mxu0
        %v4057 = vadd.f32 %v3831, %v4056
        %v4058 = vpop.f32.mrf.mxu0
        %4059 = vdwg.mxu0
        %v4061 = vsel %vm432, %v3647, 0
        %v4064 = vsel %vm432, %v3737, 0
        %4066 = vmatprep.subr.mxu0 0.0
        %4067 = vmatpush1.xpose.msra.mxu0 0.0
        %4068 = vmatprep.subr.mxu0 0.0
        %4069 = vmatpush1.xpose.msra.mxu0 0.0
        %4070 = vmatprep.subr.mxu0 0.0
        %4071 = vmatpush1.xpose.msra.mxu0 0.0
        %4072 = vmatprep.subr.mxu0 0.0
        %4073 = vmatpush1.xpose.msra.mxu0 0.0
        %4074 = vmatprep.subr.mxu0 0.0
        %4075 = vmatpush1.xpose.msra.mxu0 0.0
        %4076 = vmatprep.subr.mxu0 0.0
        %4077 = vmatpush1.xpose.msra.mxu0 0.0
        %4078 = vmatprep.subr.mxu0 0.0
        %4079 = vmatpush1.xpose.msra.mxu0 0.0
        %4080 = vmatprep.subr.mxu0 0.0
        %4081 = vmatpush1.xpose.msra.mxu0 0.0
        %4082 = vmatprep.subr.mxu0 0.0
        %4083 = vmatpush1.xpose.msra.mxu0 0.0
        %4084 = vmatprep.subr.mxu0 0.0
        %4085 = vmatpush1.xpose.msra.mxu0 0.0
        %4086 = vmatprep.subr.mxu0 0.0
        %4087 = vmatpush1.xpose.msra.mxu0 0.0
        %4088 = vmatprep.subr.mxu0 0.0
        %4089 = vmatpush1.xpose.msra.mxu0 0.0
        %4090 = vmatprep.subr.mxu0 0.0
        %4091 = vmatpush1.xpose.msra.mxu0 0.0
        %4092 = vmatprep.subr.mxu0 0.0
        %4093 = vmatpush1.xpose.msra.mxu0 0.0
        %4094 = vmatprep.subr.mxu0 0.0
        %4095 = vmatpush1.xpose.msra.mxu0 0.0
        %4096 = vmatprep.subr.mxu0 0.0
        %4097 = vmatpush1.xpose.msra.mxu0 %v4064
        %4098 = vmatprep.subr.mxu0 0.0
        %4099 = vmatpush2.xpose.msra.mxu0 0.0
        %4100 = vmatprep.subr.mxu0 0.0
        %4101 = vmatpush2.xpose.msra.mxu0 0.0
        %4102 = vmatprep.subr.mxu0 0.0
        %4103 = vmatpush2.xpose.msra.mxu0 0.0
        %4104 = vmatprep.subr.mxu0 0.0
        %4105 = vmatpush2.xpose.msra.mxu0 0.0
        %4106 = vmatprep.subr.mxu0 0.0
        %4107 = vmatpush2.xpose.msra.mxu0 0.0
        %4108 = vmatprep.subr.mxu0 0.0
        %4109 = vmatpush2.xpose.msra.mxu0 0.0
        %4110 = vmatprep.subr.mxu0 0.0
        %4111 = vmatpush2.xpose.msra.mxu0 0.0
        %4112 = vmatprep.subr.mxu0 0.0
        %4113 = vmatpush2.xpose.msra.mxu0 0.0
        %4114 = vmatprep.subr.mxu0 0.0
        %4115 = vmatpush2.xpose.msra.mxu0 0.0
        %4116 = vmatprep.subr.mxu0 0.0
        %4117 = vmatpush2.xpose.msra.mxu0 0.0
        %4118 = vmatprep.subr.mxu0 0.0
        %4119 = vmatpush2.xpose.msra.mxu0 0.0
        %4120 = vmatprep.subr.mxu0 0.0
        %4121 = vmatpush2.xpose.msra.mxu0 0.0
        %4122 = vmatprep.subr.mxu0 0.0
        %4123 = vmatpush2.xpose.msra.mxu0 0.0
        %4124 = vmatprep.subr.mxu0 0.0
        %4125 = vmatpush2.xpose.msra.mxu0 0.0
        %4126 = vmatprep.subr.mxu0 0.0
        %4127 = vmatpush2.xpose.msra.mxu0 0.0
        %4128 = vmatprep.subr.mxu0 0.0
        %4129 = vmatpush2.xpose.msra.mxu0 0.0
        %4130 = vmatprep.mubr.f32.mxu0 0.0
        %4131 = vmatmul.mubr.f32.gmra.mxu0 %v4061
        %v4132 = vpop.f32.mrf.mxu0
        %v4133 = vadd.f32 %v3831, %v4132
        %v4134 = vpop.f32.mrf.mxu0
        %4135 = vdwg.mxu0
        %v4136 = vsel %vm1090, %v3905, -inf
        %4137 = vmax.xlane.f32.xlu0 %v4136
        %v4138 = vpop.xlane.xlu0 %4137
        %v4139 = vsel %vm1090, %v3981, -inf
        %4140 = vmax.xlane.f32.xlu0 %v4139
        %v4141 = vpop.xlane.xlu0 %4140
        %v4142 = vsel %vm1090, %v4057, -inf
        %4143 = vmax.xlane.f32.xlu0 %v4142
        %v4144 = vpop.xlane.xlu0 %4143
        %v4145 = vsel %vm1090, %v4133, -inf
        %4146 = vmax.xlane.f32.xlu0 %v4145
        %v4147 = vpop.xlane.xlu0 %4146
        %v4148 = vsub.f32 %v3905, %v4138
        %v4149 = vsub.f32 %v3981, %v4141
        %v4150 = vsub.f32 %v4057, %v4144
        %v4151 = vsub.f32 %v4133, %v4147
        %v4152 = vmul.f32 %v4148, 1.442695
        %v4153 = vpow.pop %v4152
        %v4154 = vmul.f32 %v4149, 1.442695
        %v4155 = vpow.pop %v4154
        %v4156 = vmul.f32 %v4150, 1.442695
        %v4157 = vpow.pop %v4156
        %v4158 = vmul.f32 %v4151, 1.442695
        %v4159 = vpow.pop %v4158
        %v4160 = vsel %vm1090, %v4153, 0.0
        %4161 = vadd.xlane.f32.xlu0 %v4160
        %v4162 = vpop.xlane.xlu0 %4161
        %v4163 = vsel %vm1090, %v4155, 0.0
        %4164 = vadd.xlane.f32.xlu0 %v4163
        %v4165 = vpop.xlane.xlu0 %4164
        %v4166 = vsel %vm1090, %v4157, 0.0
        %4167 = vadd.xlane.f32.xlu0 %v4166
        %v4168 = vpop.xlane.xlu0 %4167
        %v4169 = vsel %vm1090, %v4159, 0.0
        %4170 = vadd.xlane.f32.xlu0 %v4169
        %v4171 = vpop.xlane.xlu0 %4170
        %v4172 = vrcp.pop %v4162
        %v4173 = vrcp.pop %v4165
        %v4174 = vrcp.pop %v4168
        %v4175 = vrcp.pop %v4171
        %v4176 = vmul.f32 %v4153, %v4172
        %v4177 = vmul.f32 %v4155, %v4173
        %v4178 = vmul.f32 %v4157, %v4174
        %v4179 = vmul.f32 %v4159, %v4175
        %v4181 = vsel %vm1090, %v4176, 0
        %4183 = vmatprep.subr.mxu0 0.0
        %4184 = vmatpush1.msra.mxu0 0.0
        %4185 = vmatprep.subr.mxu0 0.0
        %4186 = vmatpush1.msra.mxu0 0.0
        %4187 = vmatprep.subr.mxu0 0.0
        %4188 = vmatpush1.msra.mxu0 0.0
        %4189 = vmatprep.subr.mxu0 0.0
        %4190 = vmatpush1.msra.mxu0 0.0
        %4191 = vmatprep.subr.mxu0 0.0
        %4192 = vmatpush1.msra.mxu0 0.0
        %4193 = vmatprep.subr.mxu0 0.0
        %4194 = vmatpush1.msra.mxu0 0.0
        %4195 = vmatprep.subr.mxu0 0.0
        %4196 = vmatpush1.msra.mxu0 0.0
        %4197 = vmatprep.subr.mxu0 0.0
        %4198 = vmatpush1.msra.mxu0 0.0
        %4199 = vmatprep.subr.mxu0 0.0
        %4200 = vmatpush1.msra.mxu0 0.0
        %4201 = vmatprep.subr.mxu0 0.0
        %4202 = vmatpush1.msra.mxu0 0.0
        %4203 = vmatprep.subr.mxu0 0.0
        %4204 = vmatpush1.msra.mxu0 0.0
        %4205 = vmatprep.subr.mxu0 0.0
        %4206 = vmatpush1.msra.mxu0 0.0
        %4207 = vmatprep.subr.mxu0 0.0
        %4208 = vmatpush1.msra.mxu0 0.0
        %4209 = vmatprep.subr.mxu0 0.0
        %4210 = vmatpush1.msra.mxu0 0.0
        %4211 = vmatprep.subr.mxu0 0.0
        %4212 = vmatpush1.msra.mxu0 0.0
        %4213 = vmatprep.subr.mxu0 0.0
        %4214 = vmatpush1.msra.mxu0 %v3812
        %4215 = vmatprep.subr.mxu0 0.0
        %4216 = vmatpush2.msra.mxu0 0.0
        %4217 = vmatprep.subr.mxu0 0.0
        %4218 = vmatpush2.msra.mxu0 0.0
        %4219 = vmatprep.subr.mxu0 0.0
        %4220 = vmatpush2.msra.mxu0 0.0
        %4221 = vmatprep.subr.mxu0 0.0
        %4222 = vmatpush2.msra.mxu0 0.0
        %4223 = vmatprep.subr.mxu0 0.0
        %4224 = vmatpush2.msra.mxu0 0.0
        %4225 = vmatprep.subr.mxu0 0.0
        %4226 = vmatpush2.msra.mxu0 0.0
        %4227 = vmatprep.subr.mxu0 0.0
        %4228 = vmatpush2.msra.mxu0 0.0
        %4229 = vmatprep.subr.mxu0 0.0
        %4230 = vmatpush2.msra.mxu0 0.0
        %4231 = vmatprep.subr.mxu0 0.0
        %4232 = vmatpush2.msra.mxu0 0.0
        %4233 = vmatprep.subr.mxu0 0.0
        %4234 = vmatpush2.msra.mxu0 0.0
        %4235 = vmatprep.subr.mxu0 0.0
        %4236 = vmatpush2.msra.mxu0 0.0
        %4237 = vmatprep.subr.mxu0 0.0
        %4238 = vmatpush2.msra.mxu0 0.0
        %4239 = vmatprep.subr.mxu0 0.0
        %4240 = vmatpush2.msra.mxu0 0.0
        %4241 = vmatprep.subr.mxu0 0.0
        %4242 = vmatpush2.msra.mxu0 0.0
        %4243 = vmatprep.subr.mxu0 0.0
        %4244 = vmatpush2.msra.mxu0 0.0
        %4245 = vmatprep.subr.mxu0 0.0
        %4246 = vmatpush2.msra.mxu0 0.0
        %4247 = vmatprep.mubr.f32.mxu0 0.0
        %4248 = vmatmul.mubr.f32.gmra.mxu0 %v4181
        %v4249 = vpop.f32.mrf.mxu0
        %v4250 = vadd.f32 0.0, %v4249
        %v4251 = vpop.f32.mrf.mxu0
        %4252 = vdwg.mxu0
        %v4254 = vsel %vm1090, %v4177, 0
        %4256 = vmatprep.subr.mxu0 0.0
        %4257 = vmatpush1.msra.mxu0 0.0
        %4258 = vmatprep.subr.mxu0 0.0
        %4259 = vmatpush1.msra.mxu0 0.0
        %4260 = vmatprep.subr.mxu0 0.0
        %4261 = vmatpush1.msra.mxu0 0.0
        %4262 = vmatprep.subr.mxu0 0.0
        %4263 = vmatpush1.msra.mxu0 0.0
        %4264 = vmatprep.subr.mxu0 0.0
        %4265 = vmatpush1.msra.mxu0 0.0
        %4266 = vmatprep.subr.mxu0 0.0
        %4267 = vmatpush1.msra.mxu0 0.0
        %4268 = vmatprep.subr.mxu0 0.0
        %4269 = vmatpush1.msra.mxu0 0.0
        %4270 = vmatprep.subr.mxu0 0.0
        %4271 = vmatpush1.msra.mxu0 0.0
        %4272 = vmatprep.subr.mxu0 0.0
        %4273 = vmatpush1.msra.mxu0 0.0
        %4274 = vmatprep.subr.mxu0 0.0
        %4275 = vmatpush1.msra.mxu0 0.0
        %4276 = vmatprep.subr.mxu0 0.0
        %4277 = vmatpush1.msra.mxu0 0.0
        %4278 = vmatprep.subr.mxu0 0.0
        %4279 = vmatpush1.msra.mxu0 0.0
        %4280 = vmatprep.subr.mxu0 0.0
        %4281 = vmatpush1.msra.mxu0 0.0
        %4282 = vmatprep.subr.mxu0 0.0
        %4283 = vmatpush1.msra.mxu0 0.0
        %4284 = vmatprep.subr.mxu0 0.0
        %4285 = vmatpush1.msra.mxu0 0.0
        %4286 = vmatprep.subr.mxu0 0.0
        %4287 = vmatpush1.msra.mxu0 %v3817
        %4288 = vmatprep.subr.mxu0 0.0
        %4289 = vmatpush2.msra.mxu0 0.0
        %4290 = vmatprep.subr.mxu0 0.0
        %4291 = vmatpush2.msra.mxu0 0.0
        %4292 = vmatprep.subr.mxu0 0.0
        %4293 = vmatpush2.msra.mxu0 0.0
        %4294 = vmatprep.subr.mxu0 0.0
        %4295 = vmatpush2.msra.mxu0 0.0
        %4296 = vmatprep.subr.mxu0 0.0
        %4297 = vmatpush2.msra.mxu0 0.0
        %4298 = vmatprep.subr.mxu0 0.0
        %4299 = vmatpush2.msra.mxu0 0.0
        %4300 = vmatprep.subr.mxu0 0.0
        %4301 = vmatpush2.msra.mxu0 0.0
        %4302 = vmatprep.subr.mxu0 0.0
        %4303 = vmatpush2.msra.mxu0 0.0
        %4304 = vmatprep.subr.mxu0 0.0
        %4305 = vmatpush2.msra.mxu0 0.0
        %4306 = vmatprep.subr.mxu0 0.0
        %4307 = vmatpush2.msra.mxu0 0.0
        %4308 = vmatprep.subr.mxu0 0.0
        %4309 = vmatpush2.msra.mxu0 0.0
        %4310 = vmatprep.subr.mxu0 0.0
        %4311 = vmatpush2.msra.mxu0 0.0
        %4312 = vmatprep.subr.mxu0 0.0
        %4313 = vmatpush2.msra.mxu0 0.0
        %4314 = vmatprep.subr.mxu0 0.0
        %4315 = vmatpush2.msra.mxu0 0.0
        %4316 = vmatprep.subr.mxu0 0.0
        %4317 = vmatpush2.msra.mxu0 0.0
        %4318 = vmatprep.subr.mxu0 0.0
        %4319 = vmatpush2.msra.mxu0 0.0
        %4320 = vmatprep.mubr.f32.mxu0 0.0
        %4321 = vmatmul.mubr.f32.gmra.mxu0 %v4254
        %v4322 = vpop.f32.mrf.mxu0
        %v4323 = vadd.f32 0.0, %v4322
        %v4324 = vpop.f32.mrf.mxu0
        %4325 = vdwg.mxu0
        %v4327 = vsel %vm1090, %v4178, 0
        %4329 = vmatprep.subr.mxu0 0.0
        %4330 = vmatpush1.msra.mxu0 0.0
        %4331 = vmatprep.subr.mxu0 0.0
        %4332 = vmatpush1.msra.mxu0 0.0
        %4333 = vmatprep.subr.mxu0 0.0
        %4334 = vmatpush1.msra.mxu0 0.0
        %4335 = vmatprep.subr.mxu0 0.0
        %4336 = vmatpush1.msra.mxu0 0.0
        %4337 = vmatprep.subr.mxu0 0.0
        %4338 = vmatpush1.msra.mxu0 0.0
        %4339 = vmatprep.subr.mxu0 0.0
        %4340 = vmatpush1.msra.mxu0 0.0
        %4341 = vmatprep.subr.mxu0 0.0
        %4342 = vmatpush1.msra.mxu0 0.0
        %4343 = vmatprep.subr.mxu0 0.0
        %4344 = vmatpush1.msra.mxu0 0.0
        %4345 = vmatprep.subr.mxu0 0.0
        %4346 = vmatpush1.msra.mxu0 0.0
        %4347 = vmatprep.subr.mxu0 0.0
        %4348 = vmatpush1.msra.mxu0 0.0
        %4349 = vmatprep.subr.mxu0 0.0
        %4350 = vmatpush1.msra.mxu0 0.0
        %4351 = vmatprep.subr.mxu0 0.0
        %4352 = vmatpush1.msra.mxu0 0.0
        %4353 = vmatprep.subr.mxu0 0.0
        %4354 = vmatpush1.msra.mxu0 0.0
        %4355 = vmatprep.subr.mxu0 0.0
        %4356 = vmatpush1.msra.mxu0 0.0
        %4357 = vmatprep.subr.mxu0 0.0
        %4358 = vmatpush1.msra.mxu0 0.0
        %4359 = vmatprep.subr.mxu0 0.0
        %4360 = vmatpush1.msra.mxu0 %v3822
        %4361 = vmatprep.subr.mxu0 0.0
        %4362 = vmatpush2.msra.mxu0 0.0
        %4363 = vmatprep.subr.mxu0 0.0
        %4364 = vmatpush2.msra.mxu0 0.0
        %4365 = vmatprep.subr.mxu0 0.0
        %4366 = vmatpush2.msra.mxu0 0.0
        %4367 = vmatprep.subr.mxu0 0.0
        %4368 = vmatpush2.msra.mxu0 0.0
        %4369 = vmatprep.subr.mxu0 0.0
        %4370 = vmatpush2.msra.mxu0 0.0
        %4371 = vmatprep.subr.mxu0 0.0
        %4372 = vmatpush2.msra.mxu0 0.0
        %4373 = vmatprep.subr.mxu0 0.0
        %4374 = vmatpush2.msra.mxu0 0.0
        %4375 = vmatprep.subr.mxu0 0.0
        %4376 = vmatpush2.msra.mxu0 0.0
        %4377 = vmatprep.subr.mxu0 0.0
        %4378 = vmatpush2.msra.mxu0 0.0
        %4379 = vmatprep.subr.mxu0 0.0
        %4380 = vmatpush2.msra.mxu0 0.0
        %4381 = vmatprep.subr.mxu0 0.0
        %4382 = vmatpush2.msra.mxu0 0.0
        %4383 = vmatprep.subr.mxu0 0.0
        %4384 = vmatpush2.msra.mxu0 0.0
        %4385 = vmatprep.subr.mxu0 0.0
        %4386 = vmatpush2.msra.mxu0 0.0
        %4387 = vmatprep.subr.mxu0 0.0
        %4388 = vmatpush2.msra.mxu0 0.0
        %4389 = vmatprep.subr.mxu0 0.0
        %4390 = vmatpush2.msra.mxu0 0.0
        %4391 = vmatprep.subr.mxu0 0.0
        %4392 = vmatpush2.msra.mxu0 0.0
        %4393 = vmatprep.mubr.f32.mxu0 0.0
        %4394 = vmatmul.mubr.f32.gmra.mxu0 %v4327
        %v4395 = vpop.f32.mrf.mxu0
        %v4396 = vadd.f32 0.0, %v4395
        %v4397 = vpop.f32.mrf.mxu0
        %4398 = vdwg.mxu0
        %v4400 = vsel %vm1090, %v4179, 0
        %4402 = vmatprep.subr.mxu0 0.0
        %4403 = vmatpush1.msra.mxu0 0.0
        %4404 = vmatprep.subr.mxu0 0.0
        %4405 = vmatpush1.msra.mxu0 0.0
        %4406 = vmatprep.subr.mxu0 0.0
        %4407 = vmatpush1.msra.mxu0 0.0
        %4408 = vmatprep.subr.mxu0 0.0
        %4409 = vmatpush1.msra.mxu0 0.0
        %4410 = vmatprep.subr.mxu0 0.0
        %4411 = vmatpush1.msra.mxu0 0.0
        %4412 = vmatprep.subr.mxu0 0.0
        %4413 = vmatpush1.msra.mxu0 0.0
        %4414 = vmatprep.subr.mxu0 0.0
        %4415 = vmatpush1.msra.mxu0 0.0
        %4416 = vmatprep.subr.mxu0 0.0
        %4417 = vmatpush1.msra.mxu0 0.0
        %4418 = vmatprep.subr.mxu0 0.0
        %4419 = vmatpush1.msra.mxu0 0.0
        %4420 = vmatprep.subr.mxu0 0.0
        %4421 = vmatpush1.msra.mxu0 0.0
        %4422 = vmatprep.subr.mxu0 0.0
        %4423 = vmatpush1.msra.mxu0 0.0
        %4424 = vmatprep.subr.mxu0 0.0
        %4425 = vmatpush1.msra.mxu0 0.0
        %4426 = vmatprep.subr.mxu0 0.0
        %4427 = vmatpush1.msra.mxu0 0.0
        %4428 = vmatprep.subr.mxu0 0.0
        %4429 = vmatpush1.msra.mxu0 0.0
        %4430 = vmatprep.subr.mxu0 0.0
        %4431 = vmatpush1.msra.mxu0 0.0
        %4432 = vmatprep.subr.mxu0 0.0
        %4433 = vmatpush1.msra.mxu0 %v3827
        %4434 = vmatprep.subr.mxu0 0.0
        %4435 = vmatpush2.msra.mxu0 0.0
        %4436 = vmatprep.subr.mxu0 0.0
        %4437 = vmatpush2.msra.mxu0 0.0
        %4438 = vmatprep.subr.mxu0 0.0
        %4439 = vmatpush2.msra.mxu0 0.0
        %4440 = vmatprep.subr.mxu0 0.0
        %4441 = vmatpush2.msra.mxu0 0.0
        %4442 = vmatprep.subr.mxu0 0.0
        %4443 = vmatpush2.msra.mxu0 0.0
        %4444 = vmatprep.subr.mxu0 0.0
        %4445 = vmatpush2.msra.mxu0 0.0
        %4446 = vmatprep.subr.mxu0 0.0
        %4447 = vmatpush2.msra.mxu0 0.0
        %4448 = vmatprep.subr.mxu0 0.0
        %4449 = vmatpush2.msra.mxu0 0.0
        %4450 = vmatprep.subr.mxu0 0.0
        %4451 = vmatpush2.msra.mxu0 0.0
        %4452 = vmatprep.subr.mxu0 0.0
        %4453 = vmatpush2.msra.mxu0 0.0
        %4454 = vmatprep.subr.mxu0 0.0
        %4455 = vmatpush2.msra.mxu0 0.0
        %4456 = vmatprep.subr.mxu0 0.0
        %4457 = vmatpush2.msra.mxu0 0.0
        %4458 = vmatprep.subr.mxu0 0.0
        %4459 = vmatpush2.msra.mxu0 0.0
        %4460 = vmatprep.subr.mxu0 0.0
        %4461 = vmatpush2.msra.mxu0 0.0
        %4462 = vmatprep.subr.mxu0 0.0
        %4463 = vmatpush2.msra.mxu0 0.0
        %4464 = vmatprep.subr.mxu0 0.0
        %4465 = vmatpush2.msra.mxu0 0.0
        %4466 = vmatprep.mubr.f32.mxu0 0.0
        %4467 = vmatmul.mubr.f32.gmra.mxu0 %v4400
        %v4468 = vpop.f32.mrf.mxu0
        %v4469 = vadd.f32 0.0, %v4468
        %v4470 = vpop.f32.mrf.mxu0
        %4471 = vdwg.mxu0
        %s4472 = scalar_lea.vmem [#allocation11], 96
        %v4473 = vld [vmem:[%s4472] sm:$0xff]
        %v4474 = vld [vmem:[%s4472 + $0x8] sm:$0xff]
        %v4475 = vld [vmem:[%s4472 + $0x10] sm:$0xff]
        %v4476 = vld [vmem:[%s4472 + $0x18] sm:$0xff]
        %v4478 = vsel %vm432, %v4250, 0
        %v4481 = vsel %vm432, %v4323, 0
        %v4484 = vsel %vm432, %v4396, 0
        %v4487 = vsel %vm432, %v4469, 0
        %4489 = vmatprep.subr.mxu0 0.0
        %4490 = vmatpush1.msra.mxu0 0.0
        %4491 = vmatprep.subr.mxu0 0.0
        %4492 = vmatpush1.msra.mxu0 0.0
        %4493 = vmatprep.subr.mxu0 0.0
        %4494 = vmatpush1.msra.mxu0 0.0
        %4495 = vmatprep.subr.mxu0 0.0
        %4496 = vmatpush1.msra.mxu0 0.0
        %4497 = vmatprep.subr.mxu0 0.0
        %4498 = vmatpush1.msra.mxu0 0.0
        %4499 = vmatprep.subr.mxu0 0.0
        %4500 = vmatpush1.msra.mxu0 0.0
        %4501 = vmatprep.subr.mxu0 0.0
        %4502 = vmatpush1.msra.mxu0 0.0
        %4503 = vmatprep.subr.mxu0 0.0
        %4504 = vmatpush1.msra.mxu0 0.0
        %4505 = vmatprep.subr.mxu0 0.0
        %4506 = vmatpush1.msra.mxu0 0.0
        %4507 = vmatprep.subr.mxu0 0.0
        %4508 = vmatpush1.msra.mxu0 0.0
        %4509 = vmatprep.subr.mxu0 0.0
        %4510 = vmatpush1.msra.mxu0 0.0
        %4511 = vmatprep.subr.mxu0 0.0
        %4512 = vmatpush1.msra.mxu0 0.0
        %4513 = vmatprep.subr.mxu0 0.0
        %4514 = vmatpush1.msra.mxu0 %v4476
        %4515 = vmatprep.subr.mxu0 0.0
        %4516 = vmatpush1.msra.mxu0 %v4475
        %4517 = vmatprep.subr.mxu0 0.0
        %4518 = vmatpush1.msra.mxu0 %v4474
        %4519 = vmatprep.subr.mxu0 0.0
        %4520 = vmatpush1.msra.mxu0 %v4473
        %4521 = vmatprep.subr.mxu0 0.0
        %4522 = vmatpush2.msra.mxu0 0.0
        %4523 = vmatprep.subr.mxu0 0.0
        %4524 = vmatpush2.msra.mxu0 0.0
        %4525 = vmatprep.subr.mxu0 0.0
        %4526 = vmatpush2.msra.mxu0 0.0
        %4527 = vmatprep.subr.mxu0 0.0
        %4528 = vmatpush2.msra.mxu0 0.0
        %4529 = vmatprep.subr.mxu0 0.0
        %4530 = vmatpush2.msra.mxu0 0.0
        %4531 = vmatprep.subr.mxu0 0.0
        %4532 = vmatpush2.msra.mxu0 0.0
        %4533 = vmatprep.subr.mxu0 0.0
        %4534 = vmatpush2.msra.mxu0 0.0
        %4535 = vmatprep.subr.mxu0 0.0
        %4536 = vmatpush2.msra.mxu0 0.0
        %4537 = vmatprep.subr.mxu0 0.0
        %4538 = vmatpush2.msra.mxu0 0.0
        %4539 = vmatprep.subr.mxu0 0.0
        %4540 = vmatpush2.msra.mxu0 0.0
        %4541 = vmatprep.subr.mxu0 0.0
        %4542 = vmatpush2.msra.mxu0 0.0
        %4543 = vmatprep.subr.mxu0 0.0
        %4544 = vmatpush2.msra.mxu0 0.0
        %4545 = vmatprep.subr.mxu0 0.0
        %4546 = vmatpush2.msra.mxu0 0.0
        %4547 = vmatprep.subr.mxu0 0.0
        %4548 = vmatpush2.msra.mxu0 0.0
        %4549 = vmatprep.subr.mxu0 0.0
        %4550 = vmatpush2.msra.mxu0 0.0
        %4551 = vmatprep.subr.mxu0 0.0
        %4552 = vmatpush2.msra.mxu0 0.0
        %4553 = vmatprep.mubr.f32.mxu0 0.0
        %4554 = vmatmul.mubr.f32.gmra.mxu0 %v4478
        %v4555 = vpop.f32.mrf.mxu0
        %v4556 = vadd.f32 0.0, %v4555
        %v4557 = vpop.f32.mrf.mxu0
        %4558 = vmatprep.mubr.f32.mxu0 0.0
        %4559 = vmatmul.mubr.f32.gmra.mxu0 %v4481
        %v4560 = vpop.f32.mrf.mxu0
        %v4561 = vadd.f32 0.0, %v4560
        %v4562 = vpop.f32.mrf.mxu0
        %4563 = vmatprep.mubr.f32.mxu0 0.0
        %4564 = vmatmul.mubr.f32.gmra.mxu0 %v4484
        %v4565 = vpop.f32.mrf.mxu0
        %v4566 = vadd.f32 0.0, %v4565
        %v4567 = vpop.f32.mrf.mxu0
        %4568 = vmatprep.mubr.f32.mxu0 0.0
        %4569 = vmatmul.mubr.f32.gmra.mxu0 %v4487
        %v4570 = vpop.f32.mrf.mxu0
        %v4571 = vadd.f32 0.0, %v4570
        %v4572 = vpop.f32.mrf.mxu0
        %4573 = vdwg.mxu0
        %v4574 = vadd.f32 %v3556, %v4556
        %v4575 = vadd.f32 %v3557, %v4561
        %v4576 = vadd.f32 %v3558, %v4566
        %v4577 = vadd.f32 %v3559, %v4571
        %v4578 = vld [vmem:[%s8] sm:$0x1]
        %v4580 = vlaneseq
        %v4581 = vshrl.u32 %v4580, 7
        %v4582 = vsub.s32 0, %v4581
        %v4583 = vrot.slane %v4578, %v4582
        %v4585 = vadd.f32 %v4574, %v4583
        %v4586 = vadd.f32 %v4575, %v4583
        %v4587 = vadd.f32 %v4576, %v4583
        %v4588 = vadd.f32 %v4577, %v4583
        %4589 = vst.msk [vmem:[%s423] sm:$0xff] %vm432, %v4585
        %4590 = vst.msk [vmem:[%s423 + $0x8] sm:$0xff] %vm432, %v4586
        %4591 = vst.msk [vmem:[%s423 + $0x10] sm:$0xff] %vm432, %v4587
        %4592 = vst.msk [vmem:[%s423 + $0x18] sm:$0xff] %vm432, %v4588
        %s4593 = sand.u32 %s231, 1
        %s4594 = scalar_lea.sflag [#allocation4], %s4593
        %s4595 = sand.u32 %s231, 1
        %s4596 = smul.addr %s4595, 32
        %s4597 = scalar_lea.vmem [#allocation13], %s4596
        // Predicated region
        $region81: #{tpu_custom_call.1} parent=55 // pred_check
          %p4598 = pneg %p241
        $region82: #{tpu_custom_call.1} parent=55 // pred_check_branch
          %4600 = sbr.rel (%p4598) target = $region84
        $region83: #{tpu_custom_call.1} parent=55 // pred_region
          %s4601 = smul.u32 4, %s29
          %s4603 = ssub.s32 512, 512
          %4604 = vsyncadd %s4594, %s4603
          %s4605 = smul.addr %s4601, 128
          %s4606 = scalar_lea.hbm %s9, %s4605
          %s4607 = sshll.u32 %s4597, 4
          %s4608 = int_to_ptr.vmem [resolvable:$true] %s4607
          %4613 = dma.vmem_to_hbm [thread:$0]  %s4608, 512, %s4606, %s4594, 128, 128, 8
        $region84: #{tpu_custom_call.1} parent=55 // pred_fallthru
          _
      $region56: #{tpu_custom_call.1} parent=5 // pred_fallthru
        _
      %p4614 = scmp.le.s32.totalorder 2, %s24
      // Predicated region
      $region85: #{tpu_custom_call.1} parent=5 // pred_check
        %p4615 = pneg %p4614
      $region86: #{tpu_custom_call.1} parent=5 // pred_check_branch
        %4617 = sbr.rel (%p4615) target = $region88
      $region87: #{tpu_custom_call.1} parent=5 // pred_region
        %s4618 = ssub.s32 %s24, 2
        // Predicated region
        $region89: #{tpu_custom_call.1} parent=87 // pred_check
          %p4619 = pneg %p247
        $region90: #{tpu_custom_call.1} parent=87 // pred_check_branch
          %4621 = sbr.rel (%p4619) target = $region92
        $region91: #{tpu_custom_call.1} parent=87 // pred_region
          %s4622 = sand.u32 %s232, 1
          %s4623 = scalar_lea.sflag [#allocation4], %s4622
          %s4624 = sand.u32 %s232, 1
          %s4625 = smul.addr %s4624, 32
          %s4626 = scalar_lea.vmem [#allocation13], %s4625
          %4627 = dma.done %s4623, 512
        $region92: #{tpu_custom_call.1} parent=87 // pred_fallthru
          _
      $region88: #{tpu_custom_call.1} parent=5 // pred_fallthru
        _
    $region6: #{tpu_custom_call.1} parent=1 // loop_footer
      %s28 = sadd.s32 1, %s24
    $region7: #{tpu_custom_call.1} parent=1 // loop_footer_branch
      %23 = sbr.rel target = $region3
    $region8: #{tpu_custom_call.1} parent=1 // loop_exit
      _
    %4628 = vsyncpa [#allocation3], 1
    %s4629 = scalar_lea.sflag [#allocation3], 1
    %4630 = vsyncpa %s4629, 1
    %4631 = vsyncpa [#allocation6], 1
    %4632 = vsyncpa [#allocation9], 1
    %4633 = vsyncpa [#allocation12], 1
    %4634 = vsyncpa [#allocation4], 1
    %s4635 = scalar_lea.sflag [#allocation4], 1
    %4636 = vsyncpa %s4635, 1

</llo_original>
